<compile_context>
chip_gen: v5e
topology: v5e:2x2
jax: 0.10.0
libtpu: 0.0.40
codegen_flags: <defaults>
</compile_context>

<pallas_src>
import functools

import numpy as np
import jax
import jax.numpy as jnp
from jax import lax
from jax.experimental import pallas as pl
from jax.experimental.pallas import tpu as pltpu

_P = 3   # padding of the 7x7 spatial conv
_K = 7   # spatial conv kernel size


def _conv_masks(H, W):
    """(49, H*W) float32 zero-padding border masks, one per 7x7 tap."""
    rows = np.arange(H)[:, None]
    cols = np.arange(W)[None, :]
    masks = np.empty((_K * _K, H * W), np.float32)
    for di in range(_K):
        for dj in range(_K):
            oi, oj = di - _P, dj - _P
            valid = ((rows + oi >= 0) & (rows + oi < H) &
                     (cols + oj >= 0) & (cols + oj < W))
            masks[di * _K + dj] = valid.reshape(-1).astype(np.float32)
    return masks


def _cbam_kernel(H, W, x_ref, w1t_ref, w2t_ref, mask_ref, wsp_ref, o_ref):
    """One grid step processes a block of Bb images.

    x_ref   : (Bb, C, H*W)    VMEM  lane-dense input (spatial flattened)
    w1t_ref : (C, Cr)         VMEM  fc1 weight, pre-transposed
    w2t_ref : (Cr, C)         VMEM  fc2 weight, pre-transposed
    mask_ref: (49, H*W)       VMEM  zero-padding border mask per 7x7 tap
    wsp_ref : (2, 49)         SMEM  7x7 spatial-conv taps (row 0 = avg, row 1 = max)
    o_ref   : (1, Bb, 2*H*W)  VMEM  lane-dense output slab
    """
    Bb, C, HW = x_ref.shape

    x = x_ref[...]                                            # native dtype (f32/bf16)

    # ---------------- channel attention (batched over Bb images) ------------
    avg_bc = jnp.sum(x.astype(jnp.float32), axis=2) * jnp.float32(1.0 / HW)
    max_bc = jnp.max(x, axis=2).astype(jnp.float32)           # (Bb, C)
    pooled = jnp.concatenate([avg_bc, max_bc], axis=0)        # (2*Bb, C)

    h = jnp.maximum(
        jnp.dot(pooled, w1t_ref[...], preferred_element_type=jnp.float32), 0.0)
    mlp = jnp.dot(h, w2t_ref[...], preferred_element_type=jnp.float32)  # (2Bb, C)
    ch_att = jax.nn.sigmoid(mlp[:Bb] + mlp[Bb:])              # (Bb, C) f32

    # Big elementwise scale stays in the input dtype (bf16-friendly on v6e/v7x).
    xc = x * ch_att.astype(x.dtype)[:, :, None]               # (Bb, C, HW)

    # ---------------- spatial attention (lane-dense roll + mask conv) --------
    avg_map = jnp.sum(xc.astype(jnp.float32), axis=1) * jnp.float32(1.0 / C)
    max_map = jnp.max(xc, axis=1).astype(jnp.float32)         # (Bb, HW)

    # 7x7 conv over the two pooled maps on flattened (Bb, HW) rows.  For tap
    # (di, dj) the contribution at pixel p is (wa*avg + wm*max)[p + s] with
    # s = (di-3)*W + (dj-3), valid only inside the image; roll by (-s) mod HW
    # brings that value to lane p and the precomputed border mask zeroes the
    # out-of-image taps.  Two accumulators give a bit of ILP.
    acc0 = jnp.zeros((Bb, HW), jnp.float32)
    acc1 = jnp.zeros((Bb, HW), jnp.float32)
    for di in range(_K):
        for dj in range(_K):
            k = di * _K + dj
            wa = wsp_ref[0, k]                                # scalar SMEM reads
            wm = wsp_ref[1, k]
            combo = avg_map * wa + max_map * wm               # (Bb, HW)
            shift = ((_P - di) * W + (_P - dj)) % HW
            if shift == 0:                                    # center tap, mask == 1
                contrib = combo
            else:
                rolled = pltpu.roll(combo, shift, 1)
                contrib = rolled * mask_ref[pl.ds(k, 1), :]   # (1,HW) -> (Bb,HW)
            if k % 2 == 0:
                acc0 = acc0 + contrib
            else:
                acc1 = acc1 + contrib
    sp_att = jax.nn.sigmoid(acc0 + acc1)                      # (Bb, HW)

    # final output: cat([avg_map, max_map], dim=1) * spatial_att, 512-lane rows
    out = jnp.concatenate([avg_map * sp_att, max_map * sp_att], axis=1)
    o_ref[...] = out[None].astype(o_ref.dtype)                # (1, Bb, 2*HW)


def _pick_block_b(B, C, HW, *, vmem_budget=24 << 20, min_grid=4):
    """Largest divisor of B whose double-buffered in/out blocks fit the VMEM
    budget, preferring a grid of >= min_grid steps (>= 2 steps per TensorCore
    on a 2-core megacore)."""
    def step_bytes(bb):
        return 2 * bb * C * HW * 4 + 2 * bb * 2 * HW * 4
    divs = [d for d in range(1, B + 1) if B % d == 0]
    fits = [d for d in divs if step_bytes(d) <= vmem_budget] or [1]
    pref = [d for d in fits if (B // d) >= min_grid]
    return max(pref) if pref else max(fits)


def cbam_pallas(x, w1, w2, wsp, *, block_b=None):
    """x: (B, C, H, W) f32/bf16; w1: (C//16, C); w2: (C, C//16); wsp: (1, 2, 7, 7)."""
    B, C, H, W = x.shape
    HW = H * W
    Cr = w1.shape[0]
    if block_b is None:
        block_b = _pick_block_b(B, C, HW)
    assert B % block_b == 0
    G = B // block_b

    # Lane-dense layouts: flatten spatial to HW so all vector work uses full vregs.
    x_flat = jnp.asarray(x).reshape(B, C, HW)
    w1t = jnp.asarray(w1, jnp.float32).T                      # (C, Cr)
    w2t = jnp.asarray(w2, jnp.float32).T                      # (Cr, C)
    wsp_flat = jnp.asarray(wsp, jnp.float32).reshape(2, _K * _K)
    masks = jnp.asarray(_conv_masks(H, W))                    # (49, HW) constants

    # Explicit VMEM budget (double-buffered in/out blocks + constants), clamped
    # so it is safe on every generation (v5e scoped default is only 16 MiB,
    # v7x physical VMEM is 64 MiB per TensorCore).
    step_bytes = 2 * block_b * C * HW * 4 + 2 * block_b * 2 * HW * 4
    const_bytes = 2 * (C * Cr + Cr * C + _K * _K * HW) * 4
    vmem_limit = int(min(64 << 20, max(16 << 20, 2 * (step_bytes + const_bytes))))

    kernel = functools.partial(_cbam_kernel, H, W)
    out = pl.pallas_call(
        kernel,
        out_shape=jax.ShapeDtypeStruct((G, block_b, 2 * HW), x.dtype),
        grid=(G,),
        in_specs=[
            pl.BlockSpec((block_b, C, HW), lambda b: (b, 0, 0)),
            pl.BlockSpec((C, Cr), lambda b: (0, 0)),
            pl.BlockSpec((Cr, C), lambda b: (0, 0)),
            pl.BlockSpec((_K * _K, HW), lambda b: (0, 0)),
            pl.BlockSpec(memory_space=pltpu.MemorySpace.SMEM),
        ],
        out_specs=pl.BlockSpec((1, block_b, 2 * HW), lambda b: (b, 0, 0)),
        compiler_params=pltpu.CompilerParams(
            dimension_semantics=("parallel",),
            vmem_limit_bytes=vmem_limit),
    )(x_flat, w1t, w2t, masks, wsp_flat)
    return out.reshape(B, 2, H, W)


def cbam_reference(x, w1, w2, wsp):
    """Pure-JAX reference of the PyTorch CBAM forward (NCHW)."""
    avg = jnp.mean(x, axis=(2, 3), keepdims=True)             # (B,C,1,1)
    mx = jnp.max(x, axis=(2, 3), keepdims=True)

    def fc(v):
        h = jnp.einsum("rc,bcij->brij", w1, v)
        h = jnp.maximum(h, 0.0)
        return jnp.einsum("cr,brij->bcij", w2, h)

    ch_att = jax.nn.sigmoid(fc(avg) + fc(mx))                 # (B,C,1,1)
    xc = x * ch_att
    am = jnp.mean(xc, axis=1, keepdims=True)                  # (B,1,H,W)
    mm = jnp.max(xc, axis=1, keepdims=True)                   # (B,1,H,W)
    cat = jnp.concatenate([am, mm], axis=1)                   # (B,2,H,W)
    conv = lax.conv_general_dilated(
        cat, wsp, window_strides=(1, 1), padding=((3, 3), (3, 3)),
        dimension_numbers=("NCHW", "OIHW", "NCHW"))           # (B,1,H,W)
    sp_att = jax.nn.sigmoid(conv)
    return cat * sp_att                                        # (B,2,H,W)


if __name__ == "__main__":
    B, C, H, W = 8, 32, 16, 16      # channel_count must be >= 16 (C // 16 >= 1)
    Cr = C // 16

    key = jax.random.PRNGKey(0)
    kx, k1, k2, k3 = jax.random.split(key, 4)
    x = jax.random.normal(kx, (B, C, H, W), jnp.float32)
    w1 = jax.random.normal(k1, (Cr, C), jnp.float32) * 0.1    # fc1: Conv2d(C, C//16, 1)
    w2 = jax.random.normal(k2, (C, Cr), jnp.float32) * 0.1    # fc2: Conv2d(C//16, C, 1)
    wsp = jax.random.normal(k3, (1, 2, 7, 7), jnp.float32) * 0.1  # Conv2d(2, 1, 7, pad=3)

    out = jax.block_until_ready(cbam_pallas(x, w1, w2, wsp))
    ref = jax.block_until_ready(cbam_reference(x, w1, w2, wsp))

    assert out.shape == (B, 2, H, W), out.shape
    max_err = float(jnp.max(jnp.abs(out - ref)))
    assert max_err < 1e-4, max_err

    print("KERNEL_OK")
</pallas_src>

<mosaic_0001>
module attributes {stable_mosaic.version = 11 : i64} {
  func.func @_cbam_kernel(%arg0: i32, %arg1: memref<2x32x256xf32, #tpu.memory_space<vmem>>, %arg2: memref<32x2xf32, #tpu.memory_space<vmem>>, %arg3: memref<2x32xf32, #tpu.memory_space<vmem>>, %arg4: memref<49x256xf32, #tpu.memory_space<vmem>>, %arg5: memref<2x49xf32, #tpu.memory_space<smem>>, %arg6: memref<1x2x512xf32, #tpu.memory_space<vmem>>) attributes {dimension_semantics = [#tpu.dimension_semantics<parallel>], iteration_bounds = array<i64: 4>, scalar_prefetch = 0 : i64, scratch_operands = 0 : i64, tpu.core_type = #tpu.core_type<tc>, window_params = [{transform_indices = @transform_0, window_bounds = array<i64: 2, 32, 256>}, {pipeline_mode = #tpu.pipeline_mode<synchronous>, transform_indices = @transform_1, window_bounds = array<i64: 32, 2>}, {pipeline_mode = #tpu.pipeline_mode<synchronous>, transform_indices = @transform_2, window_bounds = array<i64: 2, 32>}, {pipeline_mode = #tpu.pipeline_mode<synchronous>, transform_indices = @transform_3, window_bounds = array<i64: 49, 256>}, {transform_indices = @transform_4, window_bounds = array<i64: 2, 49>}, {transform_indices = @transform_5, window_bounds = array<i64: 1, 2, 512>}]} {
    %c0 = arith.constant 0 : index
    %c0_0 = arith.constant 0 : index
    %c0_1 = arith.constant 0 : index
    %0 = vector.load %arg1[%c0, %c0_0, %c0_1] : memref<2x32x256xf32, #tpu.memory_space<vmem>>, vector<2x32x256xf32>
    %cst = arith.constant dense<0.000000e+00> : vector<2x32xf32>
    %1 = vector.multi_reduction <add>, %0, %cst [2] : vector<2x32x256xf32> to vector<2x32xf32>
    %cst_2 = arith.constant 3.906250e-03 : f32
    %2 = vector.broadcast %cst_2 : f32 to vector<2x32xf32>
    %3 = arith.mulf %1, %2 : vector<2x32xf32>
    %cst_3 = arith.constant dense<0xFF800000> : vector<2x32xf32>
    %4 = vector.multi_reduction <maximumf>, %0, %cst_3 [2] : vector<2x32x256xf32> to vector<2x32xf32>
    %5 = tpu.concatenate %3, %4 in 0 : vector<2x32xf32>, vector<2x32xf32> -> vector<4x32xf32>
    %c0_4 = arith.constant 0 : index
    %c0_5 = arith.constant 0 : index
    %6 = vector.load %arg2[%c0_4, %c0_5] : memref<32x2xf32, #tpu.memory_space<vmem>>, vector<32x2xf32>
    %cst_6 = arith.constant dense<0.000000e+00> : vector<4x2xf32>
    %7 = tpu.matmul %5, %6, %cst_6 {dimension_numbers = #tpu.dot_dimension_numbers<[1], [0], [0], [1], [0, 0, 1, 1], [], []>} : vector<4x32xf32>, vector<32x2xf32>, vector<4x2xf32> -> vector<4x2xf32>
    %cst_7 = arith.constant 0.000000e+00 : f32
    %8 = vector.broadcast %cst_7 : f32 to vector<4x2xf32>
    %9 = arith.maximumf %7, %8 : vector<4x2xf32>
    %c0_8 = arith.constant 0 : index
    %c0_9 = arith.constant 0 : index
    %10 = vector.load %arg3[%c0_8, %c0_9] : memref<2x32xf32, #tpu.memory_space<vmem>>, vector<2x32xf32>
    %cst_10 = arith.constant dense<0.000000e+00> : vector<4x32xf32>
    %11 = tpu.matmul %9, %10, %cst_10 {dimension_numbers = #tpu.dot_dimension_numbers<[1], [0], [0], [1], [0, 0, 1, 1], [], []>} : vector<4x2xf32>, vector<2x32xf32>, vector<4x32xf32> -> vector<4x32xf32>
    %12 = vector.extract_strided_slice %11 {offsets = [0, 0], sizes = [2, 32], strides = [1, 1]} : vector<4x32xf32> to vector<2x32xf32>
    %13 = vector.extract_strided_slice %11 {offsets = [2, 0], sizes = [2, 32], strides = [1, 1]} : vector<4x32xf32> to vector<2x32xf32>
    %14 = arith.addf %12, %13 : vector<2x32xf32>
    %15 = arith.negf %14 : vector<2x32xf32>
    %16 = math.exp %15 : vector<2x32xf32>
    %cst_11 = arith.constant 1.000000e+00 : f32
    %17 = vector.broadcast %cst_11 : f32 to vector<2x32xf32>
    %18 = arith.addf %17, %16 : vector<2x32xf32>
    %19 = arith.divf %17, %18 : vector<2x32xf32>
    %20 = vector.shape_cast %19 : vector<2x32xf32> to vector<2x32x1xf32>
    %21 = vector.broadcast %20 : vector<2x32x1xf32> to vector<2x32x256xf32>
    %22 = arith.mulf %0, %21 : vector<2x32x256xf32>
    %cst_12 = arith.constant dense<0.000000e+00> : vector<2x256xf32>
    %23 = vector.multi_reduction <add>, %22, %cst_12 [1] : vector<2x32x256xf32> to vector<2x256xf32>
    %cst_13 = arith.constant 3.125000e-02 : f32
    %24 = vector.broadcast %cst_13 : f32 to vector<2x256xf32>
    %25 = arith.mulf %23, %24 : vector<2x256xf32>
    %cst_14 = arith.constant dense<0xFF800000> : vector<2x256xf32>
    %26 = vector.multi_reduction <maximumf>, %22, %cst_14 [1] : vector<2x32x256xf32> to vector<2x256xf32>
    %cst_15 = arith.constant 0.000000e+00 : f32
    %27 = vector.broadcast %cst_15 : f32 to vector<2x256xf32>
    %cst_16 = arith.constant 0.000000e+00 : f32
    %28 = vector.broadcast %cst_16 : f32 to vector<2x256xf32>
    %c0_17 = arith.constant 0 : index
    %c0_18 = arith.constant 0 : index
    %29 = memref.load %arg5[%c0_17, %c0_18] : memref<2x49xf32, #tpu.memory_space<smem>>
    %c1 = arith.constant 1 : index
    %c0_19 = arith.constant 0 : index
    %30 = memref.load %arg5[%c1, %c0_19] : memref<2x49xf32, #tpu.memory_space<smem>>
    %31 = vector.broadcast %29 : f32 to vector<2x256xf32>
    %32 = arith.mulf %25, %31 : vector<2x256xf32>
    %33 = vector.broadcast %30 : f32 to vector<2x256xf32>
    %34 = arith.mulf %26, %33 : vector<2x256xf32>
    %35 = arith.addf %32, %34 : vector<2x256xf32>
    %c51_i32 = arith.constant 51 : i32
    %36 = tpu.dynamic_rotate %35 by %c51_i32 dim 1 : vector<2x256xf32>, i32 -> vector<2x256xf32>
    %c0_20 = arith.constant 0 : index
    %c0_21 = arith.constant 0 : index
    %37 = vector.load %arg4[%c0_20, %c0_21] : memref<49x256xf32, #tpu.memory_space<vmem>>, vector<1x256xf32>
    %38 = vector.broadcast %37 : vector<1x256xf32> to vector<2x256xf32>
    %39 = arith.mulf %36, %38 : vector<2x256xf32>
    %40 = arith.addf %27, %39 : vector<2x256xf32>
    %c0_22 = arith.constant 0 : index
    %c1_23 = arith.constant 1 : index
    %41 = memref.load %arg5[%c0_22, %c1_23] : memref<2x49xf32, #tpu.memory_space<smem>>
    %c1_24 = arith.constant 1 : index
    %c1_25 = arith.constant 1 : index
    %42 = memref.load %arg5[%c1_24, %c1_25] : memref<2x49xf32, #tpu.memory_space<smem>>
    %43 = vector.broadcast %41 : f32 to vector<2x256xf32>
    %44 = arith.mulf %25, %43 : vector<2x256xf32>
    %45 = vector.broadcast %42 : f32 to vector<2x256xf32>
    %46 = arith.mulf %26, %45 : vector<2x256xf32>
    %47 = arith.addf %44, %46 : vector<2x256xf32>
    %c50_i32 = arith.constant 50 : i32
    %48 = tpu.dynamic_rotate %47 by %c50_i32 dim 1 : vector<2x256xf32>, i32 -> vector<2x256xf32>
    %c1_26 = arith.constant 1 : index
    %c0_27 = arith.constant 0 : index
    %49 = vector.load %arg4[%c1_26, %c0_27] : memref<49x256xf32, #tpu.memory_space<vmem>>, vector<1x256xf32>
    %50 = vector.broadcast %49 : vector<1x256xf32> to vector<2x256xf32>
    %51 = arith.mulf %48, %50 : vector<2x256xf32>
    %52 = arith.addf %28, %51 : vector<2x256xf32>
    %c0_28 = arith.constant 0 : index
    %c2 = arith.constant 2 : index
    %53 = memref.load %arg5[%c0_28, %c2] : memref<2x49xf32, #tpu.memory_space<smem>>
    %c1_29 = arith.constant 1 : index
    %c2_30 = arith.constant 2 : index
    %54 = memref.load %arg5[%c1_29, %c2_30] : memref<2x49xf32, #tpu.memory_space<smem>>
    %55 = vector.broadcast %53 : f32 to vector<2x256xf32>
    %56 = arith.mulf %25, %55 : vector<2x256xf32>
    %57 = vector.broadcast %54 : f32 to vector<2x256xf32>
    %58 = arith.mulf %26, %57 : vector<2x256xf32>
    %59 = arith.addf %56, %58 : vector<2x256xf32>
    %c49_i32 = arith.constant 49 : i32
    %60 = tpu.dynamic_rotate %59 by %c49_i32 dim 1 : vector<2x256xf32>, i32 -> vector<2x256xf32>
    %c2_31 = arith.constant 2 : index
    %c0_32 = arith.constant 0 : index
    %61 = vector.load %arg4[%c2_31, %c0_32] : memref<49x256xf32, #tpu.memory_space<vmem>>, vector<1x256xf32>
    %62 = vector.broadcast %61 : vector<1x256xf32> to vector<2x256xf32>
    %63 = arith.mulf %60, %62 : vector<2x256xf32>
    %64 = arith.addf %40, %63 : vector<2x256xf32>
    %c0_33 = arith.constant 0 : index
    %c3 = arith.constant 3 : index
    %65 = memref.load %arg5[%c0_33, %c3] : memref<2x49xf32, #tpu.memory_space<smem>>
    %c1_34 = arith.constant 1 : index
    %c3_35 = arith.constant 3 : index
    %66 = memref.load %arg5[%c1_34, %c3_35] : memref<2x49xf32, #tpu.memory_space<smem>>
    %67 = vector.broadcast %65 : f32 to vector<2x256xf32>
    %68 = arith.mulf %25, %67 : vector<2x256xf32>
    %69 = vector.broadcast %66 : f32 to vector<2x256xf32>
    %70 = arith.mulf %26, %69 : vector<2x256xf32>
    %71 = arith.addf %68, %70 : vector<2x256xf32>
    %c48_i32 = arith.constant 48 : i32
    %72 = tpu.dynamic_rotate %71 by %c48_i32 dim 1 : vector<2x256xf32>, i32 -> vector<2x256xf32>
    %c3_36 = arith.constant 3 : index
    %c0_37 = arith.constant 0 : index
    %73 = vector.load %arg4[%c3_36, %c0_37] : memref<49x256xf32, #tpu.memory_space<vmem>>, vector<1x256xf32>
    %74 = vector.broadcast %73 : vector<1x256xf32> to vector<2x256xf32>
    %75 = arith.mulf %72, %74 : vector<2x256xf32>
    %76 = arith.addf %52, %75 : vector<2x256xf32>
    %c0_38 = arith.constant 0 : index
    %c4 = arith.constant 4 : index
    %77 = memref.load %arg5[%c0_38, %c4] : memref<2x49xf32, #tpu.memory_space<smem>>
    %c1_39 = arith.constant 1 : index
    %c4_40 = arith.constant 4 : index
    %78 = memref.load %arg5[%c1_39, %c4_40] : memref<2x49xf32, #tpu.memory_space<smem>>
    %79 = vector.broadcast %77 : f32 to vector<2x256xf32>
    %80 = arith.mulf %25, %79 : vector<2x256xf32>
    %81 = vector.broadcast %78 : f32 to vector<2x256xf32>
    %82 = arith.mulf %26, %81 : vector<2x256xf32>
    %83 = arith.addf %80, %82 : vector<2x256xf32>
    %c47_i32 = arith.constant 47 : i32
    %84 = tpu.dynamic_rotate %83 by %c47_i32 dim 1 : vector<2x256xf32>, i32 -> vector<2x256xf32>
    %c4_41 = arith.constant 4 : index
    %c0_42 = arith.constant 0 : index
    %85 = vector.load %arg4[%c4_41, %c0_42] : memref<49x256xf32, #tpu.memory_space<vmem>>, vector<1x256xf32>
    %86 = vector.broadcast %85 : vector<1x256xf32> to vector<2x256xf32>
    %87 = arith.mulf %84, %86 : vector<2x256xf32>
    %88 = arith.addf %64, %87 : vector<2x256xf32>
    %c0_43 = arith.constant 0 : index
    %c5 = arith.constant 5 : index
    %89 = memref.load %arg5[%c0_43, %c5] : memref<2x49xf32, #tpu.memory_space<smem>>
    %c1_44 = arith.constant 1 : index
    %c5_45 = arith.constant 5 : index
    %90 = memref.load %arg5[%c1_44, %c5_45] : memref<2x49xf32, #tpu.memory_space<smem>>
    %91 = vector.broadcast %89 : f32 to vector<2x256xf32>
    %92 = arith.mulf %25, %91 : vector<2x256xf32>
    %93 = vector.broadcast %90 : f32 to vector<2x256xf32>
    %94 = arith.mulf %26, %93 : vector<2x256xf32>
    %95 = arith.addf %92, %94 : vector<2x256xf32>
    %c46_i32 = arith.constant 46 : i32
    %96 = tpu.dynamic_rotate %95 by %c46_i32 dim 1 : vector<2x256xf32>, i32 -> vector<2x256xf32>
    %c5_46 = arith.constant 5 : index
    %c0_47 = arith.constant 0 : index
    %97 = vector.load %arg4[%c5_46, %c0_47] : memref<49x256xf32, #tpu.memory_space<vmem>>, vector<1x256xf32>
    %98 = vector.broadcast %97 : vector<1x256xf32> to vector<2x256xf32>
    %99 = arith.mulf %96, %98 : vector<2x256xf32>
    %100 = arith.addf %76, %99 : vector<2x256xf32>
    %c0_48 = arith.constant 0 : index
    %c6 = arith.constant 6 : index
    %101 = memref.load %arg5[%c0_48, %c6] : memref<2x49xf32, #tpu.memory_space<smem>>
    %c1_49 = arith.constant 1 : index
    %c6_50 = arith.constant 6 : index
    %102 = memref.load %arg5[%c1_49, %c6_50] : memref<2x49xf32, #tpu.memory_space<smem>>
    %103 = vector.broadcast %101 : f32 to vector<2x256xf32>
    %104 = arith.mulf %25, %103 : vector<2x256xf32>
    %105 = vector.broadcast %102 : f32 to vector<2x256xf32>
    %106 = arith.mulf %26, %105 : vector<2x256xf32>
    %107 = arith.addf %104, %106 : vector<2x256xf32>
    %c45_i32 = arith.constant 45 : i32
    %108 = tpu.dynamic_rotate %107 by %c45_i32 dim 1 : vector<2x256xf32>, i32 -> vector<2x256xf32>
    %c6_51 = arith.constant 6 : index
    %c0_52 = arith.constant 0 : index
    %109 = vector.load %arg4[%c6_51, %c0_52] : memref<49x256xf32, #tpu.memory_space<vmem>>, vector<1x256xf32>
    %110 = vector.broadcast %109 : vector<1x256xf32> to vector<2x256xf32>
    %111 = arith.mulf %108, %110 : vector<2x256xf32>
    %112 = arith.addf %88, %111 : vector<2x256xf32>
    %c0_53 = arith.constant 0 : index
    %c7 = arith.constant 7 : index
    %113 = memref.load %arg5[%c0_53, %c7] : memref<2x49xf32, #tpu.memory_space<smem>>
    %c1_54 = arith.constant 1 : index
    %c7_55 = arith.constant 7 : index
    %114 = memref.load %arg5[%c1_54, %c7_55] : memref<2x49xf32, #tpu.memory_space<smem>>
    %115 = vector.broadcast %113 : f32 to vector<2x256xf32>
    %116 = arith.mulf %25, %115 : vector<2x256xf32>
    %117 = vector.broadcast %114 : f32 to vector<2x256xf32>
    %118 = arith.mulf %26, %117 : vector<2x256xf32>
    %119 = arith.addf %116, %118 : vector<2x256xf32>
    %c35_i32 = arith.constant 35 : i32
    %120 = tpu.dynamic_rotate %119 by %c35_i32 dim 1 : vector<2x256xf32>, i32 -> vector<2x256xf32>
    %c7_56 = arith.constant 7 : index
    %c0_57 = arith.constant 0 : index
    %121 = vector.load %arg4[%c7_56, %c0_57] : memref<49x256xf32, #tpu.memory_space<vmem>>, vector<1x256xf32>
    %122 = vector.broadcast %121 : vector<1x256xf32> to vector<2x256xf32>
    %123 = arith.mulf %120, %122 : vector<2x256xf32>
    %124 = arith.addf %100, %123 : vector<2x256xf32>
    %c0_58 = arith.constant 0 : index
    %c8 = arith.constant 8 : index
    %125 = memref.load %arg5[%c0_58, %c8] : memref<2x49xf32, #tpu.memory_space<smem>>
    %c1_59 = arith.constant 1 : index
    %c8_60 = arith.constant 8 : index
    %126 = memref.load %arg5[%c1_59, %c8_60] : memref<2x49xf32, #tpu.memory_space<smem>>
    %127 = vector.broadcast %125 : f32 to vector<2x256xf32>
    %128 = arith.mulf %25, %127 : vector<2x256xf32>
    %129 = vector.broadcast %126 : f32 to vector<2x256xf32>
    %130 = arith.mulf %26, %129 : vector<2x256xf32>
    %131 = arith.addf %128, %130 : vector<2x256xf32>
    %c34_i32 = arith.constant 34 : i32
    %132 = tpu.dynamic_rotate %131 by %c34_i32 dim 1 : vector<2x256xf32>, i32 -> vector<2x256xf32>
    %c8_61 = arith.constant 8 : index
    %c0_62 = arith.constant 0 : index
    %133 = vector.load %arg4[%c8_61, %c0_62] : memref<49x256xf32, #tpu.memory_space<vmem>>, vector<1x256xf32>
    %134 = vector.broadcast %133 : vector<1x256xf32> to vector<2x256xf32>
    %135 = arith.mulf %132, %134 : vector<2x256xf32>
    %136 = arith.addf %112, %135 : vector<2x256xf32>
    %c0_63 = arith.constant 0 : index
    %c9 = arith.constant 9 : index
    %137 = memref.load %arg5[%c0_63, %c9] : memref<2x49xf32, #tpu.memory_space<smem>>
    %c1_64 = arith.constant 1 : index
    %c9_65 = arith.constant 9 : index
    %138 = memref.load %arg5[%c1_64, %c9_65] : memref<2x49xf32, #tpu.memory_space<smem>>
    %139 = vector.broadcast %137 : f32 to vector<2x256xf32>
    %140 = arith.mulf %25, %139 : vector<2x256xf32>
    %141 = vector.broadcast %138 : f32 to vector<2x256xf32>
    %142 = arith.mulf %26, %141 : vector<2x256xf32>
    %143 = arith.addf %140, %142 : vector<2x256xf32>
    %c33_i32 = arith.constant 33 : i32
    %144 = tpu.dynamic_rotate %143 by %c33_i32 dim 1 : vector<2x256xf32>, i32 -> vector<2x256xf32>
    %c9_66 = arith.constant 9 : index
    %c0_67 = arith.constant 0 : index
    %145 = vector.load %arg4[%c9_66, %c0_67] : memref<49x256xf32, #tpu.memory_space<vmem>>, vector<1x256xf32>
    %146 = vector.broadcast %145 : vector<1x256xf32> to vector<2x256xf32>
    %147 = arith.mulf %144, %146 : vector<2x256xf32>
    %148 = arith.addf %124, %147 : vector<2x256xf32>
    %c0_68 = arith.constant 0 : index
    %c10 = arith.constant 10 : index
    %149 = memref.load %arg5[%c0_68, %c10] : memref<2x49xf32, #tpu.memory_space<smem>>
    %c1_69 = arith.constant 1 : index
    %c10_70 = arith.constant 10 : index
    %150 = memref.load %arg5[%c1_69, %c10_70] : memref<2x49xf32, #tpu.memory_space<smem>>
    %151 = vector.broadcast %149 : f32 to vector<2x256xf32>
    %152 = arith.mulf %25, %151 : vector<2x256xf32>
    %153 = vector.broadcast %150 : f32 to vector<2x256xf32>
    %154 = arith.mulf %26, %153 : vector<2x256xf32>
    %155 = arith.addf %152, %154 : vector<2x256xf32>
    %c32_i32 = arith.constant 32 : i32
    %156 = tpu.dynamic_rotate %155 by %c32_i32 dim 1 : vector<2x256xf32>, i32 -> vector<2x256xf32>
    %c10_71 = arith.constant 10 : index
    %c0_72 = arith.constant 0 : index
    %157 = vector.load %arg4[%c10_71, %c0_72] : memref<49x256xf32, #tpu.memory_space<vmem>>, vector<1x256xf32>
    %158 = vector.broadcast %157 : vector<1x256xf32> to vector<2x256xf32>
    %159 = arith.mulf %156, %158 : vector<2x256xf32>
    %160 = arith.addf %136, %159 : vector<2x256xf32>
    %c0_73 = arith.constant 0 : index
    %c11 = arith.constant 11 : index
    %161 = memref.load %arg5[%c0_73, %c11] : memref<2x49xf32, #tpu.memory_space<smem>>
    %c1_74 = arith.constant 1 : index
    %c11_75 = arith.constant 11 : index
    %162 = memref.load %arg5[%c1_74, %c11_75] : memref<2x49xf32, #tpu.memory_space<smem>>
    %163 = vector.broadcast %161 : f32 to vector<2x256xf32>
    %164 = arith.mulf %25, %163 : vector<2x256xf32>
    %165 = vector.broadcast %162 : f32 to vector<2x256xf32>
    %166 = arith.mulf %26, %165 : vector<2x256xf32>
    %167 = arith.addf %164, %166 : vector<2x256xf32>
    %c31_i32 = arith.constant 31 : i32
    %168 = tpu.dynamic_rotate %167 by %c31_i32 dim 1 : vector<2x256xf32>, i32 -> vector<2x256xf32>
    %c11_76 = arith.constant 11 : index
    %c0_77 = arith.constant 0 : index
    %169 = vector.load %arg4[%c11_76, %c0_77] : memref<49x256xf32, #tpu.memory_space<vmem>>, vector<1x256xf32>
    %170 = vector.broadcast %169 : vector<1x256xf32> to vector<2x256xf32>
    %171 = arith.mulf %168, %170 : vector<2x256xf32>
    %172 = arith.addf %148, %171 : vector<2x256xf32>
    %c0_78 = arith.constant 0 : index
    %c12 = arith.constant 12 : index
    %173 = memref.load %arg5[%c0_78, %c12] : memref<2x49xf32, #tpu.memory_space<smem>>
    %c1_79 = arith.constant 1 : index
    %c12_80 = arith.constant 12 : index
    %174 = memref.load %arg5[%c1_79, %c12_80] : memref<2x49xf32, #tpu.memory_space<smem>>
    %175 = vector.broadcast %173 : f32 to vector<2x256xf32>
    %176 = arith.mulf %25, %175 : vector<2x256xf32>
    %177 = vector.broadcast %174 : f32 to vector<2x256xf32>
    %178 = arith.mulf %26, %177 : vector<2x256xf32>
    %179 = arith.addf %176, %178 : vector<2x256xf32>
    %c30_i32 = arith.constant 30 : i32
    %180 = tpu.dynamic_rotate %179 by %c30_i32 dim 1 : vector<2x256xf32>, i32 -> vector<2x256xf32>
    %c12_81 = arith.constant 12 : index
    %c0_82 = arith.constant 0 : index
    %181 = vector.load %arg4[%c12_81, %c0_82] : memref<49x256xf32, #tpu.memory_space<vmem>>, vector<1x256xf32>
    %182 = vector.broadcast %181 : vector<1x256xf32> to vector<2x256xf32>
    %183 = arith.mulf %180, %182 : vector<2x256xf32>
    %184 = arith.addf %160, %183 : vector<2x256xf32>
    %c0_83 = arith.constant 0 : index
    %c13 = arith.constant 13 : index
    %185 = memref.load %arg5[%c0_83, %c13] : memref<2x49xf32, #tpu.memory_space<smem>>
    %c1_84 = arith.constant 1 : index
    %c13_85 = arith.constant 13 : index
    %186 = memref.load %arg5[%c1_84, %c13_85] : memref<2x49xf32, #tpu.memory_space<smem>>
    %187 = vector.broadcast %185 : f32 to vector<2x256xf32>
    %188 = arith.mulf %25, %187 : vector<2x256xf32>
    %189 = vector.broadcast %186 : f32 to vector<2x256xf32>
    %190 = arith.mulf %26, %189 : vector<2x256xf32>
    %191 = arith.addf %188, %190 : vector<2x256xf32>
    %c29_i32 = arith.constant 29 : i32
    %192 = tpu.dynamic_rotate %191 by %c29_i32 dim 1 : vector<2x256xf32>, i32 -> vector<2x256xf32>
    %c13_86 = arith.constant 13 : index
    %c0_87 = arith.constant 0 : index
    %193 = vector.load %arg4[%c13_86, %c0_87] : memref<49x256xf32, #tpu.memory_space<vmem>>, vector<1x256xf32>
    %194 = vector.broadcast %193 : vector<1x256xf32> to vector<2x256xf32>
    %195 = arith.mulf %192, %194 : vector<2x256xf32>
    %196 = arith.addf %172, %195 : vector<2x256xf32>
    %c0_88 = arith.constant 0 : index
    %c14 = arith.constant 14 : index
    %197 = memref.load %arg5[%c0_88, %c14] : memref<2x49xf32, #tpu.memory_space<smem>>
    %c1_89 = arith.constant 1 : index
    %c14_90 = arith.constant 14 : index
    %198 = memref.load %arg5[%c1_89, %c14_90] : memref<2x49xf32, #tpu.memory_space<smem>>
    %199 = vector.broadcast %197 : f32 to vector<2x256xf32>
    %200 = arith.mulf %25, %199 : vector<2x256xf32>
    %201 = vector.broadcast %198 : f32 to vector<2x256xf32>
    %202 = arith.mulf %26, %201 : vector<2x256xf32>
    %203 = arith.addf %200, %202 : vector<2x256xf32>
    %c19_i32 = arith.constant 19 : i32
    %204 = tpu.dynamic_rotate %203 by %c19_i32 dim 1 : vector<2x256xf32>, i32 -> vector<2x256xf32>
    %c14_91 = arith.constant 14 : index
    %c0_92 = arith.constant 0 : index
    %205 = vector.load %arg4[%c14_91, %c0_92] : memref<49x256xf32, #tpu.memory_space<vmem>>, vector<1x256xf32>
    %206 = vector.broadcast %205 : vector<1x256xf32> to vector<2x256xf32>
    %207 = arith.mulf %204, %206 : vector<2x256xf32>
    %208 = arith.addf %184, %207 : vector<2x256xf32>
    %c0_93 = arith.constant 0 : index
    %c15 = arith.constant 15 : index
    %209 = memref.load %arg5[%c0_93, %c15] : memref<2x49xf32, #tpu.memory_space<smem>>
    %c1_94 = arith.constant 1 : index
    %c15_95 = arith.constant 15 : index
    %210 = memref.load %arg5[%c1_94, %c15_95] : memref<2x49xf32, #tpu.memory_space<smem>>
    %211 = vector.broadcast %209 : f32 to vector<2x256xf32>
    %212 = arith.mulf %25, %211 : vector<2x256xf32>
    %213 = vector.broadcast %210 : f32 to vector<2x256xf32>
    %214 = arith.mulf %26, %213 : vector<2x256xf32>
    %215 = arith.addf %212, %214 : vector<2x256xf32>
    %c18_i32 = arith.constant 18 : i32
    %216 = tpu.dynamic_rotate %215 by %c18_i32 dim 1 : vector<2x256xf32>, i32 -> vector<2x256xf32>
    %c15_96 = arith.constant 15 : index
    %c0_97 = arith.constant 0 : index
    %217 = vector.load %arg4[%c15_96, %c0_97] : memref<49x256xf32, #tpu.memory_space<vmem>>, vector<1x256xf32>
    %218 = vector.broadcast %217 : vector<1x256xf32> to vector<2x256xf32>
    %219 = arith.mulf %216, %218 : vector<2x256xf32>
    %220 = arith.addf %196, %219 : vector<2x256xf32>
    %c0_98 = arith.constant 0 : index
    %c16 = arith.constant 16 : index
    %221 = memref.load %arg5[%c0_98, %c16] : memref<2x49xf32, #tpu.memory_space<smem>>
    %c1_99 = arith.constant 1 : index
    %c16_100 = arith.constant 16 : index
    %222 = memref.load %arg5[%c1_99, %c16_100] : memref<2x49xf32, #tpu.memory_space<smem>>
    %223 = vector.broadcast %221 : f32 to vector<2x256xf32>
    %224 = arith.mulf %25, %223 : vector<2x256xf32>
    %225 = vector.broadcast %222 : f32 to vector<2x256xf32>
    %226 = arith.mulf %26, %225 : vector<2x256xf32>
    %227 = arith.addf %224, %226 : vector<2x256xf32>
    %c17_i32 = arith.constant 17 : i32
    %228 = tpu.dynamic_rotate %227 by %c17_i32 dim 1 : vector<2x256xf32>, i32 -> vector<2x256xf32>
    %c16_101 = arith.constant 16 : index
    %c0_102 = arith.constant 0 : index
    %229 = vector.load %arg4[%c16_101, %c0_102] : memref<49x256xf32, #tpu.memory_space<vmem>>, vector<1x256xf32>
    %230 = vector.broadcast %229 : vector<1x256xf32> to vector<2x256xf32>
    %231 = arith.mulf %228, %230 : vector<2x256xf32>
    %232 = arith.addf %208, %231 : vector<2x256xf32>
    %c0_103 = arith.constant 0 : index
    %c17 = arith.constant 17 : index
    %233 = memref.load %arg5[%c0_103, %c17] : memref<2x49xf32, #tpu.memory_space<smem>>
    %c1_104 = arith.constant 1 : index
    %c17_105 = arith.constant 17 : index
    %234 = memref.load %arg5[%c1_104, %c17_105] : memref<2x49xf32, #tpu.memory_space<smem>>
    %235 = vector.broadcast %233 : f32 to vector<2x256xf32>
    %236 = arith.mulf %25, %235 : vector<2x256xf32>
    %237 = vector.broadcast %234 : f32 to vector<2x256xf32>
    %238 = arith.mulf %26, %237 : vector<2x256xf32>
    %239 = arith.addf %236, %238 : vector<2x256xf32>
    %c16_i32 = arith.constant 16 : i32
    %240 = tpu.dynamic_rotate %239 by %c16_i32 dim 1 : vector<2x256xf32>, i32 -> vector<2x256xf32>
    %c17_106 = arith.constant 17 : index
    %c0_107 = arith.constant 0 : index
    %241 = vector.load %arg4[%c17_106, %c0_107] : memref<49x256xf32, #tpu.memory_space<vmem>>, vector<1x256xf32>
    %242 = vector.broadcast %241 : vector<1x256xf32> to vector<2x256xf32>
    %243 = arith.mulf %240, %242 : vector<2x256xf32>
    %244 = arith.addf %220, %243 : vector<2x256xf32>
    %c0_108 = arith.constant 0 : index
    %c18 = arith.constant 18 : index
    %245 = memref.load %arg5[%c0_108, %c18] : memref<2x49xf32, #tpu.memory_space<smem>>
    %c1_109 = arith.constant 1 : index
    %c18_110 = arith.constant 18 : index
    %246 = memref.load %arg5[%c1_109, %c18_110] : memref<2x49xf32, #tpu.memory_space<smem>>
    %247 = vector.broadcast %245 : f32 to vector<2x256xf32>
    %248 = arith.mulf %25, %247 : vector<2x256xf32>
    %249 = vector.broadcast %246 : f32 to vector<2x256xf32>
    %250 = arith.mulf %26, %249 : vector<2x256xf32>
    %251 = arith.addf %248, %250 : vector<2x256xf32>
    %c15_i32 = arith.constant 15 : i32
    %252 = tpu.dynamic_rotate %251 by %c15_i32 dim 1 : vector<2x256xf32>, i32 -> vector<2x256xf32>
    %c18_111 = arith.constant 18 : index
    %c0_112 = arith.constant 0 : index
    %253 = vector.load %arg4[%c18_111, %c0_112] : memref<49x256xf32, #tpu.memory_space<vmem>>, vector<1x256xf32>
    %254 = vector.broadcast %253 : vector<1x256xf32> to vector<2x256xf32>
    %255 = arith.mulf %252, %254 : vector<2x256xf32>
    %256 = arith.addf %232, %255 : vector<2x256xf32>
    %c0_113 = arith.constant 0 : index
    %c19 = arith.constant 19 : index
    %257 = memref.load %arg5[%c0_113, %c19] : memref<2x49xf32, #tpu.memory_space<smem>>
    %c1_114 = arith.constant 1 : index
    %c19_115 = arith.constant 19 : index
    %258 = memref.load %arg5[%c1_114, %c19_115] : memref<2x49xf32, #tpu.memory_space<smem>>
    %259 = vector.broadcast %257 : f32 to vector<2x256xf32>
    %260 = arith.mulf %25, %259 : vector<2x256xf32>
    %261 = vector.broadcast %258 : f32 to vector<2x256xf32>
    %262 = arith.mulf %26, %261 : vector<2x256xf32>
    %263 = arith.addf %260, %262 : vector<2x256xf32>
    %c14_i32 = arith.constant 14 : i32
    %264 = tpu.dynamic_rotate %263 by %c14_i32 dim 1 : vector<2x256xf32>, i32 -> vector<2x256xf32>
    %c19_116 = arith.constant 19 : index
    %c0_117 = arith.constant 0 : index
    %265 = vector.load %arg4[%c19_116, %c0_117] : memref<49x256xf32, #tpu.memory_space<vmem>>, vector<1x256xf32>
    %266 = vector.broadcast %265 : vector<1x256xf32> to vector<2x256xf32>
    %267 = arith.mulf %264, %266 : vector<2x256xf32>
    %268 = arith.addf %244, %267 : vector<2x256xf32>
    %c0_118 = arith.constant 0 : index
    %c20 = arith.constant 20 : index
    %269 = memref.load %arg5[%c0_118, %c20] : memref<2x49xf32, #tpu.memory_space<smem>>
    %c1_119 = arith.constant 1 : index
    %c20_120 = arith.constant 20 : index
    %270 = memref.load %arg5[%c1_119, %c20_120] : memref<2x49xf32, #tpu.memory_space<smem>>
    %271 = vector.broadcast %269 : f32 to vector<2x256xf32>
    %272 = arith.mulf %25, %271 : vector<2x256xf32>
    %273 = vector.broadcast %270 : f32 to vector<2x256xf32>
    %274 = arith.mulf %26, %273 : vector<2x256xf32>
    %275 = arith.addf %272, %274 : vector<2x256xf32>
    %c13_i32 = arith.constant 13 : i32
    %276 = tpu.dynamic_rotate %275 by %c13_i32 dim 1 : vector<2x256xf32>, i32 -> vector<2x256xf32>
    %c20_121 = arith.constant 20 : index
    %c0_122 = arith.constant 0 : index
    %277 = vector.load %arg4[%c20_121, %c0_122] : memref<49x256xf32, #tpu.memory_space<vmem>>, vector<1x256xf32>
    %278 = vector.broadcast %277 : vector<1x256xf32> to vector<2x256xf32>
    %279 = arith.mulf %276, %278 : vector<2x256xf32>
    %280 = arith.addf %256, %279 : vector<2x256xf32>
    %c0_123 = arith.constant 0 : index
    %c21 = arith.constant 21 : index
    %281 = memref.load %arg5[%c0_123, %c21] : memref<2x49xf32, #tpu.memory_space<smem>>
    %c1_124 = arith.constant 1 : index
    %c21_125 = arith.constant 21 : index
    %282 = memref.load %arg5[%c1_124, %c21_125] : memref<2x49xf32, #tpu.memory_space<smem>>
    %283 = vector.broadcast %281 : f32 to vector<2x256xf32>
    %284 = arith.mulf %25, %283 : vector<2x256xf32>
    %285 = vector.broadcast %282 : f32 to vector<2x256xf32>
    %286 = arith.mulf %26, %285 : vector<2x256xf32>
    %287 = arith.addf %284, %286 : vector<2x256xf32>
    %c3_i32 = arith.constant 3 : i32
    %288 = tpu.dynamic_rotate %287 by %c3_i32 dim 1 : vector<2x256xf32>, i32 -> vector<2x256xf32>
    %c21_126 = arith.constant 21 : index
    %c0_127 = arith.constant 0 : index
    %289 = vector.load %arg4[%c21_126, %c0_127] : memref<49x256xf32, #tpu.memory_space<vmem>>, vector<1x256xf32>
    %290 = vector.broadcast %289 : vector<1x256xf32> to vector<2x256xf32>
    %291 = arith.mulf %288, %290 : vector<2x256xf32>
    %292 = arith.addf %268, %291 : vector<2x256xf32>
    %c0_128 = arith.constant 0 : index
    %c22 = arith.constant 22 : index
    %293 = memref.load %arg5[%c0_128, %c22] : memref<2x49xf32, #tpu.memory_space<smem>>
    %c1_129 = arith.constant 1 : index
    %c22_130 = arith.constant 22 : index
    %294 = memref.load %arg5[%c1_129, %c22_130] : memref<2x49xf32, #tpu.memory_space<smem>>
    %295 = vector.broadcast %293 : f32 to vector<2x256xf32>
    %296 = arith.mulf %25, %295 : vector<2x256xf32>
    %297 = vector.broadcast %294 : f32 to vector<2x256xf32>
    %298 = arith.mulf %26, %297 : vector<2x256xf32>
    %299 = arith.addf %296, %298 : vector<2x256xf32>
    %c2_i32 = arith.constant 2 : i32
    %300 = tpu.dynamic_rotate %299 by %c2_i32 dim 1 : vector<2x256xf32>, i32 -> vector<2x256xf32>
    %c22_131 = arith.constant 22 : index
    %c0_132 = arith.constant 0 : index
    %301 = vector.load %arg4[%c22_131, %c0_132] : memref<49x256xf32, #tpu.memory_space<vmem>>, vector<1x256xf32>
    %302 = vector.broadcast %301 : vector<1x256xf32> to vector<2x256xf32>
    %303 = arith.mulf %300, %302 : vector<2x256xf32>
    %304 = arith.addf %280, %303 : vector<2x256xf32>
    %c0_133 = arith.constant 0 : index
    %c23 = arith.constant 23 : index
    %305 = memref.load %arg5[%c0_133, %c23] : memref<2x49xf32, #tpu.memory_space<smem>>
    %c1_134 = arith.constant 1 : index
    %c23_135 = arith.constant 23 : index
    %306 = memref.load %arg5[%c1_134, %c23_135] : memref<2x49xf32, #tpu.memory_space<smem>>
    %307 = vector.broadcast %305 : f32 to vector<2x256xf32>
    %308 = arith.mulf %25, %307 : vector<2x256xf32>
    %309 = vector.broadcast %306 : f32 to vector<2x256xf32>
    %310 = arith.mulf %26, %309 : vector<2x256xf32>
    %311 = arith.addf %308, %310 : vector<2x256xf32>
    %c1_i32 = arith.constant 1 : i32
    %312 = tpu.dynamic_rotate %311 by %c1_i32 dim 1 : vector<2x256xf32>, i32 -> vector<2x256xf32>
    %c23_136 = arith.constant 23 : index
    %c0_137 = arith.constant 0 : index
    %313 = vector.load %arg4[%c23_136, %c0_137] : memref<49x256xf32, #tpu.memory_space<vmem>>, vector<1x256xf32>
    %314 = vector.broadcast %313 : vector<1x256xf32> to vector<2x256xf32>
    %315 = arith.mulf %312, %314 : vector<2x256xf32>
    %316 = arith.addf %292, %315 : vector<2x256xf32>
    %c0_138 = arith.constant 0 : index
    %c24 = arith.constant 24 : index
    %317 = memref.load %arg5[%c0_138, %c24] : memref<2x49xf32, #tpu.memory_space<smem>>
    %c1_139 = arith.constant 1 : index
    %c24_140 = arith.constant 24 : index
    %318 = memref.load %arg5[%c1_139, %c24_140] : memref<2x49xf32, #tpu.memory_space<smem>>
    %319 = vector.broadcast %317 : f32 to vector<2x256xf32>
    %320 = arith.mulf %25, %319 : vector<2x256xf32>
    %321 = vector.broadcast %318 : f32 to vector<2x256xf32>
    %322 = arith.mulf %26, %321 : vector<2x256xf32>
    %323 = arith.addf %320, %322 : vector<2x256xf32>
    %324 = arith.addf %304, %323 : vector<2x256xf32>
    %c0_141 = arith.constant 0 : index
    %c25 = arith.constant 25 : index
    %325 = memref.load %arg5[%c0_141, %c25] : memref<2x49xf32, #tpu.memory_space<smem>>
    %c1_142 = arith.constant 1 : index
    %c25_143 = arith.constant 25 : index
    %326 = memref.load %arg5[%c1_142, %c25_143] : memref<2x49xf32, #tpu.memory_space<smem>>
    %327 = vector.broadcast %325 : f32 to vector<2x256xf32>
    %328 = arith.mulf %25, %327 : vector<2x256xf32>
    %329 = vector.broadcast %326 : f32 to vector<2x256xf32>
    %330 = arith.mulf %26, %329 : vector<2x256xf32>
    %331 = arith.addf %328, %330 : vector<2x256xf32>
    %c255_i32 = arith.constant 255 : i32
    %332 = tpu.dynamic_rotate %331 by %c255_i32 dim 1 : vector<2x256xf32>, i32 -> vector<2x256xf32>
    %c25_144 = arith.constant 25 : index
    %c0_145 = arith.constant 0 : index
    %333 = vector.load %arg4[%c25_144, %c0_145] : memref<49x256xf32, #tpu.memory_space<vmem>>, vector<1x256xf32>
    %334 = vector.broadcast %333 : vector<1x256xf32> to vector<2x256xf32>
    %335 = arith.mulf %332, %334 : vector<2x256xf32>
    %336 = arith.addf %316, %335 : vector<2x256xf32>
    %c0_146 = arith.constant 0 : index
    %c26 = arith.constant 26 : index
    %337 = memref.load %arg5[%c0_146, %c26] : memref<2x49xf32, #tpu.memory_space<smem>>
    %c1_147 = arith.constant 1 : index
    %c26_148 = arith.constant 26 : index
    %338 = memref.load %arg5[%c1_147, %c26_148] : memref<2x49xf32, #tpu.memory_space<smem>>
    %339 = vector.broadcast %337 : f32 to vector<2x256xf32>
    %340 = arith.mulf %25, %339 : vector<2x256xf32>
    %341 = vector.broadcast %338 : f32 to vector<2x256xf32>
    %342 = arith.mulf %26, %341 : vector<2x256xf32>
    %343 = arith.addf %340, %342 : vector<2x256xf32>
    %c254_i32 = arith.constant 254 : i32
    %344 = tpu.dynamic_rotate %343 by %c254_i32 dim 1 : vector<2x256xf32>, i32 -> vector<2x256xf32>
    %c26_149 = arith.constant 26 : index
    %c0_150 = arith.constant 0 : index
    %345 = vector.load %arg4[%c26_149, %c0_150] : memref<49x256xf32, #tpu.memory_space<vmem>>, vector<1x256xf32>
    %346 = vector.broadcast %345 : vector<1x256xf32> to vector<2x256xf32>
    %347 = arith.mulf %344, %346 : vector<2x256xf32>
    %348 = arith.addf %324, %347 : vector<2x256xf32>
    %c0_151 = arith.constant 0 : index
    %c27 = arith.constant 27 : index
    %349 = memref.load %arg5[%c0_151, %c27] : memref<2x49xf32, #tpu.memory_space<smem>>
    %c1_152 = arith.constant 1 : index
    %c27_153 = arith.constant 27 : index
    %350 = memref.load %arg5[%c1_152, %c27_153] : memref<2x49xf32, #tpu.memory_space<smem>>
    %351 = vector.broadcast %349 : f32 to vector<2x256xf32>
    %352 = arith.mulf %25, %351 : vector<2x256xf32>
    %353 = vector.broadcast %350 : f32 to vector<2x256xf32>
    %354 = arith.mulf %26, %353 : vector<2x256xf32>
    %355 = arith.addf %352, %354 : vector<2x256xf32>
    %c253_i32 = arith.constant 253 : i32
    %356 = tpu.dynamic_rotate %355 by %c253_i32 dim 1 : vector<2x256xf32>, i32 -> vector<2x256xf32>
    %c27_154 = arith.constant 27 : index
    %c0_155 = arith.constant 0 : index
    %357 = vector.load %arg4[%c27_154, %c0_155] : memref<49x256xf32, #tpu.memory_space<vmem>>, vector<1x256xf32>
    %358 = vector.broadcast %357 : vector<1x256xf32> to vector<2x256xf32>
    %359 = arith.mulf %356, %358 : vector<2x256xf32>
    %360 = arith.addf %336, %359 : vector<2x256xf32>
    %c0_156 = arith.constant 0 : index
    %c28 = arith.constant 28 : index
    %361 = memref.load %arg5[%c0_156, %c28] : memref<2x49xf32, #tpu.memory_space<smem>>
    %c1_157 = arith.constant 1 : index
    %c28_158 = arith.constant 28 : index
    %362 = memref.load %arg5[%c1_157, %c28_158] : memref<2x49xf32, #tpu.memory_space<smem>>
    %363 = vector.broadcast %361 : f32 to vector<2x256xf32>
    %364 = arith.mulf %25, %363 : vector<2x256xf32>
    %365 = vector.broadcast %362 : f32 to vector<2x256xf32>
    %366 = arith.mulf %26, %365 : vector<2x256xf32>
    %367 = arith.addf %364, %366 : vector<2x256xf32>
    %c243_i32 = arith.constant 243 : i32
    %368 = tpu.dynamic_rotate %367 by %c243_i32 dim 1 : vector<2x256xf32>, i32 -> vector<2x256xf32>
    %c28_159 = arith.constant 28 : index
    %c0_160 = arith.constant 0 : index
    %369 = vector.load %arg4[%c28_159, %c0_160] : memref<49x256xf32, #tpu.memory_space<vmem>>, vector<1x256xf32>
    %370 = vector.broadcast %369 : vector<1x256xf32> to vector<2x256xf32>
    %371 = arith.mulf %368, %370 : vector<2x256xf32>
    %372 = arith.addf %348, %371 : vector<2x256xf32>
    %c0_161 = arith.constant 0 : index
    %c29 = arith.constant 29 : index
    %373 = memref.load %arg5[%c0_161, %c29] : memref<2x49xf32, #tpu.memory_space<smem>>
    %c1_162 = arith.constant 1 : index
    %c29_163 = arith.constant 29 : index
    %374 = memref.load %arg5[%c1_162, %c29_163] : memref<2x49xf32, #tpu.memory_space<smem>>
    %375 = vector.broadcast %373 : f32 to vector<2x256xf32>
    %376 = arith.mulf %25, %375 : vector<2x256xf32>
    %377 = vector.broadcast %374 : f32 to vector<2x256xf32>
    %378 = arith.mulf %26, %377 : vector<2x256xf32>
    %379 = arith.addf %376, %378 : vector<2x256xf32>
    %c242_i32 = arith.constant 242 : i32
    %380 = tpu.dynamic_rotate %379 by %c242_i32 dim 1 : vector<2x256xf32>, i32 -> vector<2x256xf32>
    %c29_164 = arith.constant 29 : index
    %c0_165 = arith.constant 0 : index
    %381 = vector.load %arg4[%c29_164, %c0_165] : memref<49x256xf32, #tpu.memory_space<vmem>>, vector<1x256xf32>
    %382 = vector.broadcast %381 : vector<1x256xf32> to vector<2x256xf32>
    %383 = arith.mulf %380, %382 : vector<2x256xf32>
    %384 = arith.addf %360, %383 : vector<2x256xf32>
    %c0_166 = arith.constant 0 : index
    %c30 = arith.constant 30 : index
    %385 = memref.load %arg5[%c0_166, %c30] : memref<2x49xf32, #tpu.memory_space<smem>>
    %c1_167 = arith.constant 1 : index
    %c30_168 = arith.constant 30 : index
    %386 = memref.load %arg5[%c1_167, %c30_168] : memref<2x49xf32, #tpu.memory_space<smem>>
    %387 = vector.broadcast %385 : f32 to vector<2x256xf32>
    %388 = arith.mulf %25, %387 : vector<2x256xf32>
    %389 = vector.broadcast %386 : f32 to vector<2x256xf32>
    %390 = arith.mulf %26, %389 : vector<2x256xf32>
    %391 = arith.addf %388, %390 : vector<2x256xf32>
    %c241_i32 = arith.constant 241 : i32
    %392 = tpu.dynamic_rotate %391 by %c241_i32 dim 1 : vector<2x256xf32>, i32 -> vector<2x256xf32>
    %c30_169 = arith.constant 30 : index
    %c0_170 = arith.constant 0 : index
    %393 = vector.load %arg4[%c30_169, %c0_170] : memref<49x256xf32, #tpu.memory_space<vmem>>, vector<1x256xf32>
    %394 = vector.broadcast %393 : vector<1x256xf32> to vector<2x256xf32>
    %395 = arith.mulf %392, %394 : vector<2x256xf32>
    %396 = arith.addf %372, %395 : vector<2x256xf32>
    %c0_171 = arith.constant 0 : index
    %c31 = arith.constant 31 : index
    %397 = memref.load %arg5[%c0_171, %c31] : memref<2x49xf32, #tpu.memory_space<smem>>
    %c1_172 = arith.constant 1 : index
    %c31_173 = arith.constant 31 : index
    %398 = memref.load %arg5[%c1_172, %c31_173] : memref<2x49xf32, #tpu.memory_space<smem>>
    %399 = vector.broadcast %397 : f32 to vector<2x256xf32>
    %400 = arith.mulf %25, %399 : vector<2x256xf32>
    %401 = vector.broadcast %398 : f32 to vector<2x256xf32>
    %402 = arith.mulf %26, %401 : vector<2x256xf32>
    %403 = arith.addf %400, %402 : vector<2x256xf32>
    %c240_i32 = arith.constant 240 : i32
    %404 = tpu.dynamic_rotate %403 by %c240_i32 dim 1 : vector<2x256xf32>, i32 -> vector<2x256xf32>
    %c31_174 = arith.constant 31 : index
    %c0_175 = arith.constant 0 : index
    %405 = vector.load %arg4[%c31_174, %c0_175] : memref<49x256xf32, #tpu.memory_space<vmem>>, vector<1x256xf32>
    %406 = vector.broadcast %405 : vector<1x256xf32> to vector<2x256xf32>
    %407 = arith.mulf %404, %406 : vector<2x256xf32>
    %408 = arith.addf %384, %407 : vector<2x256xf32>
    %c0_176 = arith.constant 0 : index
    %c32 = arith.constant 32 : index
    %409 = memref.load %arg5[%c0_176, %c32] : memref<2x49xf32, #tpu.memory_space<smem>>
    %c1_177 = arith.constant 1 : index
    %c32_178 = arith.constant 32 : index
    %410 = memref.load %arg5[%c1_177, %c32_178] : memref<2x49xf32, #tpu.memory_space<smem>>
    %411 = vector.broadcast %409 : f32 to vector<2x256xf32>
    %412 = arith.mulf %25, %411 : vector<2x256xf32>
    %413 = vector.broadcast %410 : f32 to vector<2x256xf32>
    %414 = arith.mulf %26, %413 : vector<2x256xf32>
    %415 = arith.addf %412, %414 : vector<2x256xf32>
    %c239_i32 = arith.constant 239 : i32
    %416 = tpu.dynamic_rotate %415 by %c239_i32 dim 1 : vector<2x256xf32>, i32 -> vector<2x256xf32>
    %c32_179 = arith.constant 32 : index
    %c0_180 = arith.constant 0 : index
    %417 = vector.load %arg4[%c32_179, %c0_180] : memref<49x256xf32, #tpu.memory_space<vmem>>, vector<1x256xf32>
    %418 = vector.broadcast %417 : vector<1x256xf32> to vector<2x256xf32>
    %419 = arith.mulf %416, %418 : vector<2x256xf32>
    %420 = arith.addf %396, %419 : vector<2x256xf32>
    %c0_181 = arith.constant 0 : index
    %c33 = arith.constant 33 : index
    %421 = memref.load %arg5[%c0_181, %c33] : memref<2x49xf32, #tpu.memory_space<smem>>
    %c1_182 = arith.constant 1 : index
    %c33_183 = arith.constant 33 : index
    %422 = memref.load %arg5[%c1_182, %c33_183] : memref<2x49xf32, #tpu.memory_space<smem>>
    %423 = vector.broadcast %421 : f32 to vector<2x256xf32>
    %424 = arith.mulf %25, %423 : vector<2x256xf32>
    %425 = vector.broadcast %422 : f32 to vector<2x256xf32>
    %426 = arith.mulf %26, %425 : vector<2x256xf32>
    %427 = arith.addf %424, %426 : vector<2x256xf32>
    %c238_i32 = arith.constant 238 : i32
    %428 = tpu.dynamic_rotate %427 by %c238_i32 dim 1 : vector<2x256xf32>, i32 -> vector<2x256xf32>
    %c33_184 = arith.constant 33 : index
    %c0_185 = arith.constant 0 : index
    %429 = vector.load %arg4[%c33_184, %c0_185] : memref<49x256xf32, #tpu.memory_space<vmem>>, vector<1x256xf32>
    %430 = vector.broadcast %429 : vector<1x256xf32> to vector<2x256xf32>
    %431 = arith.mulf %428, %430 : vector<2x256xf32>
    %432 = arith.addf %408, %431 : vector<2x256xf32>
    %c0_186 = arith.constant 0 : index
    %c34 = arith.constant 34 : index
    %433 = memref.load %arg5[%c0_186, %c34] : memref<2x49xf32, #tpu.memory_space<smem>>
    %c1_187 = arith.constant 1 : index
    %c34_188 = arith.constant 34 : index
    %434 = memref.load %arg5[%c1_187, %c34_188] : memref<2x49xf32, #tpu.memory_space<smem>>
    %435 = vector.broadcast %433 : f32 to vector<2x256xf32>
    %436 = arith.mulf %25, %435 : vector<2x256xf32>
    %437 = vector.broadcast %434 : f32 to vector<2x256xf32>
    %438 = arith.mulf %26, %437 : vector<2x256xf32>
    %439 = arith.addf %436, %438 : vector<2x256xf32>
    %c237_i32 = arith.constant 237 : i32
    %440 = tpu.dynamic_rotate %439 by %c237_i32 dim 1 : vector<2x256xf32>, i32 -> vector<2x256xf32>
    %c34_189 = arith.constant 34 : index
    %c0_190 = arith.constant 0 : index
    %441 = vector.load %arg4[%c34_189, %c0_190] : memref<49x256xf32, #tpu.memory_space<vmem>>, vector<1x256xf32>
    %442 = vector.broadcast %441 : vector<1x256xf32> to vector<2x256xf32>
    %443 = arith.mulf %440, %442 : vector<2x256xf32>
    %444 = arith.addf %420, %443 : vector<2x256xf32>
    %c0_191 = arith.constant 0 : index
    %c35 = arith.constant 35 : index
    %445 = memref.load %arg5[%c0_191, %c35] : memref<2x49xf32, #tpu.memory_space<smem>>
    %c1_192 = arith.constant 1 : index
    %c35_193 = arith.constant 35 : index
    %446 = memref.load %arg5[%c1_192, %c35_193] : memref<2x49xf32, #tpu.memory_space<smem>>
    %447 = vector.broadcast %445 : f32 to vector<2x256xf32>
    %448 = arith.mulf %25, %447 : vector<2x256xf32>
    %449 = vector.broadcast %446 : f32 to vector<2x256xf32>
    %450 = arith.mulf %26, %449 : vector<2x256xf32>
    %451 = arith.addf %448, %450 : vector<2x256xf32>
    %c227_i32 = arith.constant 227 : i32
    %452 = tpu.dynamic_rotate %451 by %c227_i32 dim 1 : vector<2x256xf32>, i32 -> vector<2x256xf32>
    %c35_194 = arith.constant 35 : index
    %c0_195 = arith.constant 0 : index
    %453 = vector.load %arg4[%c35_194, %c0_195] : memref<49x256xf32, #tpu.memory_space<vmem>>, vector<1x256xf32>
    %454 = vector.broadcast %453 : vector<1x256xf32> to vector<2x256xf32>
    %455 = arith.mulf %452, %454 : vector<2x256xf32>
    %456 = arith.addf %432, %455 : vector<2x256xf32>
    %c0_196 = arith.constant 0 : index
    %c36 = arith.constant 36 : index
    %457 = memref.load %arg5[%c0_196, %c36] : memref<2x49xf32, #tpu.memory_space<smem>>
    %c1_197 = arith.constant 1 : index
    %c36_198 = arith.constant 36 : index
    %458 = memref.load %arg5[%c1_197, %c36_198] : memref<2x49xf32, #tpu.memory_space<smem>>
    %459 = vector.broadcast %457 : f32 to vector<2x256xf32>
    %460 = arith.mulf %25, %459 : vector<2x256xf32>
    %461 = vector.broadcast %458 : f32 to vector<2x256xf32>
    %462 = arith.mulf %26, %461 : vector<2x256xf32>
    %463 = arith.addf %460, %462 : vector<2x256xf32>
    %c226_i32 = arith.constant 226 : i32
    %464 = tpu.dynamic_rotate %463 by %c226_i32 dim 1 : vector<2x256xf32>, i32 -> vector<2x256xf32>
    %c36_199 = arith.constant 36 : index
    %c0_200 = arith.constant 0 : index
    %465 = vector.load %arg4[%c36_199, %c0_200] : memref<49x256xf32, #tpu.memory_space<vmem>>, vector<1x256xf32>
    %466 = vector.broadcast %465 : vector<1x256xf32> to vector<2x256xf32>
    %467 = arith.mulf %464, %466 : vector<2x256xf32>
    %468 = arith.addf %444, %467 : vector<2x256xf32>
    %c0_201 = arith.constant 0 : index
    %c37 = arith.constant 37 : index
    %469 = memref.load %arg5[%c0_201, %c37] : memref<2x49xf32, #tpu.memory_space<smem>>
    %c1_202 = arith.constant 1 : index
    %c37_203 = arith.constant 37 : index
    %470 = memref.load %arg5[%c1_202, %c37_203] : memref<2x49xf32, #tpu.memory_space<smem>>
    %471 = vector.broadcast %469 : f32 to vector<2x256xf32>
    %472 = arith.mulf %25, %471 : vector<2x256xf32>
    %473 = vector.broadcast %470 : f32 to vector<2x256xf32>
    %474 = arith.mulf %26, %473 : vector<2x256xf32>
    %475 = arith.addf %472, %474 : vector<2x256xf32>
    %c225_i32 = arith.constant 225 : i32
    %476 = tpu.dynamic_rotate %475 by %c225_i32 dim 1 : vector<2x256xf32>, i32 -> vector<2x256xf32>
    %c37_204 = arith.constant 37 : index
    %c0_205 = arith.constant 0 : index
    %477 = vector.load %arg4[%c37_204, %c0_205] : memref<49x256xf32, #tpu.memory_space<vmem>>, vector<1x256xf32>
    %478 = vector.broadcast %477 : vector<1x256xf32> to vector<2x256xf32>
    %479 = arith.mulf %476, %478 : vector<2x256xf32>
    %480 = arith.addf %456, %479 : vector<2x256xf32>
    %c0_206 = arith.constant 0 : index
    %c38 = arith.constant 38 : index
    %481 = memref.load %arg5[%c0_206, %c38] : memref<2x49xf32, #tpu.memory_space<smem>>
    %c1_207 = arith.constant 1 : index
    %c38_208 = arith.constant 38 : index
    %482 = memref.load %arg5[%c1_207, %c38_208] : memref<2x49xf32, #tpu.memory_space<smem>>
    %483 = vector.broadcast %481 : f32 to vector<2x256xf32>
    %484 = arith.mulf %25, %483 : vector<2x256xf32>
    %485 = vector.broadcast %482 : f32 to vector<2x256xf32>
    %486 = arith.mulf %26, %485 : vector<2x256xf32>
    %487 = arith.addf %484, %486 : vector<2x256xf32>
    %c224_i32 = arith.constant 224 : i32
    %488 = tpu.dynamic_rotate %487 by %c224_i32 dim 1 : vector<2x256xf32>, i32 -> vector<2x256xf32>
    %c38_209 = arith.constant 38 : index
    %c0_210 = arith.constant 0 : index
    %489 = vector.load %arg4[%c38_209, %c0_210] : memref<49x256xf32, #tpu.memory_space<vmem>>, vector<1x256xf32>
    %490 = vector.broadcast %489 : vector<1x256xf32> to vector<2x256xf32>
    %491 = arith.mulf %488, %490 : vector<2x256xf32>
    %492 = arith.addf %468, %491 : vector<2x256xf32>
    %c0_211 = arith.constant 0 : index
    %c39 = arith.constant 39 : index
    %493 = memref.load %arg5[%c0_211, %c39] : memref<2x49xf32, #tpu.memory_space<smem>>
    %c1_212 = arith.constant 1 : index
    %c39_213 = arith.constant 39 : index
    %494 = memref.load %arg5[%c1_212, %c39_213] : memref<2x49xf32, #tpu.memory_space<smem>>
    %495 = vector.broadcast %493 : f32 to vector<2x256xf32>
    %496 = arith.mulf %25, %495 : vector<2x256xf32>
    %497 = vector.broadcast %494 : f32 to vector<2x256xf32>
    %498 = arith.mulf %26, %497 : vector<2x256xf32>
    %499 = arith.addf %496, %498 : vector<2x256xf32>
    %c223_i32 = arith.constant 223 : i32
    %500 = tpu.dynamic_rotate %499 by %c223_i32 dim 1 : vector<2x256xf32>, i32 -> vector<2x256xf32>
    %c39_214 = arith.constant 39 : index
    %c0_215 = arith.constant 0 : index
    %501 = vector.load %arg4[%c39_214, %c0_215] : memref<49x256xf32, #tpu.memory_space<vmem>>, vector<1x256xf32>
    %502 = vector.broadcast %501 : vector<1x256xf32> to vector<2x256xf32>
    %503 = arith.mulf %500, %502 : vector<2x256xf32>
    %504 = arith.addf %480, %503 : vector<2x256xf32>
    %c0_216 = arith.constant 0 : index
    %c40 = arith.constant 40 : index
    %505 = memref.load %arg5[%c0_216, %c40] : memref<2x49xf32, #tpu.memory_space<smem>>
    %c1_217 = arith.constant 1 : index
    %c40_218 = arith.constant 40 : index
    %506 = memref.load %arg5[%c1_217, %c40_218] : memref<2x49xf32, #tpu.memory_space<smem>>
    %507 = vector.broadcast %505 : f32 to vector<2x256xf32>
    %508 = arith.mulf %25, %507 : vector<2x256xf32>
    %509 = vector.broadcast %506 : f32 to vector<2x256xf32>
    %510 = arith.mulf %26, %509 : vector<2x256xf32>
    %511 = arith.addf %508, %510 : vector<2x256xf32>
    %c222_i32 = arith.constant 222 : i32
    %512 = tpu.dynamic_rotate %511 by %c222_i32 dim 1 : vector<2x256xf32>, i32 -> vector<2x256xf32>
    %c40_219 = arith.constant 40 : index
    %c0_220 = arith.constant 0 : index
    %513 = vector.load %arg4[%c40_219, %c0_220] : memref<49x256xf32, #tpu.memory_space<vmem>>, vector<1x256xf32>
    %514 = vector.broadcast %513 : vector<1x256xf32> to vector<2x256xf32>
    %515 = arith.mulf %512, %514 : vector<2x256xf32>
    %516 = arith.addf %492, %515 : vector<2x256xf32>
    %c0_221 = arith.constant 0 : index
    %c41 = arith.constant 41 : index
    %517 = memref.load %arg5[%c0_221, %c41] : memref<2x49xf32, #tpu.memory_space<smem>>
    %c1_222 = arith.constant 1 : index
    %c41_223 = arith.constant 41 : index
    %518 = memref.load %arg5[%c1_222, %c41_223] : memref<2x49xf32, #tpu.memory_space<smem>>
    %519 = vector.broadcast %517 : f32 to vector<2x256xf32>
    %520 = arith.mulf %25, %519 : vector<2x256xf32>
    %521 = vector.broadcast %518 : f32 to vector<2x256xf32>
    %522 = arith.mulf %26, %521 : vector<2x256xf32>
    %523 = arith.addf %520, %522 : vector<2x256xf32>
    %c221_i32 = arith.constant 221 : i32
    %524 = tpu.dynamic_rotate %523 by %c221_i32 dim 1 : vector<2x256xf32>, i32 -> vector<2x256xf32>
    %c41_224 = arith.constant 41 : index
    %c0_225 = arith.constant 0 : index
    %525 = vector.load %arg4[%c41_224, %c0_225] : memref<49x256xf32, #tpu.memory_space<vmem>>, vector<1x256xf32>
    %526 = vector.broadcast %525 : vector<1x256xf32> to vector<2x256xf32>
    %527 = arith.mulf %524, %526 : vector<2x256xf32>
    %528 = arith.addf %504, %527 : vector<2x256xf32>
    %c0_226 = arith.constant 0 : index
    %c42 = arith.constant 42 : index
    %529 = memref.load %arg5[%c0_226, %c42] : memref<2x49xf32, #tpu.memory_space<smem>>
    %c1_227 = arith.constant 1 : index
    %c42_228 = arith.constant 42 : index
    %530 = memref.load %arg5[%c1_227, %c42_228] : memref<2x49xf32, #tpu.memory_space<smem>>
    %531 = vector.broadcast %529 : f32 to vector<2x256xf32>
    %532 = arith.mulf %25, %531 : vector<2x256xf32>
    %533 = vector.broadcast %530 : f32 to vector<2x256xf32>
    %534 = arith.mulf %26, %533 : vector<2x256xf32>
    %535 = arith.addf %532, %534 : vector<2x256xf32>
    %c211_i32 = arith.constant 211 : i32
    %536 = tpu.dynamic_rotate %535 by %c211_i32 dim 1 : vector<2x256xf32>, i32 -> vector<2x256xf32>
    %c42_229 = arith.constant 42 : index
    %c0_230 = arith.constant 0 : index
    %537 = vector.load %arg4[%c42_229, %c0_230] : memref<49x256xf32, #tpu.memory_space<vmem>>, vector<1x256xf32>
    %538 = vector.broadcast %537 : vector<1x256xf32> to vector<2x256xf32>
    %539 = arith.mulf %536, %538 : vector<2x256xf32>
    %540 = arith.addf %516, %539 : vector<2x256xf32>
    %c0_231 = arith.constant 0 : index
    %c43 = arith.constant 43 : index
    %541 = memref.load %arg5[%c0_231, %c43] : memref<2x49xf32, #tpu.memory_space<smem>>
    %c1_232 = arith.constant 1 : index
    %c43_233 = arith.constant 43 : index
    %542 = memref.load %arg5[%c1_232, %c43_233] : memref<2x49xf32, #tpu.memory_space<smem>>
    %543 = vector.broadcast %541 : f32 to vector<2x256xf32>
    %544 = arith.mulf %25, %543 : vector<2x256xf32>
    %545 = vector.broadcast %542 : f32 to vector<2x256xf32>
    %546 = arith.mulf %26, %545 : vector<2x256xf32>
    %547 = arith.addf %544, %546 : vector<2x256xf32>
    %c210_i32 = arith.constant 210 : i32
    %548 = tpu.dynamic_rotate %547 by %c210_i32 dim 1 : vector<2x256xf32>, i32 -> vector<2x256xf32>
    %c43_234 = arith.constant 43 : index
    %c0_235 = arith.constant 0 : index
    %549 = vector.load %arg4[%c43_234, %c0_235] : memref<49x256xf32, #tpu.memory_space<vmem>>, vector<1x256xf32>
    %550 = vector.broadcast %549 : vector<1x256xf32> to vector<2x256xf32>
    %551 = arith.mulf %548, %550 : vector<2x256xf32>
    %552 = arith.addf %528, %551 : vector<2x256xf32>
    %c0_236 = arith.constant 0 : index
    %c44 = arith.constant 44 : index
    %553 = memref.load %arg5[%c0_236, %c44] : memref<2x49xf32, #tpu.memory_space<smem>>
    %c1_237 = arith.constant 1 : index
    %c44_238 = arith.constant 44 : index
    %554 = memref.load %arg5[%c1_237, %c44_238] : memref<2x49xf32, #tpu.memory_space<smem>>
    %555 = vector.broadcast %553 : f32 to vector<2x256xf32>
    %556 = arith.mulf %25, %555 : vector<2x256xf32>
    %557 = vector.broadcast %554 : f32 to vector<2x256xf32>
    %558 = arith.mulf %26, %557 : vector<2x256xf32>
    %559 = arith.addf %556, %558 : vector<2x256xf32>
    %c209_i32 = arith.constant 209 : i32
    %560 = tpu.dynamic_rotate %559 by %c209_i32 dim 1 : vector<2x256xf32>, i32 -> vector<2x256xf32>
    %c44_239 = arith.constant 44 : index
    %c0_240 = arith.constant 0 : index
    %561 = vector.load %arg4[%c44_239, %c0_240] : memref<49x256xf32, #tpu.memory_space<vmem>>, vector<1x256xf32>
    %562 = vector.broadcast %561 : vector<1x256xf32> to vector<2x256xf32>
    %563 = arith.mulf %560, %562 : vector<2x256xf32>
    %564 = arith.addf %540, %563 : vector<2x256xf32>
    %c0_241 = arith.constant 0 : index
    %c45 = arith.constant 45 : index
    %565 = memref.load %arg5[%c0_241, %c45] : memref<2x49xf32, #tpu.memory_space<smem>>
    %c1_242 = arith.constant 1 : index
    %c45_243 = arith.constant 45 : index
    %566 = memref.load %arg5[%c1_242, %c45_243] : memref<2x49xf32, #tpu.memory_space<smem>>
    %567 = vector.broadcast %565 : f32 to vector<2x256xf32>
    %568 = arith.mulf %25, %567 : vector<2x256xf32>
    %569 = vector.broadcast %566 : f32 to vector<2x256xf32>
    %570 = arith.mulf %26, %569 : vector<2x256xf32>
    %571 = arith.addf %568, %570 : vector<2x256xf32>
    %c208_i32 = arith.constant 208 : i32
    %572 = tpu.dynamic_rotate %571 by %c208_i32 dim 1 : vector<2x256xf32>, i32 -> vector<2x256xf32>
    %c45_244 = arith.constant 45 : index
    %c0_245 = arith.constant 0 : index
    %573 = vector.load %arg4[%c45_244, %c0_245] : memref<49x256xf32, #tpu.memory_space<vmem>>, vector<1x256xf32>
    %574 = vector.broadcast %573 : vector<1x256xf32> to vector<2x256xf32>
    %575 = arith.mulf %572, %574 : vector<2x256xf32>
    %576 = arith.addf %552, %575 : vector<2x256xf32>
    %c0_246 = arith.constant 0 : index
    %c46 = arith.constant 46 : index
    %577 = memref.load %arg5[%c0_246, %c46] : memref<2x49xf32, #tpu.memory_space<smem>>
    %c1_247 = arith.constant 1 : index
    %c46_248 = arith.constant 46 : index
    %578 = memref.load %arg5[%c1_247, %c46_248] : memref<2x49xf32, #tpu.memory_space<smem>>
    %579 = vector.broadcast %577 : f32 to vector<2x256xf32>
    %580 = arith.mulf %25, %579 : vector<2x256xf32>
    %581 = vector.broadcast %578 : f32 to vector<2x256xf32>
    %582 = arith.mulf %26, %581 : vector<2x256xf32>
    %583 = arith.addf %580, %582 : vector<2x256xf32>
    %c207_i32 = arith.constant 207 : i32
    %584 = tpu.dynamic_rotate %583 by %c207_i32 dim 1 : vector<2x256xf32>, i32 -> vector<2x256xf32>
    %c46_249 = arith.constant 46 : index
    %c0_250 = arith.constant 0 : index
    %585 = vector.load %arg4[%c46_249, %c0_250] : memref<49x256xf32, #tpu.memory_space<vmem>>, vector<1x256xf32>
    %586 = vector.broadcast %585 : vector<1x256xf32> to vector<2x256xf32>
    %587 = arith.mulf %584, %586 : vector<2x256xf32>
    %588 = arith.addf %564, %587 : vector<2x256xf32>
    %c0_251 = arith.constant 0 : index
    %c47 = arith.constant 47 : index
    %589 = memref.load %arg5[%c0_251, %c47] : memref<2x49xf32, #tpu.memory_space<smem>>
    %c1_252 = arith.constant 1 : index
    %c47_253 = arith.constant 47 : index
    %590 = memref.load %arg5[%c1_252, %c47_253] : memref<2x49xf32, #tpu.memory_space<smem>>
    %591 = vector.broadcast %589 : f32 to vector<2x256xf32>
    %592 = arith.mulf %25, %591 : vector<2x256xf32>
    %593 = vector.broadcast %590 : f32 to vector<2x256xf32>
    %594 = arith.mulf %26, %593 : vector<2x256xf32>
    %595 = arith.addf %592, %594 : vector<2x256xf32>
    %c206_i32 = arith.constant 206 : i32
    %596 = tpu.dynamic_rotate %595 by %c206_i32 dim 1 : vector<2x256xf32>, i32 -> vector<2x256xf32>
    %c47_254 = arith.constant 47 : index
    %c0_255 = arith.constant 0 : index
    %597 = vector.load %arg4[%c47_254, %c0_255] : memref<49x256xf32, #tpu.memory_space<vmem>>, vector<1x256xf32>
    %598 = vector.broadcast %597 : vector<1x256xf32> to vector<2x256xf32>
    %599 = arith.mulf %596, %598 : vector<2x256xf32>
    %600 = arith.addf %576, %599 : vector<2x256xf32>
    %c0_256 = arith.constant 0 : index
    %c48 = arith.constant 48 : index
    %601 = memref.load %arg5[%c0_256, %c48] : memref<2x49xf32, #tpu.memory_space<smem>>
    %c1_257 = arith.constant 1 : index
    %c48_258 = arith.constant 48 : index
    %602 = memref.load %arg5[%c1_257, %c48_258] : memref<2x49xf32, #tpu.memory_space<smem>>
    %603 = vector.broadcast %601 : f32 to vector<2x256xf32>
    %604 = arith.mulf %25, %603 : vector<2x256xf32>
    %605 = vector.broadcast %602 : f32 to vector<2x256xf32>
    %606 = arith.mulf %26, %605 : vector<2x256xf32>
    %607 = arith.addf %604, %606 : vector<2x256xf32>
    %c205_i32 = arith.constant 205 : i32
    %608 = tpu.dynamic_rotate %607 by %c205_i32 dim 1 : vector<2x256xf32>, i32 -> vector<2x256xf32>
    %c48_259 = arith.constant 48 : index
    %c0_260 = arith.constant 0 : index
    %609 = vector.load %arg4[%c48_259, %c0_260] : memref<49x256xf32, #tpu.memory_space<vmem>>, vector<1x256xf32>
    %610 = vector.broadcast %609 : vector<1x256xf32> to vector<2x256xf32>
    %611 = arith.mulf %608, %610 : vector<2x256xf32>
    %612 = arith.addf %588, %611 : vector<2x256xf32>
    %613 = arith.addf %612, %600 : vector<2x256xf32>
    %614 = arith.negf %613 : vector<2x256xf32>
    %615 = math.exp %614 : vector<2x256xf32>
    %cst_261 = arith.constant 1.000000e+00 : f32
    %616 = vector.broadcast %cst_261 : f32 to vector<2x256xf32>
    %617 = arith.addf %616, %615 : vector<2x256xf32>
    %618 = arith.divf %616, %617 : vector<2x256xf32>
    %619 = arith.mulf %25, %618 : vector<2x256xf32>
    %620 = arith.mulf %26, %618 : vector<2x256xf32>
    %621 = tpu.concatenate %619, %620 in 1 : vector<2x256xf32>, vector<2x256xf32> -> vector<2x512xf32>
    %622 = vector.shape_cast %621 : vector<2x512xf32> to vector<1x2x512xf32>
    %c0_262 = arith.constant 0 : index
    %c0_263 = arith.constant 0 : index
    %c0_264 = arith.constant 0 : index
    %623 = vector.load %arg6[%c0_262, %c0_263, %c0_264] : memref<1x2x512xf32, #tpu.memory_space<vmem>>, vector<1x2x512xf32>
    tpu.vector_store %arg6[%c0_262, %c0_263, %c0_264], %622 {strides = array<i32>} : memref<1x2x512xf32, #tpu.memory_space<vmem>>, vector<1x2x512xf32>,
    return
  }
  func.func @transform_0(%arg0: i32) -> (i32, i32, i32) {
    %c0_i32 = arith.constant 0 : i32
    %c0_i32_0 = arith.constant 0 : i32
    %c0_i32_1 = arith.constant 0 : i32
    return %arg0, %c0_i32, %c0_i32_0 : i32, i32, i32
  }
  func.func @transform_1(%arg0: i32) -> (i32, i32) {
    %c0_i32 = arith.constant 0 : i32
    %c0_i32_0 = arith.constant 0 : i32
    %c0_i32_1 = arith.constant 0 : i32
    return %c0_i32, %c0_i32_0 : i32, i32
  }
  func.func @transform_2(%arg0: i32) -> (i32, i32) {
    %c0_i32 = arith.constant 0 : i32
    %c0_i32_0 = arith.constant 0 : i32
    %c0_i32_1 = arith.constant 0 : i32
    return %c0_i32, %c0_i32_0 : i32, i32
  }
  func.func @transform_3(%arg0: i32) -> (i32, i32) {
    %c0_i32 = arith.constant 0 : i32
    %c0_i32_0 = arith.constant 0 : i32
    %c0_i32_1 = arith.constant 0 : i32
    return %c0_i32, %c0_i32_0 : i32, i32
  }
  func.func @transform_4(%arg0: i32) -> (i32, i32) {
    %c0_i32 = arith.constant 0 : i32
    %c0_i32_0 = arith.constant 0 : i32
    %c0_i32_1 = arith.constant 0 : i32
    return %c0_i32, %c0_i32_0 : i32, i32
  }
  func.func @transform_5(%arg0: i32) -> (i32, i32, i32) {
    %c0_i32 = arith.constant 0 : i32
    %c0_i32_0 = arith.constant 0 : i32
    %c0_i32_1 = arith.constant 0 : i32
    return %arg0, %c0_i32, %c0_i32_0 : i32, i32, i32
  }
}

</mosaic_0001>

<llo_original>
// kernel: tpu_custom_call.1
$region0: #{tpu_custom_call.1}
  #allocation0 [shape = 'u32[]', space=smem, size = 0x4, offset = 0x4, fixed_abs, tag = 'smem constant byte address 0x4 - core index']
  #allocation1 [shape = 'u32[72,128]{1,0:T(1,128)}', space=vmem, size = 0x9000, scoped, tag = 'internal scratch']
  %s0 = inlined_call_operand.hbm [shape: f32[8,32,256], index: 0, kind: input, shape index: {}]
  %s1 = inlined_call_operand.vmem [shape: f32[32,2], index: 1, kind: input, shape index: {}]
  %s2 = inlined_call_operand.vmem [shape: f32[2,32], index: 2, kind: input, shape index: {}]
  %s3 = inlined_call_operand.hbm [shape: f32[49,256], index: 3, kind: input, shape index: {}]
  %s4 = inlined_call_operand.vmem [shape: f32[2,49], index: 4, kind: input, shape index: {}]
  %s5 = inlined_call_operand.hbm [shape: f32[4,2,512], index: 5, kind: output, shape index: {}]
  %s6 = sld [smem:[#allocation0]]
  $region65: #{tpu_custom_call.1} parent=0
    _
  %s8 = ssub.s32 1, %s6
  %s9 = scalar_select 0, %s8, %s6
  $region1: #{tpu_custom_call.1} parent=0
    #allocation2 [shape = 'u8[131072]{0}', space=vmem, size = 0x20000, scoped, tag = 'input window, operand 0']
    #allocation3 [shape = 's32[2]{0}', space=sflag, size = 0x8, scoped, tag = 'scoped memory for tpu_custom_call.1']
    #allocation4 [shape = 's32[2]{0}', space=sflag, size = 0x8, scoped, tag = 'scoped memory for tpu_custom_call.1']
    #allocation5 [shape = 's32[2]{0}', space=sflag, size = 0x8, scoped, tag = 'scoped memory for tpu_custom_call.1']
    #allocation6 [shape = 'u8[57344]{0}', space=vmem, size = 0xe000, scoped, tag = 'input window, operand 3, single buffered']
    #allocation7 [shape = 's32[1]{0}', space=sflag, size = 0x4, scoped, tag = 'scoped memory for tpu_custom_call.1']
    #allocation8 [shape = 'u8[1024]{0}', space=smem, size = 0x400, scoped, tag = 'input window, operand 4, single buffered']
    #allocation9 [shape = 'u8[8192]{0}', space=vmem, size = 0x2000, scoped, tag = 'output window, operand 0']
    %10 = vsyncpa [#allocation3], 0
    %s11 = scalar_lea.sflag [#allocation3], 1
    %12 = vsyncpa %s11, 0
    %13 = vsyncpa [#allocation7], 0
    %14 = vsyncpa [#allocation5], 0
    %15 = vsyncpa [#allocation4], 0
    %s16 = scalar_lea.sflag [#allocation4], 1
    %17 = vsyncpa %s16, 0
    loop: start=0, step=1, limit=6
    $region2: #{tpu_custom_call.1} parent=1 // loop_pre_header
      _
    $region3: #{tpu_custom_call.1} parent=1 // loop_header
      %s19 = sphi 0, %s23
      %p20 = scmp.ge.s32.totalorder %s19, 6
      %s29 = sphi 0, %s31
      %s32 = sphi 0, %s29
      %s33 = sphi 0, %s32
      %s49 = sphi 0, %s33
      %s53 = sphi 0, %s53
      %s55 = sphi 0, %s53
      %s56 = sphi 0, %s55
      %s70 = sphi 0, %s56
      %s74 = sphi 0, %s74
      %s76 = sphi 0, %s74
      %s77 = sphi 0, %s76
      %s91 = sphi 0, %s77
      %s95 = sphi 0, %s95
      %s97 = sphi 0, %s95
      %s98 = sphi 0, %s97
      %s112 = sphi 0, %s98
      %s116 = sphi 0, %s116
      %s118 = sphi 0, %s116
      %s119 = sphi 0, %s118
      %s133 = sphi 0, %s119
      %s139 = sphi 0, %s141
      %s142 = sphi 0, %s139
      %s143 = sphi 0, %s142
      %s159 = sphi 0, %s143
    $region4: #{tpu_custom_call.1} parent=1 // loop_header_branch
      %22 = sbr.rel (%p20) target = $region8
    $region5: #{tpu_custom_call.1} parent=1 // loop_body
      %s24 = ssub.s32 %s19, 1
      %s25 = ssub.s32 %s19, 2
      %s26 = sadd.s32 %s19, 1
      %s27 = ssub.s32 %s19, %s26
      %p28 = scmp.eq.s32.totalorder %s27, 0
      %s30 = sadd.s32 %s29, 1
      %s31 = scalar_select %p28, %s29, %s30
      %p34 = pneg %p28
      %p35 = scmp.eq.s32.totalorder %s19, 3
      %p36 = por %p34, %p35
      %p37 = scmp.ne.s32.totalorder %s29, %s32
      %p38 = scmp.eq.s32.totalorder %s19, 0
      %p39 = por %p37, %p38
      %p40 = scmp.ne.s32.totalorder %s29, %s32
      %p41 = scmp.eq.s32.totalorder %s24, 3
      %p42 = por %p40, %p41
      %p43 = scmp.ne.s32.totalorder %s32, %s33
      %p44 = scmp.eq.s32.totalorder %s24, 0
      %p45 = por %p43, %p44
      %p46 = scmp.ne.s32.totalorder %s32, %s33
      %p47 = scmp.eq.s32.totalorder %s25, 3
      %p48 = por %p46, %p47
      %p50 = scmp.ne.s32.totalorder %s33, %s49
      %p51 = scmp.eq.s32.totalorder %s25, 0
      %p52 = por %p50, %p51
      %s54 = sadd.s32 %s53, 1
      %p57 = scmp.eq.s32.totalorder %s19, 3
      %p58 = scmp.ne.s32.totalorder %s53, %s55
      %p59 = scmp.eq.s32.totalorder %s19, 0
      %p60 = por %p58, %p59
      %p61 = scmp.ne.s32.totalorder %s53, %s55
      %p62 = scmp.eq.s32.totalorder %s24, 3
      %p63 = por %p61, %p62
      %p64 = scmp.ne.s32.totalorder %s55, %s56
      %p65 = scmp.eq.s32.totalorder %s24, 0
      %p66 = por %p64, %p65
      %p67 = scmp.ne.s32.totalorder %s55, %s56
      %p68 = scmp.eq.s32.totalorder %s25, 3
      %p69 = por %p67, %p68
      %p71 = scmp.ne.s32.totalorder %s56, %s70
      %p72 = scmp.eq.s32.totalorder %s25, 0
      %p73 = por %p71, %p72
      %s75 = sadd.s32 %s74, 1
      %p78 = scmp.eq.s32.totalorder %s19, 3
      %p79 = scmp.ne.s32.totalorder %s74, %s76
      %p80 = scmp.eq.s32.totalorder %s19, 0
      %p81 = por %p79, %p80
      %p82 = scmp.ne.s32.totalorder %s74, %s76
      %p83 = scmp.eq.s32.totalorder %s24, 3
      %p84 = por %p82, %p83
      %p85 = scmp.ne.s32.totalorder %s76, %s77
      %p86 = scmp.eq.s32.totalorder %s24, 0
      %p87 = por %p85, %p86
      %p88 = scmp.ne.s32.totalorder %s76, %s77
      %p89 = scmp.eq.s32.totalorder %s25, 3
      %p90 = por %p88, %p89
      %p92 = scmp.ne.s32.totalorder %s77, %s91
      %p93 = scmp.eq.s32.totalorder %s25, 0
      %p94 = por %p92, %p93
      %s96 = sadd.s32 %s95, 1
      %p99 = scmp.eq.s32.totalorder %s19, 3
      %p100 = scmp.ne.s32.totalorder %s95, %s97
      %p101 = scmp.eq.s32.totalorder %s19, 0
      %p102 = por %p100, %p101
      %p103 = scmp.ne.s32.totalorder %s95, %s97
      %p104 = scmp.eq.s32.totalorder %s24, 3
      %p105 = por %p103, %p104
      %p106 = scmp.ne.s32.totalorder %s97, %s98
      %p107 = scmp.eq.s32.totalorder %s24, 0
      %p108 = por %p106, %p107
      %p109 = scmp.ne.s32.totalorder %s97, %s98
      %p110 = scmp.eq.s32.totalorder %s25, 3
      %p111 = por %p109, %p110
      %p113 = scmp.ne.s32.totalorder %s98, %s112
      %p114 = scmp.eq.s32.totalorder %s25, 0
      %p115 = por %p113, %p114
      %s117 = sadd.s32 %s116, 1
      %p120 = scmp.eq.s32.totalorder %s19, 3
      %p121 = scmp.ne.s32.totalorder %s116, %s118
      %p122 = scmp.eq.s32.totalorder %s19, 0
      %p123 = por %p121, %p122
      %p124 = scmp.ne.s32.totalorder %s116, %s118
      %p125 = scmp.eq.s32.totalorder %s24, 3
      %p126 = por %p124, %p125
      %p127 = scmp.ne.s32.totalorder %s118, %s119
      %p128 = scmp.eq.s32.totalorder %s24, 0
      %p129 = por %p127, %p128
      %p130 = scmp.ne.s32.totalorder %s118, %s119
      %p131 = scmp.eq.s32.totalorder %s25, 3
      %p132 = por %p130, %p131
      %p134 = scmp.ne.s32.totalorder %s119, %s133
      %p135 = scmp.eq.s32.totalorder %s25, 0
      %p136 = por %p134, %p135
      %s137 = ssub.s32 %s19, %s26
      %p138 = scmp.eq.s32.totalorder %s137, 0
      %s140 = sadd.s32 %s139, 1
      %s141 = scalar_select %p138, %s139, %s140
      %p144 = pneg %p138
      %p145 = scmp.eq.s32.totalorder %s19, 3
      %p146 = por %p144, %p145
      %p147 = scmp.ne.s32.totalorder %s139, %s142
      %p148 = scmp.eq.s32.totalorder %s19, 0
      %p149 = por %p147, %p148
      %p150 = scmp.ne.s32.totalorder %s139, %s142
      %p151 = scmp.eq.s32.totalorder %s24, 3
      %p152 = por %p150, %p151
      %p153 = scmp.ne.s32.totalorder %s142, %s143
      %p154 = scmp.eq.s32.totalorder %s24, 0
      %p155 = por %p153, %p154
      %p156 = scmp.ne.s32.totalorder %s142, %s143
      %p157 = scmp.eq.s32.totalorder %s25, 3
      %p158 = por %p156, %p157
      %p160 = scmp.ne.s32.totalorder %s143, %s159
      %p161 = scmp.eq.s32.totalorder %s25, 0
      %p162 = por %p160, %p161
      %p163 = scmp.le.s32.totalorder 1, %s19
      %p164 = scmp.lt.s32.totalorder %s19, 5
      %p165 = pnand %p163, %p164
      %p166 = pneg %p165
      // Predicated region
      $region9: #{tpu_custom_call.1} parent=5 // pred_check
        _
      $region10: #{tpu_custom_call.1} parent=5 // pred_check_branch
        %168 = sbr.rel (%p165) target = $region12
      $region11: #{tpu_custom_call.1} parent=5 // pred_region
        %s169 = ssub.s32 %s19, 1
        // Predicated region
        $region13: #{tpu_custom_call.1} parent=11 // pred_check
          %p170 = pneg %p66
        $region14: #{tpu_custom_call.1} parent=11 // pred_check_branch
          %172 = sbr.rel (%p170) target = $region16
        $region15: #{tpu_custom_call.1} parent=11 // pred_region
          _
        $region16: #{tpu_custom_call.1} parent=11 // pred_fallthru
          _
        // Predicated region
        $region17: #{tpu_custom_call.1} parent=11 // pred_check
          %p173 = pneg %p87
        $region18: #{tpu_custom_call.1} parent=11 // pred_check_branch
          %175 = sbr.rel (%p173) target = $region20
        $region19: #{tpu_custom_call.1} parent=11 // pred_region
          _
        $region20: #{tpu_custom_call.1} parent=11 // pred_fallthru
          _
        // Predicated region
        $region21: #{tpu_custom_call.1} parent=11 // pred_check
          %p176 = pneg %p108
        $region22: #{tpu_custom_call.1} parent=11 // pred_check_branch
          %178 = sbr.rel (%p176) target = $region24
        $region23: #{tpu_custom_call.1} parent=11 // pred_region
          %180 = vsyncadd [#allocation7], 0
          %s181 = sshll.u32 %s3, 4
          %s182 = int_to_ptr.hbm [resolvable:$true] %s181
          %s183 = sshll.u32 [#allocation6], 4
          %s184 = int_to_ptr.vmem [resolvable:$true] %s183
          %189 = dma.hbm_to_vmem [thread:$0]  %s182, 1792, %s184, [#allocation7], 256, 256, 16
        $region24: #{tpu_custom_call.1} parent=11 // pred_fallthru
          _
        // Predicated region
        $region25: #{tpu_custom_call.1} parent=11 // pred_check
          %p190 = pneg %p129
        $region26: #{tpu_custom_call.1} parent=11 // pred_check_branch
          %192 = sbr.rel (%p190) target = $region28
        $region27: #{tpu_custom_call.1} parent=11 // pred_region
          %194 = vsyncadd [#allocation5], 0
          %s196 = sshll.u32 %s4, 4
          %s197 = int_to_ptr.vmem [resolvable:$true] %s196
          %199 = dma.vmem_to_smem %s197, 32, [#allocation8], [#allocation5]
        $region28: #{tpu_custom_call.1} parent=11 // pred_fallthru
          _
      $region12: #{tpu_custom_call.1} parent=5 // pred_fallthru
        _
      %p200 = scmp.lt.s32.totalorder %s19, 4
      // Predicated region
      $region29: #{tpu_custom_call.1} parent=5 // pred_check
        %p201 = pneg %p200
      $region30: #{tpu_custom_call.1} parent=5 // pred_check_branch
        %203 = sbr.rel (%p201) target = $region32
      $region31: #{tpu_custom_call.1} parent=5 // pred_region
        // Predicated region
        $region33: #{tpu_custom_call.1} parent=31 // pred_check
          %p204 = pneg %p39
        $region34: #{tpu_custom_call.1} parent=31 // pred_check_branch
          %206 = sbr.rel (%p204) target = $region36
        $region35: #{tpu_custom_call.1} parent=31 // pred_region
          %s207 = sand.u32 %s29, 1
          %s208 = scalar_lea.sflag [#allocation3], %s207
          %s209 = sand.u32 %s29, 1
          %s210 = smul.addr %s209, 128
          %s211 = scalar_lea.vmem [#allocation2], %s210
          %s212 = smul.u32 2, %s19
          %214 = vsyncadd %s208, 0
          %s215 = smul.addr %s212, 8
          %s216 = smul.addr %s215, 8
          %s217 = scalar_lea.hbm %s0, %s216
          %s218 = sshll.u32 %s217, 4
          %s219 = int_to_ptr.hbm [resolvable:$true] %s218
          %s220 = sshll.u32 %s211, 4
          %s221 = int_to_ptr.vmem [resolvable:$true] %s220
          %226 = dma.hbm_to_vmem [thread:$0]  %s219, 2048, %s221, %s208, 256, 256, 16
        $region36: #{tpu_custom_call.1} parent=31 // pred_fallthru
          _
      $region32: #{tpu_custom_call.1} parent=5 // pred_fallthru
        _
      %p227 = scmp.le.s32.totalorder 1, %s19
      %p228 = scmp.lt.s32.totalorder %s19, 5
      %p229 = pnand %p227, %p228
      %p230 = pneg %p229
      // Predicated region
      $region37: #{tpu_custom_call.1} parent=5 // pred_check
        _
      $region38: #{tpu_custom_call.1} parent=5 // pred_check_branch
        %232 = sbr.rel (%p229) target = $region40
      $region39: #{tpu_custom_call.1} parent=5 // pred_region
        %s233 = ssub.s32 %s19, 1
        %s234 = sand.u32 %s32, 1
        %s235 = scalar_lea.sflag [#allocation3], %s234
        %s236 = sand.u32 %s32, 1
        %s237 = smul.addr %s236, 128
        %s238 = scalar_lea.vmem [#allocation2], %s237
        // Predicated region
        $region41: #{tpu_custom_call.1} parent=39 // pred_check
          %p239 = pneg %p45
        $region42: #{tpu_custom_call.1} parent=39 // pred_check_branch
          %241 = sbr.rel (%p239) target = $region44
        $region43: #{tpu_custom_call.1} parent=39 // pred_region
          %243 = dma.done %s235, 2048
        $region44: #{tpu_custom_call.1} parent=39 // pred_fallthru
          _
        // Predicated region
        $region45: #{tpu_custom_call.1} parent=39 // pred_check
          %p244 = pneg %p108
        $region46: #{tpu_custom_call.1} parent=39 // pred_check_branch
          %246 = sbr.rel (%p244) target = $region48
        $region47: #{tpu_custom_call.1} parent=39 // pred_region
          %248 = dma.done [#allocation7], 1792
        $region48: #{tpu_custom_call.1} parent=39 // pred_fallthru
          _
        // Predicated region
        $region49: #{tpu_custom_call.1} parent=39 // pred_check
          %p249 = pneg %p129
        $region50: #{tpu_custom_call.1} parent=39 // pred_check_branch
          %251 = sbr.rel (%p249) target = $region52
        $region51: #{tpu_custom_call.1} parent=39 // pred_region
          %253 = dma.done [#allocation5], 32
        $region52: #{tpu_custom_call.1} parent=39 // pred_fallthru
          _
        %254 = sfence
        %s255 = sand.u32 %s32, 1
        %s256 = scalar_lea.sflag [#allocation3], %s255
        %s257 = sand.u32 %s32, 1
        %s258 = smul.addr %s257, 128
        %s259 = scalar_lea.vmem [#allocation2], %s258
        %p260 = pneg %p45
        %p261 = pneg %p42
        %p262 = pneg %p66
        %p263 = pneg %p63
        %p264 = pneg %p87
        %p265 = pneg %p84
        %p266 = pneg %p108
        %p267 = pneg %p105
        %p268 = pneg %p129
        %p269 = pneg %p126
        %p270 = pneg %p155
        %p271 = pneg %p152
        %s272 = sand.u32 %s142, 1
        %s273 = scalar_lea.sflag [#allocation4], %s272
        %s274 = sand.u32 %s142, 1
        %s275 = smul.addr %s274, 8
        %s276 = scalar_lea.vmem [#allocation9], %s275
        %s277 = smul.u32 2, %s24
        %v278 = vld [vmem:[%s238] sm:$0xff]
        %v279 = vld [vmem:[%s238 + $0x8] sm:$0xff]
        %v280 = vld [vmem:[%s238 + $0x10] sm:$0xff]
        %v281 = vld [vmem:[%s238 + $0x18] sm:$0xff]
        %v282 = vld [vmem:[%s238 + $0x20] sm:$0xff]
        %v283 = vld [vmem:[%s238 + $0x28] sm:$0xff]
        %v284 = vld [vmem:[%s238 + $0x30] sm:$0xff]
        %v285 = vld [vmem:[%s238 + $0x38] sm:$0xff]
        %v286 = vld [vmem:[%s238 + $0x40] sm:$0xff]
        %v287 = vld [vmem:[%s238 + $0x48] sm:$0xff]
        %v288 = vld [vmem:[%s238 + $0x50] sm:$0xff]
        %v289 = vld [vmem:[%s238 + $0x58] sm:$0xff]
        %v290 = vld [vmem:[%s238 + $0x60] sm:$0xff]
        %v291 = vld [vmem:[%s238 + $0x68] sm:$0xff]
        %v292 = vld [vmem:[%s238 + $0x70] sm:$0xff]
        %v293 = vld [vmem:[%s238 + $0x78] sm:$0xff]
        %v294 = vadd.f32 %v278, %v279
        %295 = vadd.xlane.f32.xlu0 %v294
        %v296 = vpop.xlane.xlu0 %295
        %v297 = vadd.f32 %v280, %v281
        %298 = vadd.xlane.f32.xlu0 %v297
        %v299 = vpop.xlane.xlu0 %298
        %v300 = vadd.f32 %v282, %v283
        %301 = vadd.xlane.f32.xlu0 %v300
        %v302 = vpop.xlane.xlu0 %301
        %v303 = vadd.f32 %v284, %v285
        %304 = vadd.xlane.f32.xlu0 %v303
        %v305 = vpop.xlane.xlu0 %304
        %v306 = vadd.f32 %v286, %v287
        %307 = vadd.xlane.f32.xlu0 %v306
        %v308 = vpop.xlane.xlu0 %307
        %v309 = vadd.f32 %v288, %v289
        %310 = vadd.xlane.f32.xlu0 %v309
        %v311 = vpop.xlane.xlu0 %310
        %v312 = vadd.f32 %v290, %v291
        %313 = vadd.xlane.f32.xlu0 %v312
        %v314 = vpop.xlane.xlu0 %313
        %v315 = vadd.f32 %v292, %v293
        %316 = vadd.xlane.f32.xlu0 %v315
        %v317 = vpop.xlane.xlu0 %316
        %v318 = vmul.f32 %v296, 0.00390625
        %v319 = vmul.f32 %v299, 0.00390625
        %v320 = vmul.f32 %v302, 0.00390625
        %v321 = vmul.f32 %v305, 0.00390625
        %v322 = vmul.f32 %v308, 0.00390625
        %v323 = vmul.f32 %v311, 0.00390625
        %v324 = vmul.f32 %v314, 0.00390625
        %v325 = vmul.f32 %v317, 0.00390625
        %v326 = vmax.f32 %v278, %v279
        %327 = vmax.xlane.f32.xlu0 %v326
        %v328 = vpop.xlane.xlu0 %327
        %v329 = vmax.f32 %v280, %v281
        %330 = vmax.xlane.f32.xlu0 %v329
        %v331 = vpop.xlane.xlu0 %330
        %v332 = vmax.f32 %v282, %v283
        %333 = vmax.xlane.f32.xlu0 %v332
        %v334 = vpop.xlane.xlu0 %333
        %v335 = vmax.f32 %v284, %v285
        %336 = vmax.xlane.f32.xlu0 %v335
        %v337 = vpop.xlane.xlu0 %336
        %v338 = vmax.f32 %v286, %v287
        %339 = vmax.xlane.f32.xlu0 %v338
        %v340 = vpop.xlane.xlu0 %339
        %v341 = vmax.f32 %v288, %v289
        %342 = vmax.xlane.f32.xlu0 %v341
        %v343 = vpop.xlane.xlu0 %342
        %v344 = vmax.f32 %v290, %v291
        %345 = vmax.xlane.f32.xlu0 %v344
        %v346 = vpop.xlane.xlu0 %345
        %v347 = vmax.f32 %v292, %v293
        %348 = vmax.xlane.f32.xlu0 %v347
        %v349 = vpop.xlane.xlu0 %348
        %v358 = vlaneseq
        %v359 = vand.u32 %v358, 127
        %v360 = vperm.slane %v318, %v359
        %v361 = vadd.s32 %v359, 4294967288
        %v362 = vperm.slane %v319, %v361
        %vm363 = vcmask 130112
        %v364 = vsel %vm363, %v362, %v360
        %v365 = vadd.s32 %v359, 4294967280
        %v366 = vperm.slane %v320, %v365
        %vm367 = vcmask 195712
        %v368 = vsel %vm367, %v366, %v364
        %v369 = vadd.s32 %v359, 4294967272
        %v370 = vperm.slane %v321, %v369
        %vm371 = vcmask 261312
        %v372 = vsel %vm371, %v370, %v368
        %v373 = vperm.slane %v322, %v359
        %v374 = vperm.slane %v323, %v361
        %v375 = vsel %vm363, %v374, %v373
        %v376 = vperm.slane %v324, %v365
        %v377 = vsel %vm367, %v376, %v375
        %v378 = vperm.slane %v325, %v369
        %v379 = vsel %vm371, %v378, %v377
        %vm380 = vcmask 1041409
        %v381 = vsel %vm380, %v379, %v372
        %v391 = vperm.slane %v328, %v359
        %v392 = vperm.slane %v331, %v361
        %v393 = vsel %vm363, %v392, %v391
        %v394 = vperm.slane %v334, %v365
        %v395 = vsel %vm367, %v394, %v393
        %v396 = vperm.slane %v337, %v369
        %v397 = vsel %vm371, %v396, %v395
        %v398 = vperm.slane %v340, %v359
        %v399 = vperm.slane %v343, %v361
        %v400 = vsel %vm363, %v399, %v398
        %v401 = vperm.slane %v346, %v365
        %v402 = vsel %vm367, %v401, %v400
        %v403 = vperm.slane %v349, %v369
        %v404 = vsel %vm371, %v403, %v402
        %vm405 = vcmask 1043459
        %v406 = vsel %vm405, %v404, %v397
        %vm408 = vcmask 1041408
        %v409 = vsel %vm408, %v381, %v406
        %v410 = vld [vmem:[%s1] sm:$0xff]
        %v411 = vld [vmem:[%s1 + $0x8] sm:$0xff]
        %v412 = vld [vmem:[%s1 + $0x10] sm:$0xff]
        %v413 = vld [vmem:[%s1 + $0x18] sm:$0xff]
        %vm414 = vcmask 261120
        %v416 = vsel %vm414, %v409, 0
        %418 = vmatpush.msra.mxu0 0.0
        %419 = vmatpush.msra.mxu0 0.0
        %420 = vmatpush.msra.mxu0 0.0
        %421 = vmatpush.msra.mxu0 0.0
        %422 = vmatpush.msra.mxu0 0.0
        %423 = vmatpush.msra.mxu0 0.0
        %424 = vmatpush.msra.mxu0 0.0
        %425 = vmatpush.msra.mxu0 0.0
        %426 = vmatpush.msra.mxu0 0.0
        %427 = vmatpush.msra.mxu0 0.0
        %428 = vmatpush.msra.mxu0 0.0
        %429 = vmatpush.msra.mxu0 0.0
        %430 = vmatpush.msra.mxu0 %v413
        %431 = vmatpush.msra.mxu0 %v412
        %432 = vmatpush.msra.mxu0 %v411
        %433 = vmatpush.msra.mxu0 %v410
        %434 = vmatmul.f32.gmra.mxu0 %v416
        %v435 = vpop.f32.mrf.mxu0
        %v436 = vadd.f32 0.0, %v435
        %437 = vdwg.mxu0
        %v438 = vmax.f32 %v436, 0.0
        %v439 = vld [vmem:[%s2] sm:$0x3]
        %vm440 = vcmask 15360
        %v442 = vsel %vm440, %v438, 0
        %v445 = vsel %vm408, %v439, 0
        %447 = vmatpush.msra.mxu0 0.0
        %448 = vmatpush.msra.mxu0 0.0
        %449 = vmatpush.msra.mxu0 0.0
        %450 = vmatpush.msra.mxu0 0.0
        %451 = vmatpush.msra.mxu0 0.0
        %452 = vmatpush.msra.mxu0 0.0
        %453 = vmatpush.msra.mxu0 0.0
        %454 = vmatpush.msra.mxu0 0.0
        %455 = vmatpush.msra.mxu0 0.0
        %456 = vmatpush.msra.mxu0 0.0
        %457 = vmatpush.msra.mxu0 0.0
        %458 = vmatpush.msra.mxu0 0.0
        %459 = vmatpush.msra.mxu0 0.0
        %460 = vmatpush.msra.mxu0 0.0
        %461 = vmatpush.msra.mxu0 0.0
        %462 = vmatpush.msra.mxu0 %v445
        %463 = vmatmul.f32.gmra.mxu0 %v442
        %v464 = vpop.f32.mrf.mxu0
        %v465 = vadd.f32 0.0, %v464
        %466 = vdwg.mxu0
        %v468 = vrot.slane %v465, 2
        %v470 = vadd.f32 %v465, %v468
        %v471 = vxor.u32 %v470, 2147483648
        %v472 = vmul.f32 %v471, 1.442695
        %v473 = vpow.pop %v472
        %v474 = vadd.f32 %v473, 1.0
        %v475 = vrcp.pop %v474
        %v476 = vmul.f32 %v474, %v475
        %v477 = vsub.f32 1.0, %v476
        %v478 = vmul.f32 %v475, %v477
        %v479 = vadd.f32 %v475, %v478
        %vm480 = vweird.f32 %v474
        %vm481 = vweird.f32 %v475
        %vm482 = vmor %vm480, %vm481
        %v483 = vsel %vm482, %v475, %v479
        %v484 = vand.u32 2147483647, %v474
        %vm485 = vcmp.eq.f32.partialorder %v484, 8.507059e+37
        %v486 = vand.u32 %v474, 2147483648
        %v487 = vor.u32 1.1754944e-38, %v486
        %v488 = vsel %vm485, %v487, %v483
        %v489 = vmul.f32 1.0, %v488
        %v490 = vperm.slane %v489, 0
        %v491 = vlaneseq
        %v492 = vshrl.u32 %v491, 7
        %494 = vset.pattern.permute.xlu0 %v492
        %495 = vperm.xlu0 %494, %v490
        %v496 = vpop.permute.xlu0 %495
        %v497 = vlaneseq
        %v498 = vshrl.u32 %v497, 7
        %v499 = vadd.s32 %v498, 8
        %500 = vset.pattern.permute.xlu0 %v499
        %501 = vperm.xlu0 %500, %v490
        %v502 = vpop.permute.xlu0 %501
        %v503 = vlaneseq
        %v504 = vshrl.u32 %v503, 7
        %v505 = vadd.s32 %v504, 16
        %506 = vset.pattern.permute.xlu0 %v505
        %507 = vperm.xlu0 %506, %v490
        %v508 = vpop.permute.xlu0 %507
        %v509 = vlaneseq
        %v510 = vshrl.u32 %v509, 7
        %v511 = vadd.s32 %v510, 24
        %512 = vset.pattern.permute.xlu0 %v511
        %513 = vperm.xlu0 %512, %v490
        %v514 = vpop.permute.xlu0 %513
        %v515 = vperm.slane %v489, 1
        %v516 = vlaneseq
        %v517 = vshrl.u32 %v516, 7
        %519 = vset.pattern.permute.xlu0 %v517
        %520 = vperm.xlu0 %519, %v515
        %v521 = vpop.permute.xlu0 %520
        %v522 = vlaneseq
        %v523 = vshrl.u32 %v522, 7
        %v524 = vadd.s32 %v523, 8
        %525 = vset.pattern.permute.xlu0 %v524
        %526 = vperm.xlu0 %525, %v515
        %v527 = vpop.permute.xlu0 %526
        %v528 = vlaneseq
        %v529 = vshrl.u32 %v528, 7
        %v530 = vadd.s32 %v529, 16
        %531 = vset.pattern.permute.xlu0 %v530
        %532 = vperm.xlu0 %531, %v515
        %v533 = vpop.permute.xlu0 %532
        %v534 = vlaneseq
        %v535 = vshrl.u32 %v534, 7
        %v536 = vadd.s32 %v535, 24
        %537 = vset.pattern.permute.xlu0 %v536
        %538 = vperm.xlu0 %537, %v515
        %v539 = vpop.permute.xlu0 %538
        %v540 = vmul.f32 %v278, %v496
        %v541 = vmul.f32 %v279, %v496
        %v542 = vmul.f32 %v280, %v502
        %v543 = vmul.f32 %v281, %v502
        %v544 = vmul.f32 %v282, %v508
        %v545 = vmul.f32 %v283, %v508
        %v546 = vmul.f32 %v284, %v514
        %v547 = vmul.f32 %v285, %v514
        %v548 = vmul.f32 %v286, %v521
        %v549 = vmul.f32 %v287, %v521
        %v550 = vmul.f32 %v288, %v527
        %v551 = vmul.f32 %v289, %v527
        %v552 = vmul.f32 %v290, %v533
        %v553 = vmul.f32 %v291, %v533
        %v554 = vmul.f32 %v292, %v539
        %v555 = vmul.f32 %v293, %v539
        %v556 = vadd.f32 %v540, %v542
        %v557 = vadd.f32 %v556, %v544
        %v558 = vadd.f32 %v557, %v546
        %v559 = vrot.slane %v558, 4
        %v560 = vadd.f32 %v558, %v559
        %v561 = vrot.slane %v560, 2
        %v562 = vadd.f32 %v560, %v561
        %v563 = vrot.slane %v562, 1
        %v564 = vadd.f32 %v562, %v563
        %v565 = vadd.f32 %v541, %v543
        %v566 = vadd.f32 %v565, %v545
        %v567 = vadd.f32 %v566, %v547
        %v568 = vrot.slane %v567, 4
        %v569 = vadd.f32 %v567, %v568
        %v570 = vrot.slane %v569, 2
        %v571 = vadd.f32 %v569, %v570
        %v572 = vrot.slane %v571, 1
        %v573 = vadd.f32 %v571, %v572
        %v574 = vadd.f32 %v548, %v550
        %v575 = vadd.f32 %v574, %v552
        %v576 = vadd.f32 %v575, %v554
        %v577 = vrot.slane %v576, 4
        %v578 = vadd.f32 %v576, %v577
        %v579 = vrot.slane %v578, 2
        %v580 = vadd.f32 %v578, %v579
        %v581 = vrot.slane %v580, 1
        %v582 = vadd.f32 %v580, %v581
        %v583 = vadd.f32 %v549, %v551
        %v584 = vadd.f32 %v583, %v553
        %v585 = vadd.f32 %v584, %v555
        %v586 = vrot.slane %v585, 4
        %v587 = vadd.f32 %v585, %v586
        %v588 = vrot.slane %v587, 2
        %v589 = vadd.f32 %v587, %v588
        %v590 = vrot.slane %v589, 1
        %v591 = vadd.f32 %v589, %v590
        %v592 = vmul.f32 %v564, 0.03125
        %v593 = vmul.f32 %v573, 0.03125
        %v594 = vmul.f32 %v582, 0.03125
        %v595 = vmul.f32 %v591, 0.03125
        %v596 = vmax.f32 %v540, %v542
        %v597 = vmax.f32 %v596, %v544
        %v598 = vmax.f32 %v597, %v546
        %v599 = vrot.slane %v598, 4
        %v600 = vmax.f32 %v598, %v599
        %v601 = vrot.slane %v600, 2
        %v602 = vmax.f32 %v600, %v601
        %v603 = vrot.slane %v602, 1
        %v604 = vmax.f32 %v602, %v603
        %v605 = vmax.f32 %v541, %v543
        %v606 = vmax.f32 %v605, %v545
        %v607 = vmax.f32 %v606, %v547
        %v608 = vrot.slane %v607, 4
        %v609 = vmax.f32 %v607, %v608
        %v610 = vrot.slane %v609, 2
        %v611 = vmax.f32 %v609, %v610
        %v612 = vrot.slane %v611, 1
        %v613 = vmax.f32 %v611, %v612
        %v614 = vmax.f32 %v548, %v550
        %v615 = vmax.f32 %v614, %v552
        %v616 = vmax.f32 %v615, %v554
        %v617 = vrot.slane %v616, 4
        %v618 = vmax.f32 %v616, %v617
        %v619 = vrot.slane %v618, 2
        %v620 = vmax.f32 %v618, %v619
        %v621 = vrot.slane %v620, 1
        %v622 = vmax.f32 %v620, %v621
        %v623 = vmax.f32 %v549, %v551
        %v624 = vmax.f32 %v623, %v553
        %v625 = vmax.f32 %v624, %v555
        %v626 = vrot.slane %v625, 4
        %v627 = vmax.f32 %v625, %v626
        %v628 = vrot.slane %v627, 2
        %v629 = vmax.f32 %v627, %v628
        %v630 = vrot.slane %v629, 1
        %v631 = vmax.f32 %v629, %v630
        %s632 = sld [smem:[#allocation8]]
        %s633 = sld [smem:[#allocation8 + $0x80]]
        %v634 = vstv %s632
        %v635 = vmul.f32 %v592, %v634
        %v636 = vmul.f32 %v593, %v634
        %v637 = vmul.f32 %v594, %v634
        %v638 = vmul.f32 %v595, %v634
        %v639 = vstv %s633
        %v640 = vmul.f32 %v604, %v639
        %v641 = vmul.f32 %v613, %v639
        %v642 = vmul.f32 %v622, %v639
        %v643 = vmul.f32 %v631, %v639
        %v644 = vadd.f32 %v635, %v640
        %v645 = vadd.f32 %v636, %v641
        %v646 = vadd.f32 %v637, %v642
        %v647 = vadd.f32 %v638, %v643
        %v652 = vsel %vm380, %v646, %v644
        %v653 = vsel %vm380, %v647, %v645
        %656 = vrot.lane.b32.xlu0 %v652, 51
        %v657 = vpop.permute.xlu0 %656
        %658 = vrot.lane.b32.xlu0 %v653, 51
        %v659 = vpop.permute.xlu0 %658
        %vm660 = vcmp.lt.s32.totalorder %v359, 51
        %v661 = vsel %vm660, %v657, %v659
        %v662 = vsel %vm660, %v659, %v657
        %v663 = vld [vmem:[#allocation6] ss:$8 sm:$0x3]
        %v665 = vperm.slane %v663, 0
        %v666 = vperm.slane %v663, 1
        %v669 = vmul.f32 %v662, %v665
        %v670 = vmul.f32 %v661, %v666
        %v671 = vadd.f32 %v669, 0.0
        %v672 = vadd.f32 %v670, 0.0
        %s673 = sld [smem:[#allocation8 + $0x1]]
        %s674 = sld [smem:[#allocation8 + $0x81]]
        %v675 = vstv %s673
        %v676 = vmul.f32 %v592, %v675
        %v677 = vmul.f32 %v593, %v675
        %v678 = vmul.f32 %v594, %v675
        %v679 = vmul.f32 %v595, %v675
        %v680 = vstv %s674
        %v681 = vmul.f32 %v604, %v680
        %v682 = vmul.f32 %v613, %v680
        %v683 = vmul.f32 %v622, %v680
        %v684 = vmul.f32 %v631, %v680
        %v685 = vadd.f32 %v676, %v681
        %v686 = vadd.f32 %v677, %v682
        %v687 = vadd.f32 %v678, %v683
        %v688 = vadd.f32 %v679, %v684
        %v693 = vsel %vm380, %v687, %v685
        %v694 = vsel %vm380, %v688, %v686
        %697 = vrot.lane.b32.xlu0 %v693, 50
        %v698 = vpop.permute.xlu0 %697
        %699 = vrot.lane.b32.xlu0 %v694, 50
        %v700 = vpop.permute.xlu0 %699
        %vm701 = vcmp.lt.s32.totalorder %v359, 50
        %v702 = vsel %vm701, %v698, %v700
        %v703 = vsel %vm701, %v700, %v698
        %s704 = scalar_lea.vmem [#allocation6], 1
        %v705 = vld [vmem:[%s704] ss:$8 sm:$0x3]
        %v707 = vperm.slane %v705, 0
        %v708 = vperm.slane %v705, 1
        %v711 = vmul.f32 %v703, %v707
        %v712 = vmul.f32 %v702, %v708
        %v713 = vadd.f32 %v711, 0.0
        %v714 = vadd.f32 %v712, 0.0
        %s715 = sld [smem:[#allocation8 + $0x2]]
        %s716 = sld [smem:[#allocation8 + $0x82]]
        %v717 = vstv %s715
        %v718 = vmul.f32 %v592, %v717
        %v719 = vmul.f32 %v593, %v717
        %v720 = vmul.f32 %v594, %v717
        %v721 = vmul.f32 %v595, %v717
        %v722 = vstv %s716
        %v723 = vmul.f32 %v604, %v722
        %v724 = vmul.f32 %v613, %v722
        %v725 = vmul.f32 %v622, %v722
        %v726 = vmul.f32 %v631, %v722
        %v727 = vadd.f32 %v718, %v723
        %v728 = vadd.f32 %v719, %v724
        %v729 = vadd.f32 %v720, %v725
        %v730 = vadd.f32 %v721, %v726
        %v735 = vsel %vm380, %v729, %v727
        %v736 = vsel %vm380, %v730, %v728
        %739 = vrot.lane.b32.xlu0 %v735, 49
        %v740 = vpop.permute.xlu0 %739
        %741 = vrot.lane.b32.xlu0 %v736, 49
        %v742 = vpop.permute.xlu0 %741
        %vm743 = vcmp.lt.s32.totalorder %v359, 49
        %v744 = vsel %vm743, %v740, %v742
        %v745 = vsel %vm743, %v742, %v740
        %s746 = scalar_lea.vmem [#allocation6], 2
        %v747 = vld [vmem:[%s746] ss:$8 sm:$0x3]
        %v749 = vperm.slane %v747, 0
        %v750 = vperm.slane %v747, 1
        %v753 = vmul.f32 %v745, %v749
        %v754 = vmul.f32 %v744, %v750
        %v755 = vadd.f32 %v671, %v753
        %v756 = vadd.f32 %v672, %v754
        %s757 = sld [smem:[#allocation8 + $0x3]]
        %s758 = sld [smem:[#allocation8 + $0x83]]
        %v759 = vstv %s757
        %v760 = vmul.f32 %v592, %v759
        %v761 = vmul.f32 %v593, %v759
        %v762 = vmul.f32 %v594, %v759
        %v763 = vmul.f32 %v595, %v759
        %v764 = vstv %s758
        %v765 = vmul.f32 %v604, %v764
        %v766 = vmul.f32 %v613, %v764
        %v767 = vmul.f32 %v622, %v764
        %v768 = vmul.f32 %v631, %v764
        %v769 = vadd.f32 %v760, %v765
        %v770 = vadd.f32 %v761, %v766
        %v771 = vadd.f32 %v762, %v767
        %v772 = vadd.f32 %v763, %v768
        %v777 = vsel %vm380, %v771, %v769
        %v778 = vsel %vm380, %v772, %v770
        %781 = vrot.lane.b32.xlu0 %v777, 48
        %v782 = vpop.permute.xlu0 %781
        %783 = vrot.lane.b32.xlu0 %v778, 48
        %v784 = vpop.permute.xlu0 %783
        %vm785 = vcmp.lt.s32.totalorder %v359, 48
        %v786 = vsel %vm785, %v782, %v784
        %v787 = vsel %vm785, %v784, %v782
        %s788 = scalar_lea.vmem [#allocation6], 3
        %v789 = vld [vmem:[%s788] ss:$8 sm:$0x3]
        %v791 = vperm.slane %v789, 0
        %v792 = vperm.slane %v789, 1
        %v795 = vmul.f32 %v787, %v791
        %v796 = vmul.f32 %v786, %v792
        %v797 = vadd.f32 %v713, %v795
        %v798 = vadd.f32 %v714, %v796
        %s799 = sld [smem:[#allocation8 + $0x4]]
        %s800 = sld [smem:[#allocation8 + $0x84]]
        %v801 = vstv %s799
        %v802 = vmul.f32 %v592, %v801
        %v803 = vmul.f32 %v593, %v801
        %v804 = vmul.f32 %v594, %v801
        %v805 = vmul.f32 %v595, %v801
        %v806 = vstv %s800
        %v807 = vmul.f32 %v604, %v806
        %v808 = vmul.f32 %v613, %v806
        %v809 = vmul.f32 %v622, %v806
        %v810 = vmul.f32 %v631, %v806
        %v811 = vadd.f32 %v802, %v807
        %v812 = vadd.f32 %v803, %v808
        %v813 = vadd.f32 %v804, %v809
        %v814 = vadd.f32 %v805, %v810
        %v819 = vsel %vm380, %v813, %v811
        %v820 = vsel %vm380, %v814, %v812
        %823 = vrot.lane.b32.xlu0 %v819, 47
        %v824 = vpop.permute.xlu0 %823
        %825 = vrot.lane.b32.xlu0 %v820, 47
        %v826 = vpop.permute.xlu0 %825
        %vm827 = vcmp.lt.s32.totalorder %v359, 47
        %v828 = vsel %vm827, %v824, %v826
        %v829 = vsel %vm827, %v826, %v824
        %s830 = scalar_lea.vmem [#allocation6], 4
        %v831 = vld [vmem:[%s830] ss:$8 sm:$0x3]
        %v833 = vperm.slane %v831, 0
        %v834 = vperm.slane %v831, 1
        %v837 = vmul.f32 %v829, %v833
        %v838 = vmul.f32 %v828, %v834
        %v839 = vadd.f32 %v755, %v837
        %v840 = vadd.f32 %v756, %v838
        %s841 = sld [smem:[#allocation8 + $0x5]]
        %s842 = sld [smem:[#allocation8 + $0x85]]
        %v843 = vstv %s841
        %v844 = vmul.f32 %v592, %v843
        %v845 = vmul.f32 %v593, %v843
        %v846 = vmul.f32 %v594, %v843
        %v847 = vmul.f32 %v595, %v843
        %v848 = vstv %s842
        %v849 = vmul.f32 %v604, %v848
        %v850 = vmul.f32 %v613, %v848
        %v851 = vmul.f32 %v622, %v848
        %v852 = vmul.f32 %v631, %v848
        %v853 = vadd.f32 %v844, %v849
        %v854 = vadd.f32 %v845, %v850
        %v855 = vadd.f32 %v846, %v851
        %v856 = vadd.f32 %v847, %v852
        %v861 = vsel %vm380, %v855, %v853
        %v862 = vsel %vm380, %v856, %v854
        %865 = vrot.lane.b32.xlu0 %v861, 46
        %v866 = vpop.permute.xlu0 %865
        %867 = vrot.lane.b32.xlu0 %v862, 46
        %v868 = vpop.permute.xlu0 %867
        %vm869 = vcmp.lt.s32.totalorder %v359, 46
        %v870 = vsel %vm869, %v866, %v868
        %v871 = vsel %vm869, %v868, %v866
        %s872 = scalar_lea.vmem [#allocation6], 5
        %v873 = vld [vmem:[%s872] ss:$8 sm:$0x3]
        %v875 = vperm.slane %v873, 0
        %v876 = vperm.slane %v873, 1
        %v879 = vmul.f32 %v871, %v875
        %v880 = vmul.f32 %v870, %v876
        %v881 = vadd.f32 %v797, %v879
        %v882 = vadd.f32 %v798, %v880
        %s883 = sld [smem:[#allocation8 + $0x6]]
        %s884 = sld [smem:[#allocation8 + $0x86]]
        %v885 = vstv %s883
        %v886 = vmul.f32 %v592, %v885
        %v887 = vmul.f32 %v593, %v885
        %v888 = vmul.f32 %v594, %v885
        %v889 = vmul.f32 %v595, %v885
        %v890 = vstv %s884
        %v891 = vmul.f32 %v604, %v890
        %v892 = vmul.f32 %v613, %v890
        %v893 = vmul.f32 %v622, %v890
        %v894 = vmul.f32 %v631, %v890
        %v895 = vadd.f32 %v886, %v891
        %v896 = vadd.f32 %v887, %v892
        %v897 = vadd.f32 %v888, %v893
        %v898 = vadd.f32 %v889, %v894
        %v903 = vsel %vm380, %v897, %v895
        %v904 = vsel %vm380, %v898, %v896
        %907 = vrot.lane.b32.xlu0 %v903, 45
        %v908 = vpop.permute.xlu0 %907
        %909 = vrot.lane.b32.xlu0 %v904, 45
        %v910 = vpop.permute.xlu0 %909
        %vm911 = vcmp.lt.s32.totalorder %v359, 45
        %v912 = vsel %vm911, %v908, %v910
        %v913 = vsel %vm911, %v910, %v908
        %s914 = scalar_lea.vmem [#allocation6], 6
        %v915 = vld [vmem:[%s914] ss:$8 sm:$0x3]
        %v917 = vperm.slane %v915, 0
        %v918 = vperm.slane %v915, 1
        %v921 = vmul.f32 %v913, %v917
        %v922 = vmul.f32 %v912, %v918
        %v923 = vadd.f32 %v839, %v921
        %v924 = vadd.f32 %v840, %v922
        %s925 = sld [smem:[#allocation8 + $0x7]]
        %s926 = sld [smem:[#allocation8 + $0x87]]
        %v927 = vstv %s925
        %v928 = vmul.f32 %v592, %v927
        %v929 = vmul.f32 %v593, %v927
        %v930 = vmul.f32 %v594, %v927
        %v931 = vmul.f32 %v595, %v927
        %v932 = vstv %s926
        %v933 = vmul.f32 %v604, %v932
        %v934 = vmul.f32 %v613, %v932
        %v935 = vmul.f32 %v622, %v932
        %v936 = vmul.f32 %v631, %v932
        %v937 = vadd.f32 %v928, %v933
        %v938 = vadd.f32 %v929, %v934
        %v939 = vadd.f32 %v930, %v935
        %v940 = vadd.f32 %v931, %v936
        %v945 = vsel %vm380, %v939, %v937
        %v946 = vsel %vm380, %v940, %v938
        %949 = vrot.lane.b32.xlu0 %v945, 35
        %v950 = vpop.permute.xlu0 %949
        %951 = vrot.lane.b32.xlu0 %v946, 35
        %v952 = vpop.permute.xlu0 %951
        %vm953 = vcmp.lt.s32.totalorder %v359, 35
        %v954 = vsel %vm953, %v950, %v952
        %v955 = vsel %vm953, %v952, %v950
        %s956 = scalar_lea.vmem [#allocation6], 7
        %v957 = vld [vmem:[%s956] ss:$8 sm:$0x3]
        %v959 = vperm.slane %v957, 0
        %v960 = vperm.slane %v957, 1
        %v963 = vmul.f32 %v955, %v959
        %v964 = vmul.f32 %v954, %v960
        %v965 = vadd.f32 %v881, %v963
        %v966 = vadd.f32 %v882, %v964
        %s967 = sld [smem:[#allocation8 + $0x8]]
        %s968 = sld [smem:[#allocation8 + $0x88]]
        %v969 = vstv %s967
        %v970 = vmul.f32 %v592, %v969
        %v971 = vmul.f32 %v593, %v969
        %v972 = vmul.f32 %v594, %v969
        %v973 = vmul.f32 %v595, %v969
        %v974 = vstv %s968
        %v975 = vmul.f32 %v604, %v974
        %v976 = vmul.f32 %v613, %v974
        %v977 = vmul.f32 %v622, %v974
        %v978 = vmul.f32 %v631, %v974
        %v979 = vadd.f32 %v970, %v975
        %v980 = vadd.f32 %v971, %v976
        %v981 = vadd.f32 %v972, %v977
        %v982 = vadd.f32 %v973, %v978
        %v987 = vsel %vm380, %v981, %v979
        %v988 = vsel %vm380, %v982, %v980
        %991 = vrot.lane.b32.xlu0 %v987, 34
        %v992 = vpop.permute.xlu0 %991
        %993 = vrot.lane.b32.xlu0 %v988, 34
        %v994 = vpop.permute.xlu0 %993
        %vm995 = vcmp.lt.s32.totalorder %v359, 34
        %v996 = vsel %vm995, %v992, %v994
        %v997 = vsel %vm995, %v994, %v992
        %s998 = scalar_lea.vmem [#allocation6], 16
        %v999 = vld [vmem:[%s998] ss:$8 sm:$0x3]
        %v1001 = vperm.slane %v999, 0
        %v1002 = vperm.slane %v999, 1
        %v1005 = vmul.f32 %v997, %v1001
        %v1006 = vmul.f32 %v996, %v1002
        %v1007 = vadd.f32 %v923, %v1005
        %v1008 = vadd.f32 %v924, %v1006
        %s1009 = sld [smem:[#allocation8 + $0x9]]
        %s1010 = sld [smem:[#allocation8 + $0x89]]
        %v1011 = vstv %s1009
        %v1012 = vmul.f32 %v592, %v1011
        %v1013 = vmul.f32 %v593, %v1011
        %v1014 = vmul.f32 %v594, %v1011
        %v1015 = vmul.f32 %v595, %v1011
        %v1016 = vstv %s1010
        %v1017 = vmul.f32 %v604, %v1016
        %v1018 = vmul.f32 %v613, %v1016
        %v1019 = vmul.f32 %v622, %v1016
        %v1020 = vmul.f32 %v631, %v1016
        %v1021 = vadd.f32 %v1012, %v1017
        %v1022 = vadd.f32 %v1013, %v1018
        %v1023 = vadd.f32 %v1014, %v1019
        %v1024 = vadd.f32 %v1015, %v1020
        %v1029 = vsel %vm380, %v1023, %v1021
        %v1030 = vsel %vm380, %v1024, %v1022
        %1033 = vrot.lane.b32.xlu0 %v1029, 33
        %v1034 = vpop.permute.xlu0 %1033
        %1035 = vrot.lane.b32.xlu0 %v1030, 33
        %v1036 = vpop.permute.xlu0 %1035
        %vm1037 = vcmp.lt.s32.totalorder %v359, 33
        %v1038 = vsel %vm1037, %v1034, %v1036
        %v1039 = vsel %vm1037, %v1036, %v1034
        %s1040 = scalar_lea.vmem [#allocation6], 17
        %v1041 = vld [vmem:[%s1040] ss:$8 sm:$0x3]
        %v1043 = vperm.slane %v1041, 0
        %v1044 = vperm.slane %v1041, 1
        %v1047 = vmul.f32 %v1039, %v1043
        %v1048 = vmul.f32 %v1038, %v1044
        %v1049 = vadd.f32 %v965, %v1047
        %v1050 = vadd.f32 %v966, %v1048
        %s1051 = sld [smem:[#allocation8 + $0xa]]
        %s1052 = sld [smem:[#allocation8 + $0x8a]]
        %v1053 = vstv %s1051
        %v1054 = vmul.f32 %v592, %v1053
        %v1055 = vmul.f32 %v593, %v1053
        %v1056 = vmul.f32 %v594, %v1053
        %v1057 = vmul.f32 %v595, %v1053
        %v1058 = vstv %s1052
        %v1059 = vmul.f32 %v604, %v1058
        %v1060 = vmul.f32 %v613, %v1058
        %v1061 = vmul.f32 %v622, %v1058
        %v1062 = vmul.f32 %v631, %v1058
        %v1063 = vadd.f32 %v1054, %v1059
        %v1064 = vadd.f32 %v1055, %v1060
        %v1065 = vadd.f32 %v1056, %v1061
        %v1066 = vadd.f32 %v1057, %v1062
        %v1071 = vsel %vm380, %v1065, %v1063
        %v1072 = vsel %vm380, %v1066, %v1064
        %1075 = vrot.lane.b32.xlu0 %v1071, 32
        %v1076 = vpop.permute.xlu0 %1075
        %1077 = vrot.lane.b32.xlu0 %v1072, 32
        %v1078 = vpop.permute.xlu0 %1077
        %vm1079 = vcmp.lt.s32.totalorder %v359, 32
        %v1080 = vsel %vm1079, %v1076, %v1078
        %v1081 = vsel %vm1079, %v1078, %v1076
        %s1082 = scalar_lea.vmem [#allocation6], 18
        %v1083 = vld [vmem:[%s1082] ss:$8 sm:$0x3]
        %v1085 = vperm.slane %v1083, 0
        %v1086 = vperm.slane %v1083, 1
        %v1089 = vmul.f32 %v1081, %v1085
        %v1090 = vmul.f32 %v1080, %v1086
        %v1091 = vadd.f32 %v1007, %v1089
        %v1092 = vadd.f32 %v1008, %v1090
        %s1093 = sld [smem:[#allocation8 + $0xb]]
        %s1094 = sld [smem:[#allocation8 + $0x8b]]
        %v1095 = vstv %s1093
        %v1096 = vmul.f32 %v592, %v1095
        %v1097 = vmul.f32 %v593, %v1095
        %v1098 = vmul.f32 %v594, %v1095
        %v1099 = vmul.f32 %v595, %v1095
        %v1100 = vstv %s1094
        %v1101 = vmul.f32 %v604, %v1100
        %v1102 = vmul.f32 %v613, %v1100
        %v1103 = vmul.f32 %v622, %v1100
        %v1104 = vmul.f32 %v631, %v1100
        %v1105 = vadd.f32 %v1096, %v1101
        %v1106 = vadd.f32 %v1097, %v1102
        %v1107 = vadd.f32 %v1098, %v1103
        %v1108 = vadd.f32 %v1099, %v1104
        %v1113 = vsel %vm380, %v1107, %v1105
        %v1114 = vsel %vm380, %v1108, %v1106
        %1117 = vrot.lane.b32.xlu0 %v1113, 31
        %v1118 = vpop.permute.xlu0 %1117
        %1119 = vrot.lane.b32.xlu0 %v1114, 31
        %v1120 = vpop.permute.xlu0 %1119
        %vm1121 = vcmp.lt.s32.totalorder %v359, 31
        %v1122 = vsel %vm1121, %v1118, %v1120
        %v1123 = vsel %vm1121, %v1120, %v1118
        %s1124 = scalar_lea.vmem [#allocation6], 19
        %v1125 = vld [vmem:[%s1124] ss:$8 sm:$0x3]
        %v1127 = vperm.slane %v1125, 0
        %v1128 = vperm.slane %v1125, 1
        %v1131 = vmul.f32 %v1123, %v1127
        %v1132 = vmul.f32 %v1122, %v1128
        %v1133 = vadd.f32 %v1049, %v1131
        %v1134 = vadd.f32 %v1050, %v1132
        %s1135 = sld [smem:[#allocation8 + $0xc]]
        %s1136 = sld [smem:[#allocation8 + $0x8c]]
        %v1137 = vstv %s1135
        %v1138 = vmul.f32 %v592, %v1137
        %v1139 = vmul.f32 %v593, %v1137
        %v1140 = vmul.f32 %v594, %v1137
        %v1141 = vmul.f32 %v595, %v1137
        %v1142 = vstv %s1136
        %v1143 = vmul.f32 %v604, %v1142
        %v1144 = vmul.f32 %v613, %v1142
        %v1145 = vmul.f32 %v622, %v1142
        %v1146 = vmul.f32 %v631, %v1142
        %v1147 = vadd.f32 %v1138, %v1143
        %v1148 = vadd.f32 %v1139, %v1144
        %v1149 = vadd.f32 %v1140, %v1145
        %v1150 = vadd.f32 %v1141, %v1146
        %v1155 = vsel %vm380, %v1149, %v1147
        %v1156 = vsel %vm380, %v1150, %v1148
        %1159 = vrot.lane.b32.xlu0 %v1155, 30
        %v1160 = vpop.permute.xlu0 %1159
        %1161 = vrot.lane.b32.xlu0 %v1156, 30
        %v1162 = vpop.permute.xlu0 %1161
        %vm1163 = vcmp.lt.s32.totalorder %v359, 30
        %v1164 = vsel %vm1163, %v1160, %v1162
        %v1165 = vsel %vm1163, %v1162, %v1160
        %s1166 = scalar_lea.vmem [#allocation6], 20
        %v1167 = vld [vmem:[%s1166] ss:$8 sm:$0x3]
        %v1169 = vperm.slane %v1167, 0
        %v1170 = vperm.slane %v1167, 1
        %v1173 = vmul.f32 %v1165, %v1169
        %v1174 = vmul.f32 %v1164, %v1170
        %v1175 = vadd.f32 %v1091, %v1173
        %v1176 = vadd.f32 %v1092, %v1174
        %s1177 = sld [smem:[#allocation8 + $0xd]]
        %s1178 = sld [smem:[#allocation8 + $0x8d]]
        %v1179 = vstv %s1177
        %v1180 = vmul.f32 %v592, %v1179
        %v1181 = vmul.f32 %v593, %v1179
        %v1182 = vmul.f32 %v594, %v1179
        %v1183 = vmul.f32 %v595, %v1179
        %v1184 = vstv %s1178
        %v1185 = vmul.f32 %v604, %v1184
        %v1186 = vmul.f32 %v613, %v1184
        %v1187 = vmul.f32 %v622, %v1184
        %v1188 = vmul.f32 %v631, %v1184
        %v1189 = vadd.f32 %v1180, %v1185
        %v1190 = vadd.f32 %v1181, %v1186
        %v1191 = vadd.f32 %v1182, %v1187
        %v1192 = vadd.f32 %v1183, %v1188
        %v1197 = vsel %vm380, %v1191, %v1189
        %v1198 = vsel %vm380, %v1192, %v1190
        %1201 = vrot.lane.b32.xlu0 %v1197, 29
        %v1202 = vpop.permute.xlu0 %1201
        %1203 = vrot.lane.b32.xlu0 %v1198, 29
        %v1204 = vpop.permute.xlu0 %1203
        %vm1205 = vcmp.lt.s32.totalorder %v359, 29
        %v1206 = vsel %vm1205, %v1202, %v1204
        %v1207 = vsel %vm1205, %v1204, %v1202
        %s1208 = scalar_lea.vmem [#allocation6], 21
        %v1209 = vld [vmem:[%s1208] ss:$8 sm:$0x3]
        %v1211 = vperm.slane %v1209, 0
        %v1212 = vperm.slane %v1209, 1
        %v1215 = vmul.f32 %v1207, %v1211
        %v1216 = vmul.f32 %v1206, %v1212
        %v1217 = vadd.f32 %v1133, %v1215
        %v1218 = vadd.f32 %v1134, %v1216
        %s1219 = sld [smem:[#allocation8 + $0xe]]
        %s1220 = sld [smem:[#allocation8 + $0x8e]]
        %v1221 = vstv %s1219
        %v1222 = vmul.f32 %v592, %v1221
        %v1223 = vmul.f32 %v593, %v1221
        %v1224 = vmul.f32 %v594, %v1221
        %v1225 = vmul.f32 %v595, %v1221
        %v1226 = vstv %s1220
        %v1227 = vmul.f32 %v604, %v1226
        %v1228 = vmul.f32 %v613, %v1226
        %v1229 = vmul.f32 %v622, %v1226
        %v1230 = vmul.f32 %v631, %v1226
        %v1231 = vadd.f32 %v1222, %v1227
        %v1232 = vadd.f32 %v1223, %v1228
        %v1233 = vadd.f32 %v1224, %v1229
        %v1234 = vadd.f32 %v1225, %v1230
        %v1239 = vsel %vm380, %v1233, %v1231
        %v1240 = vsel %vm380, %v1234, %v1232
        %1243 = vrot.lane.b32.xlu0 %v1239, 19
        %v1244 = vpop.permute.xlu0 %1243
        %1245 = vrot.lane.b32.xlu0 %v1240, 19
        %v1246 = vpop.permute.xlu0 %1245
        %vm1247 = vcmp.lt.s32.totalorder %v359, 19
        %v1248 = vsel %vm1247, %v1244, %v1246
        %v1249 = vsel %vm1247, %v1246, %v1244
        %s1250 = scalar_lea.vmem [#allocation6], 22
        %v1251 = vld [vmem:[%s1250] ss:$8 sm:$0x3]
        %v1253 = vperm.slane %v1251, 0
        %v1254 = vperm.slane %v1251, 1
        %v1257 = vmul.f32 %v1249, %v1253
        %v1258 = vmul.f32 %v1248, %v1254
        %v1259 = vadd.f32 %v1175, %v1257
        %v1260 = vadd.f32 %v1176, %v1258
        %s1261 = sld [smem:[#allocation8 + $0xf]]
        %s1262 = sld [smem:[#allocation8 + $0x8f]]
        %v1263 = vstv %s1261
        %v1264 = vmul.f32 %v592, %v1263
        %v1265 = vmul.f32 %v593, %v1263
        %v1266 = vmul.f32 %v594, %v1263
        %v1267 = vmul.f32 %v595, %v1263
        %v1268 = vstv %s1262
        %v1269 = vmul.f32 %v604, %v1268
        %v1270 = vmul.f32 %v613, %v1268
        %v1271 = vmul.f32 %v622, %v1268
        %v1272 = vmul.f32 %v631, %v1268
        %v1273 = vadd.f32 %v1264, %v1269
        %v1274 = vadd.f32 %v1265, %v1270
        %v1275 = vadd.f32 %v1266, %v1271
        %v1276 = vadd.f32 %v1267, %v1272
        %v1281 = vsel %vm380, %v1275, %v1273
        %v1282 = vsel %vm380, %v1276, %v1274
        %1285 = vrot.lane.b32.xlu0 %v1281, 18
        %v1286 = vpop.permute.xlu0 %1285
        %1287 = vrot.lane.b32.xlu0 %v1282, 18
        %v1288 = vpop.permute.xlu0 %1287
        %vm1289 = vcmp.lt.s32.totalorder %v359, 18
        %v1290 = vsel %vm1289, %v1286, %v1288
        %v1291 = vsel %vm1289, %v1288, %v1286
        %s1292 = scalar_lea.vmem [#allocation6], 23
        %v1293 = vld [vmem:[%s1292] ss:$8 sm:$0x3]
        %v1295 = vperm.slane %v1293, 0
        %v1296 = vperm.slane %v1293, 1
        %v1299 = vmul.f32 %v1291, %v1295
        %v1300 = vmul.f32 %v1290, %v1296
        %v1301 = vadd.f32 %v1217, %v1299
        %v1302 = vadd.f32 %v1218, %v1300
        %s1303 = sld [smem:[#allocation8 + $0x10]]
        %s1304 = sld [smem:[#allocation8 + $0x90]]
        %v1305 = vstv %s1303
        %v1306 = vmul.f32 %v592, %v1305
        %v1307 = vmul.f32 %v593, %v1305
        %v1308 = vmul.f32 %v594, %v1305
        %v1309 = vmul.f32 %v595, %v1305
        %v1310 = vstv %s1304
        %v1311 = vmul.f32 %v604, %v1310
        %v1312 = vmul.f32 %v613, %v1310
        %v1313 = vmul.f32 %v622, %v1310
        %v1314 = vmul.f32 %v631, %v1310
        %v1315 = vadd.f32 %v1306, %v1311
        %v1316 = vadd.f32 %v1307, %v1312
        %v1317 = vadd.f32 %v1308, %v1313
        %v1318 = vadd.f32 %v1309, %v1314
        %v1323 = vsel %vm380, %v1317, %v1315
        %v1324 = vsel %vm380, %v1318, %v1316
        %1327 = vrot.lane.b32.xlu0 %v1323, 17
        %v1328 = vpop.permute.xlu0 %1327
        %1329 = vrot.lane.b32.xlu0 %v1324, 17
        %v1330 = vpop.permute.xlu0 %1329
        %vm1331 = vcmp.lt.s32.totalorder %v359, 17
        %v1332 = vsel %vm1331, %v1328, %v1330
        %v1333 = vsel %vm1331, %v1330, %v1328
        %s1334 = scalar_lea.vmem [#allocation6], 32
        %v1335 = vld [vmem:[%s1334] ss:$8 sm:$0x3]
        %v1337 = vperm.slane %v1335, 0
        %v1338 = vperm.slane %v1335, 1
        %v1341 = vmul.f32 %v1333, %v1337
        %v1342 = vmul.f32 %v1332, %v1338
        %v1343 = vadd.f32 %v1259, %v1341
        %v1344 = vadd.f32 %v1260, %v1342
        %s1345 = sld [smem:[#allocation8 + $0x11]]
        %s1346 = sld [smem:[#allocation8 + $0x91]]
        %v1347 = vstv %s1345
        %v1348 = vmul.f32 %v592, %v1347
        %v1349 = vmul.f32 %v593, %v1347
        %v1350 = vmul.f32 %v594, %v1347
        %v1351 = vmul.f32 %v595, %v1347
        %v1352 = vstv %s1346
        %v1353 = vmul.f32 %v604, %v1352
        %v1354 = vmul.f32 %v613, %v1352
        %v1355 = vmul.f32 %v622, %v1352
        %v1356 = vmul.f32 %v631, %v1352
        %v1357 = vadd.f32 %v1348, %v1353
        %v1358 = vadd.f32 %v1349, %v1354
        %v1359 = vadd.f32 %v1350, %v1355
        %v1360 = vadd.f32 %v1351, %v1356
        %v1365 = vsel %vm380, %v1359, %v1357
        %v1366 = vsel %vm380, %v1360, %v1358
        %1369 = vrot.lane.b32.xlu0 %v1365, 16
        %v1370 = vpop.permute.xlu0 %1369
        %1371 = vrot.lane.b32.xlu0 %v1366, 16
        %v1372 = vpop.permute.xlu0 %1371
        %vm1373 = vcmp.lt.s32.totalorder %v359, 16
        %v1374 = vsel %vm1373, %v1370, %v1372
        %v1375 = vsel %vm1373, %v1372, %v1370
        %s1376 = scalar_lea.vmem [#allocation6], 33
        %v1377 = vld [vmem:[%s1376] ss:$8 sm:$0x3]
        %v1379 = vperm.slane %v1377, 0
        %v1380 = vperm.slane %v1377, 1
        %v1383 = vmul.f32 %v1375, %v1379
        %v1384 = vmul.f32 %v1374, %v1380
        %v1385 = vadd.f32 %v1301, %v1383
        %v1386 = vadd.f32 %v1302, %v1384
        %s1387 = sld [smem:[#allocation8 + $0x12]]
        %s1388 = sld [smem:[#allocation8 + $0x92]]
        %v1389 = vstv %s1387
        %v1390 = vmul.f32 %v592, %v1389
        %v1391 = vmul.f32 %v593, %v1389
        %v1392 = vmul.f32 %v594, %v1389
        %v1393 = vmul.f32 %v595, %v1389
        %v1394 = vstv %s1388
        %v1395 = vmul.f32 %v604, %v1394
        %v1396 = vmul.f32 %v613, %v1394
        %v1397 = vmul.f32 %v622, %v1394
        %v1398 = vmul.f32 %v631, %v1394
        %v1399 = vadd.f32 %v1390, %v1395
        %v1400 = vadd.f32 %v1391, %v1396
        %v1401 = vadd.f32 %v1392, %v1397
        %v1402 = vadd.f32 %v1393, %v1398
        %v1407 = vsel %vm380, %v1401, %v1399
        %v1408 = vsel %vm380, %v1402, %v1400
        %1411 = vrot.lane.b32.xlu0 %v1407, 15
        %v1412 = vpop.permute.xlu0 %1411
        %1413 = vrot.lane.b32.xlu0 %v1408, 15
        %v1414 = vpop.permute.xlu0 %1413
        %vm1415 = vcmp.lt.s32.totalorder %v359, 15
        %v1416 = vsel %vm1415, %v1412, %v1414
        %v1417 = vsel %vm1415, %v1414, %v1412
        %s1418 = scalar_lea.vmem [#allocation6], 34
        %v1419 = vld [vmem:[%s1418] ss:$8 sm:$0x3]
        %v1421 = vperm.slane %v1419, 0
        %v1422 = vperm.slane %v1419, 1
        %v1425 = vmul.f32 %v1417, %v1421
        %v1426 = vmul.f32 %v1416, %v1422
        %v1427 = vadd.f32 %v1343, %v1425
        %v1428 = vadd.f32 %v1344, %v1426
        %s1429 = sld [smem:[#allocation8 + $0x13]]
        %s1430 = sld [smem:[#allocation8 + $0x93]]
        %v1431 = vstv %s1429
        %v1432 = vmul.f32 %v592, %v1431
        %v1433 = vmul.f32 %v593, %v1431
        %v1434 = vmul.f32 %v594, %v1431
        %v1435 = vmul.f32 %v595, %v1431
        %v1436 = vstv %s1430
        %v1437 = vmul.f32 %v604, %v1436
        %v1438 = vmul.f32 %v613, %v1436
        %v1439 = vmul.f32 %v622, %v1436
        %v1440 = vmul.f32 %v631, %v1436
        %v1441 = vadd.f32 %v1432, %v1437
        %v1442 = vadd.f32 %v1433, %v1438
        %v1443 = vadd.f32 %v1434, %v1439
        %v1444 = vadd.f32 %v1435, %v1440
        %v1449 = vsel %vm380, %v1443, %v1441
        %v1450 = vsel %vm380, %v1444, %v1442
        %1453 = vrot.lane.b32.xlu0 %v1449, 14
        %v1454 = vpop.permute.xlu0 %1453
        %1455 = vrot.lane.b32.xlu0 %v1450, 14
        %v1456 = vpop.permute.xlu0 %1455
        %vm1457 = vcmp.lt.s32.totalorder %v359, 14
        %v1458 = vsel %vm1457, %v1454, %v1456
        %v1459 = vsel %vm1457, %v1456, %v1454
        %s1460 = scalar_lea.vmem [#allocation6], 35
        %v1461 = vld [vmem:[%s1460] ss:$8 sm:$0x3]
        %v1463 = vperm.slane %v1461, 0
        %v1464 = vperm.slane %v1461, 1
        %v1467 = vmul.f32 %v1459, %v1463
        %v1468 = vmul.f32 %v1458, %v1464
        %v1469 = vadd.f32 %v1385, %v1467
        %v1470 = vadd.f32 %v1386, %v1468
        %s1471 = sld [smem:[#allocation8 + $0x14]]
        %s1472 = sld [smem:[#allocation8 + $0x94]]
        %v1473 = vstv %s1471
        %v1474 = vmul.f32 %v592, %v1473
        %v1475 = vmul.f32 %v593, %v1473
        %v1476 = vmul.f32 %v594, %v1473
        %v1477 = vmul.f32 %v595, %v1473
        %v1478 = vstv %s1472
        %v1479 = vmul.f32 %v604, %v1478
        %v1480 = vmul.f32 %v613, %v1478
        %v1481 = vmul.f32 %v622, %v1478
        %v1482 = vmul.f32 %v631, %v1478
        %v1483 = vadd.f32 %v1474, %v1479
        %v1484 = vadd.f32 %v1475, %v1480
        %v1485 = vadd.f32 %v1476, %v1481
        %v1486 = vadd.f32 %v1477, %v1482
        %v1491 = vsel %vm380, %v1485, %v1483
        %v1492 = vsel %vm380, %v1486, %v1484
        %1495 = vrot.lane.b32.xlu0 %v1491, 13
        %v1496 = vpop.permute.xlu0 %1495
        %1497 = vrot.lane.b32.xlu0 %v1492, 13
        %v1498 = vpop.permute.xlu0 %1497
        %vm1499 = vcmp.lt.s32.totalorder %v359, 13
        %v1500 = vsel %vm1499, %v1496, %v1498
        %v1501 = vsel %vm1499, %v1498, %v1496
        %s1502 = scalar_lea.vmem [#allocation6], 36
        %v1503 = vld [vmem:[%s1502] ss:$8 sm:$0x3]
        %v1505 = vperm.slane %v1503, 0
        %v1506 = vperm.slane %v1503, 1
        %v1509 = vmul.f32 %v1501, %v1505
        %v1510 = vmul.f32 %v1500, %v1506
        %v1511 = vadd.f32 %v1427, %v1509
        %v1512 = vadd.f32 %v1428, %v1510
        %s1513 = sld [smem:[#allocation8 + $0x15]]
        %s1514 = sld [smem:[#allocation8 + $0x95]]
        %v1515 = vstv %s1513
        %v1516 = vmul.f32 %v592, %v1515
        %v1517 = vmul.f32 %v593, %v1515
        %v1518 = vmul.f32 %v594, %v1515
        %v1519 = vmul.f32 %v595, %v1515
        %v1520 = vstv %s1514
        %v1521 = vmul.f32 %v604, %v1520
        %v1522 = vmul.f32 %v613, %v1520
        %v1523 = vmul.f32 %v622, %v1520
        %v1524 = vmul.f32 %v631, %v1520
        %v1525 = vadd.f32 %v1516, %v1521
        %v1526 = vadd.f32 %v1517, %v1522
        %v1527 = vadd.f32 %v1518, %v1523
        %v1528 = vadd.f32 %v1519, %v1524
        %v1533 = vsel %vm380, %v1527, %v1525
        %v1534 = vsel %vm380, %v1528, %v1526
        %1537 = vrot.lane.b32.xlu0 %v1533, 3
        %v1538 = vpop.permute.xlu0 %1537
        %1539 = vrot.lane.b32.xlu0 %v1534, 3
        %v1540 = vpop.permute.xlu0 %1539
        %vm1541 = vcmp.lt.s32.totalorder %v359, 3
        %v1542 = vsel %vm1541, %v1538, %v1540
        %v1543 = vsel %vm1541, %v1540, %v1538
        %s1544 = scalar_lea.vmem [#allocation6], 37
        %v1545 = vld [vmem:[%s1544] ss:$8 sm:$0x3]
        %v1547 = vperm.slane %v1545, 0
        %v1548 = vperm.slane %v1545, 1
        %v1551 = vmul.f32 %v1543, %v1547
        %v1552 = vmul.f32 %v1542, %v1548
        %v1553 = vadd.f32 %v1469, %v1551
        %v1554 = vadd.f32 %v1470, %v1552
        %s1555 = sld [smem:[#allocation8 + $0x16]]
        %s1556 = sld [smem:[#allocation8 + $0x96]]
        %v1557 = vstv %s1555
        %v1558 = vmul.f32 %v592, %v1557
        %v1559 = vmul.f32 %v593, %v1557
        %v1560 = vmul.f32 %v594, %v1557
        %v1561 = vmul.f32 %v595, %v1557
        %v1562 = vstv %s1556
        %v1563 = vmul.f32 %v604, %v1562
        %v1564 = vmul.f32 %v613, %v1562
        %v1565 = vmul.f32 %v622, %v1562
        %v1566 = vmul.f32 %v631, %v1562
        %v1567 = vadd.f32 %v1558, %v1563
        %v1568 = vadd.f32 %v1559, %v1564
        %v1569 = vadd.f32 %v1560, %v1565
        %v1570 = vadd.f32 %v1561, %v1566
        %v1575 = vsel %vm380, %v1569, %v1567
        %v1576 = vsel %vm380, %v1570, %v1568
        %1579 = vrot.lane.b32.xlu0 %v1575, 2
        %v1580 = vpop.permute.xlu0 %1579
        %1581 = vrot.lane.b32.xlu0 %v1576, 2
        %v1582 = vpop.permute.xlu0 %1581
        %vm1583 = vcmp.lt.s32.totalorder %v359, 2
        %v1584 = vsel %vm1583, %v1580, %v1582
        %v1585 = vsel %vm1583, %v1582, %v1580
        %s1586 = scalar_lea.vmem [#allocation6], 38
        %v1587 = vld [vmem:[%s1586] ss:$8 sm:$0x3]
        %v1589 = vperm.slane %v1587, 0
        %v1590 = vperm.slane %v1587, 1
        %v1593 = vmul.f32 %v1585, %v1589
        %v1594 = vmul.f32 %v1584, %v1590
        %v1595 = vadd.f32 %v1511, %v1593
        %v1596 = vadd.f32 %v1512, %v1594
        %s1597 = sld [smem:[#allocation8 + $0x17]]
        %s1598 = sld [smem:[#allocation8 + $0x97]]
        %v1599 = vstv %s1597
        %v1600 = vmul.f32 %v592, %v1599
        %v1601 = vmul.f32 %v593, %v1599
        %v1602 = vmul.f32 %v594, %v1599
        %v1603 = vmul.f32 %v595, %v1599
        %v1604 = vstv %s1598
        %v1605 = vmul.f32 %v604, %v1604
        %v1606 = vmul.f32 %v613, %v1604
        %v1607 = vmul.f32 %v622, %v1604
        %v1608 = vmul.f32 %v631, %v1604
        %v1609 = vadd.f32 %v1600, %v1605
        %v1610 = vadd.f32 %v1601, %v1606
        %v1611 = vadd.f32 %v1602, %v1607
        %v1612 = vadd.f32 %v1603, %v1608
        %v1617 = vsel %vm380, %v1611, %v1609
        %v1618 = vsel %vm380, %v1612, %v1610
        %1621 = vrot.lane.b32.xlu0 %v1617, 1
        %v1622 = vpop.permute.xlu0 %1621
        %1623 = vrot.lane.b32.xlu0 %v1618, 1
        %v1624 = vpop.permute.xlu0 %1623
        %vm1625 = vcmp.lt.s32.totalorder %v359, 1
        %v1626 = vsel %vm1625, %v1622, %v1624
        %v1627 = vsel %vm1625, %v1624, %v1622
        %s1628 = scalar_lea.vmem [#allocation6], 39
        %v1629 = vld [vmem:[%s1628] ss:$8 sm:$0x3]
        %v1631 = vperm.slane %v1629, 0
        %v1632 = vperm.slane %v1629, 1
        %v1635 = vmul.f32 %v1627, %v1631
        %v1636 = vmul.f32 %v1626, %v1632
        %v1637 = vadd.f32 %v1553, %v1635
        %v1638 = vadd.f32 %v1554, %v1636
        %s1639 = sld [smem:[#allocation8 + $0x18]]
        %s1640 = sld [smem:[#allocation8 + $0x98]]
        %v1641 = vstv %s1639
        %v1642 = vmul.f32 %v592, %v1641
        %v1643 = vmul.f32 %v593, %v1641
        %v1644 = vmul.f32 %v594, %v1641
        %v1645 = vmul.f32 %v595, %v1641
        %v1646 = vstv %s1640
        %v1647 = vmul.f32 %v604, %v1646
        %v1648 = vmul.f32 %v613, %v1646
        %v1649 = vmul.f32 %v622, %v1646
        %v1650 = vmul.f32 %v631, %v1646
        %v1651 = vadd.f32 %v1642, %v1647
        %v1652 = vadd.f32 %v1643, %v1648
        %v1653 = vadd.f32 %v1644, %v1649
        %v1654 = vadd.f32 %v1645, %v1650
        %v1659 = vsel %vm380, %v1653, %v1651
        %v1660 = vsel %vm380, %v1654, %v1652
        %v1663 = vadd.f32 %v1595, %v1659
        %v1664 = vadd.f32 %v1596, %v1660
        %s1665 = sld [smem:[#allocation8 + $0x19]]
        %s1666 = sld [smem:[#allocation8 + $0x99]]
        %v1667 = vstv %s1665
        %v1668 = vmul.f32 %v592, %v1667
        %v1669 = vmul.f32 %v593, %v1667
        %v1670 = vmul.f32 %v594, %v1667
        %v1671 = vmul.f32 %v595, %v1667
        %v1672 = vstv %s1666
        %v1673 = vmul.f32 %v604, %v1672
        %v1674 = vmul.f32 %v613, %v1672
        %v1675 = vmul.f32 %v622, %v1672
        %v1676 = vmul.f32 %v631, %v1672
        %v1677 = vadd.f32 %v1668, %v1673
        %v1678 = vadd.f32 %v1669, %v1674
        %v1679 = vadd.f32 %v1670, %v1675
        %v1680 = vadd.f32 %v1671, %v1676
        %v1685 = vsel %vm380, %v1679, %v1677
        %v1686 = vsel %vm380, %v1680, %v1678
        %1689 = vrot.lane.b32.xlu0 %v1685, 127
        %v1690 = vpop.permute.xlu0 %1689
        %1691 = vrot.lane.b32.xlu0 %v1686, 127
        %v1692 = vpop.permute.xlu0 %1691
        %vm1693 = vcmp.lt.s32.totalorder %v359, 127
        %v1694 = vsel %vm1693, %v1690, %v1692
        %v1695 = vsel %vm1693, %v1692, %v1690
        %s1696 = scalar_lea.vmem [#allocation6], 49
        %v1697 = vld [vmem:[%s1696] ss:$8 sm:$0x3]
        %v1699 = vperm.slane %v1697, 0
        %v1700 = vperm.slane %v1697, 1
        %v1703 = vmul.f32 %v1694, %v1699
        %v1704 = vmul.f32 %v1695, %v1700
        %v1705 = vadd.f32 %v1637, %v1703
        %v1706 = vadd.f32 %v1638, %v1704
        %s1707 = sld [smem:[#allocation8 + $0x1a]]
        %s1708 = sld [smem:[#allocation8 + $0x9a]]
        %v1709 = vstv %s1707
        %v1710 = vmul.f32 %v592, %v1709
        %v1711 = vmul.f32 %v593, %v1709
        %v1712 = vmul.f32 %v594, %v1709
        %v1713 = vmul.f32 %v595, %v1709
        %v1714 = vstv %s1708
        %v1715 = vmul.f32 %v604, %v1714
        %v1716 = vmul.f32 %v613, %v1714
        %v1717 = vmul.f32 %v622, %v1714
        %v1718 = vmul.f32 %v631, %v1714
        %v1719 = vadd.f32 %v1710, %v1715
        %v1720 = vadd.f32 %v1711, %v1716
        %v1721 = vadd.f32 %v1712, %v1717
        %v1722 = vadd.f32 %v1713, %v1718
        %v1727 = vsel %vm380, %v1721, %v1719
        %v1728 = vsel %vm380, %v1722, %v1720
        %1731 = vrot.lane.b32.xlu0 %v1727, 126
        %v1732 = vpop.permute.xlu0 %1731
        %1733 = vrot.lane.b32.xlu0 %v1728, 126
        %v1734 = vpop.permute.xlu0 %1733
        %vm1735 = vcmp.lt.s32.totalorder %v359, 126
        %v1736 = vsel %vm1735, %v1732, %v1734
        %v1737 = vsel %vm1735, %v1734, %v1732
        %s1738 = scalar_lea.vmem [#allocation6], 50
        %v1739 = vld [vmem:[%s1738] ss:$8 sm:$0x3]
        %v1741 = vperm.slane %v1739, 0
        %v1742 = vperm.slane %v1739, 1
        %v1745 = vmul.f32 %v1736, %v1741
        %v1746 = vmul.f32 %v1737, %v1742
        %v1747 = vadd.f32 %v1663, %v1745
        %v1748 = vadd.f32 %v1664, %v1746
        %s1749 = sld [smem:[#allocation8 + $0x1b]]
        %s1750 = sld [smem:[#allocation8 + $0x9b]]
        %v1751 = vstv %s1749
        %v1752 = vmul.f32 %v592, %v1751
        %v1753 = vmul.f32 %v593, %v1751
        %v1754 = vmul.f32 %v594, %v1751
        %v1755 = vmul.f32 %v595, %v1751
        %v1756 = vstv %s1750
        %v1757 = vmul.f32 %v604, %v1756
        %v1758 = vmul.f32 %v613, %v1756
        %v1759 = vmul.f32 %v622, %v1756
        %v1760 = vmul.f32 %v631, %v1756
        %v1761 = vadd.f32 %v1752, %v1757
        %v1762 = vadd.f32 %v1753, %v1758
        %v1763 = vadd.f32 %v1754, %v1759
        %v1764 = vadd.f32 %v1755, %v1760
        %v1769 = vsel %vm380, %v1763, %v1761
        %v1770 = vsel %vm380, %v1764, %v1762
        %1773 = vrot.lane.b32.xlu0 %v1769, 125
        %v1774 = vpop.permute.xlu0 %1773
        %1775 = vrot.lane.b32.xlu0 %v1770, 125
        %v1776 = vpop.permute.xlu0 %1775
        %vm1777 = vcmp.lt.s32.totalorder %v359, 125
        %v1778 = vsel %vm1777, %v1774, %v1776
        %v1779 = vsel %vm1777, %v1776, %v1774
        %s1780 = scalar_lea.vmem [#allocation6], 51
        %v1781 = vld [vmem:[%s1780] ss:$8 sm:$0x3]
        %v1783 = vperm.slane %v1781, 0
        %v1784 = vperm.slane %v1781, 1
        %v1787 = vmul.f32 %v1778, %v1783
        %v1788 = vmul.f32 %v1779, %v1784
        %v1789 = vadd.f32 %v1705, %v1787
        %v1790 = vadd.f32 %v1706, %v1788
        %s1791 = sld [smem:[#allocation8 + $0x1c]]
        %s1792 = sld [smem:[#allocation8 + $0x9c]]
        %v1793 = vstv %s1791
        %v1794 = vmul.f32 %v592, %v1793
        %v1795 = vmul.f32 %v593, %v1793
        %v1796 = vmul.f32 %v594, %v1793
        %v1797 = vmul.f32 %v595, %v1793
        %v1798 = vstv %s1792
        %v1799 = vmul.f32 %v604, %v1798
        %v1800 = vmul.f32 %v613, %v1798
        %v1801 = vmul.f32 %v622, %v1798
        %v1802 = vmul.f32 %v631, %v1798
        %v1803 = vadd.f32 %v1794, %v1799
        %v1804 = vadd.f32 %v1795, %v1800
        %v1805 = vadd.f32 %v1796, %v1801
        %v1806 = vadd.f32 %v1797, %v1802
        %v1811 = vsel %vm380, %v1805, %v1803
        %v1812 = vsel %vm380, %v1806, %v1804
        %1815 = vrot.lane.b32.xlu0 %v1811, 115
        %v1816 = vpop.permute.xlu0 %1815
        %1817 = vrot.lane.b32.xlu0 %v1812, 115
        %v1818 = vpop.permute.xlu0 %1817
        %vm1819 = vcmp.lt.s32.totalorder %v359, 115
        %v1820 = vsel %vm1819, %v1816, %v1818
        %v1821 = vsel %vm1819, %v1818, %v1816
        %s1822 = scalar_lea.vmem [#allocation6], 52
        %v1823 = vld [vmem:[%s1822] ss:$8 sm:$0x3]
        %v1825 = vperm.slane %v1823, 0
        %v1826 = vperm.slane %v1823, 1
        %v1829 = vmul.f32 %v1820, %v1825
        %v1830 = vmul.f32 %v1821, %v1826
        %v1831 = vadd.f32 %v1747, %v1829
        %v1832 = vadd.f32 %v1748, %v1830
        %s1833 = sld [smem:[#allocation8 + $0x1d]]
        %s1834 = sld [smem:[#allocation8 + $0x9d]]
        %v1835 = vstv %s1833
        %v1836 = vmul.f32 %v592, %v1835
        %v1837 = vmul.f32 %v593, %v1835
        %v1838 = vmul.f32 %v594, %v1835
        %v1839 = vmul.f32 %v595, %v1835
        %v1840 = vstv %s1834
        %v1841 = vmul.f32 %v604, %v1840
        %v1842 = vmul.f32 %v613, %v1840
        %v1843 = vmul.f32 %v622, %v1840
        %v1844 = vmul.f32 %v631, %v1840
        %v1845 = vadd.f32 %v1836, %v1841
        %v1846 = vadd.f32 %v1837, %v1842
        %v1847 = vadd.f32 %v1838, %v1843
        %v1848 = vadd.f32 %v1839, %v1844
        %v1853 = vsel %vm380, %v1847, %v1845
        %v1854 = vsel %vm380, %v1848, %v1846
        %1857 = vrot.lane.b32.xlu0 %v1853, 114
        %v1858 = vpop.permute.xlu0 %1857
        %1859 = vrot.lane.b32.xlu0 %v1854, 114
        %v1860 = vpop.permute.xlu0 %1859
        %vm1861 = vcmp.lt.s32.totalorder %v359, 114
        %v1862 = vsel %vm1861, %v1858, %v1860
        %v1863 = vsel %vm1861, %v1860, %v1858
        %s1864 = scalar_lea.vmem [#allocation6], 53
        %v1865 = vld [vmem:[%s1864] ss:$8 sm:$0x3]
        %v1867 = vperm.slane %v1865, 0
        %v1868 = vperm.slane %v1865, 1
        %v1871 = vmul.f32 %v1862, %v1867
        %v1872 = vmul.f32 %v1863, %v1868
        %v1873 = vadd.f32 %v1789, %v1871
        %v1874 = vadd.f32 %v1790, %v1872
        %s1875 = sld [smem:[#allocation8 + $0x1e]]
        %s1876 = sld [smem:[#allocation8 + $0x9e]]
        %v1877 = vstv %s1875
        %v1878 = vmul.f32 %v592, %v1877
        %v1879 = vmul.f32 %v593, %v1877
        %v1880 = vmul.f32 %v594, %v1877
        %v1881 = vmul.f32 %v595, %v1877
        %v1882 = vstv %s1876
        %v1883 = vmul.f32 %v604, %v1882
        %v1884 = vmul.f32 %v613, %v1882
        %v1885 = vmul.f32 %v622, %v1882
        %v1886 = vmul.f32 %v631, %v1882
        %v1887 = vadd.f32 %v1878, %v1883
        %v1888 = vadd.f32 %v1879, %v1884
        %v1889 = vadd.f32 %v1880, %v1885
        %v1890 = vadd.f32 %v1881, %v1886
        %v1895 = vsel %vm380, %v1889, %v1887
        %v1896 = vsel %vm380, %v1890, %v1888
        %1899 = vrot.lane.b32.xlu0 %v1895, 113
        %v1900 = vpop.permute.xlu0 %1899
        %1901 = vrot.lane.b32.xlu0 %v1896, 113
        %v1902 = vpop.permute.xlu0 %1901
        %vm1903 = vcmp.lt.s32.totalorder %v359, 113
        %v1904 = vsel %vm1903, %v1900, %v1902
        %v1905 = vsel %vm1903, %v1902, %v1900
        %s1906 = scalar_lea.vmem [#allocation6], 54
        %v1907 = vld [vmem:[%s1906] ss:$8 sm:$0x3]
        %v1909 = vperm.slane %v1907, 0
        %v1910 = vperm.slane %v1907, 1
        %v1913 = vmul.f32 %v1904, %v1909
        %v1914 = vmul.f32 %v1905, %v1910
        %v1915 = vadd.f32 %v1831, %v1913
        %v1916 = vadd.f32 %v1832, %v1914
        %s1917 = sld [smem:[#allocation8 + $0x1f]]
        %s1918 = sld [smem:[#allocation8 + $0x9f]]
        %v1919 = vstv %s1917
        %v1920 = vmul.f32 %v592, %v1919
        %v1921 = vmul.f32 %v593, %v1919
        %v1922 = vmul.f32 %v594, %v1919
        %v1923 = vmul.f32 %v595, %v1919
        %v1924 = vstv %s1918
        %v1925 = vmul.f32 %v604, %v1924
        %v1926 = vmul.f32 %v613, %v1924
        %v1927 = vmul.f32 %v622, %v1924
        %v1928 = vmul.f32 %v631, %v1924
        %v1929 = vadd.f32 %v1920, %v1925
        %v1930 = vadd.f32 %v1921, %v1926
        %v1931 = vadd.f32 %v1922, %v1927
        %v1932 = vadd.f32 %v1923, %v1928
        %v1937 = vsel %vm380, %v1931, %v1929
        %v1938 = vsel %vm380, %v1932, %v1930
        %1941 = vrot.lane.b32.xlu0 %v1937, 112
        %v1942 = vpop.permute.xlu0 %1941
        %1943 = vrot.lane.b32.xlu0 %v1938, 112
        %v1944 = vpop.permute.xlu0 %1943
        %vm1945 = vcmp.lt.s32.totalorder %v359, 112
        %v1946 = vsel %vm1945, %v1942, %v1944
        %v1947 = vsel %vm1945, %v1944, %v1942
        %s1948 = scalar_lea.vmem [#allocation6], 55
        %v1949 = vld [vmem:[%s1948] ss:$8 sm:$0x3]
        %v1951 = vperm.slane %v1949, 0
        %v1952 = vperm.slane %v1949, 1
        %v1955 = vmul.f32 %v1946, %v1951
        %v1956 = vmul.f32 %v1947, %v1952
        %v1957 = vadd.f32 %v1873, %v1955
        %v1958 = vadd.f32 %v1874, %v1956
        %s1959 = sld [smem:[#allocation8 + $0x20]]
        %s1960 = sld [smem:[#allocation8 + $0xa0]]
        %v1961 = vstv %s1959
        %v1962 = vmul.f32 %v592, %v1961
        %v1963 = vmul.f32 %v593, %v1961
        %v1964 = vmul.f32 %v594, %v1961
        %v1965 = vmul.f32 %v595, %v1961
        %v1966 = vstv %s1960
        %v1967 = vmul.f32 %v604, %v1966
        %v1968 = vmul.f32 %v613, %v1966
        %v1969 = vmul.f32 %v622, %v1966
        %v1970 = vmul.f32 %v631, %v1966
        %v1971 = vadd.f32 %v1962, %v1967
        %v1972 = vadd.f32 %v1963, %v1968
        %v1973 = vadd.f32 %v1964, %v1969
        %v1974 = vadd.f32 %v1965, %v1970
        %v1979 = vsel %vm380, %v1973, %v1971
        %v1980 = vsel %vm380, %v1974, %v1972
        %1983 = vrot.lane.b32.xlu0 %v1979, 111
        %v1984 = vpop.permute.xlu0 %1983
        %1985 = vrot.lane.b32.xlu0 %v1980, 111
        %v1986 = vpop.permute.xlu0 %1985
        %vm1987 = vcmp.lt.s32.totalorder %v359, 111
        %v1988 = vsel %vm1987, %v1984, %v1986
        %v1989 = vsel %vm1987, %v1986, %v1984
        %s1990 = scalar_lea.vmem [#allocation6], 64
        %v1991 = vld [vmem:[%s1990] ss:$8 sm:$0x3]
        %v1993 = vperm.slane %v1991, 0
        %v1994 = vperm.slane %v1991, 1
        %v1997 = vmul.f32 %v1988, %v1993
        %v1998 = vmul.f32 %v1989, %v1994
        %v1999 = vadd.f32 %v1915, %v1997
        %v2000 = vadd.f32 %v1916, %v1998
        %s2001 = sld [smem:[#allocation8 + $0x21]]
        %s2002 = sld [smem:[#allocation8 + $0xa1]]
        %v2003 = vstv %s2001
        %v2004 = vmul.f32 %v592, %v2003
        %v2005 = vmul.f32 %v593, %v2003
        %v2006 = vmul.f32 %v594, %v2003
        %v2007 = vmul.f32 %v595, %v2003
        %v2008 = vstv %s2002
        %v2009 = vmul.f32 %v604, %v2008
        %v2010 = vmul.f32 %v613, %v2008
        %v2011 = vmul.f32 %v622, %v2008
        %v2012 = vmul.f32 %v631, %v2008
        %v2013 = vadd.f32 %v2004, %v2009
        %v2014 = vadd.f32 %v2005, %v2010
        %v2015 = vadd.f32 %v2006, %v2011
        %v2016 = vadd.f32 %v2007, %v2012
        %v2021 = vsel %vm380, %v2015, %v2013
        %v2022 = vsel %vm380, %v2016, %v2014
        %2025 = vrot.lane.b32.xlu0 %v2021, 110
        %v2026 = vpop.permute.xlu0 %2025
        %2027 = vrot.lane.b32.xlu0 %v2022, 110
        %v2028 = vpop.permute.xlu0 %2027
        %vm2029 = vcmp.lt.s32.totalorder %v359, 110
        %v2030 = vsel %vm2029, %v2026, %v2028
        %v2031 = vsel %vm2029, %v2028, %v2026
        %s2032 = scalar_lea.vmem [#allocation6], 65
        %v2033 = vld [vmem:[%s2032] ss:$8 sm:$0x3]
        %v2035 = vperm.slane %v2033, 0
        %v2036 = vperm.slane %v2033, 1
        %v2039 = vmul.f32 %v2030, %v2035
        %v2040 = vmul.f32 %v2031, %v2036
        %v2041 = vadd.f32 %v1957, %v2039
        %v2042 = vadd.f32 %v1958, %v2040
        %s2043 = sld [smem:[#allocation8 + $0x22]]
        %s2044 = sld [smem:[#allocation8 + $0xa2]]
        %v2045 = vstv %s2043
        %v2046 = vmul.f32 %v592, %v2045
        %v2047 = vmul.f32 %v593, %v2045
        %v2048 = vmul.f32 %v594, %v2045
        %v2049 = vmul.f32 %v595, %v2045
        %v2050 = vstv %s2044
        %v2051 = vmul.f32 %v604, %v2050
        %v2052 = vmul.f32 %v613, %v2050
        %v2053 = vmul.f32 %v622, %v2050
        %v2054 = vmul.f32 %v631, %v2050
        %v2055 = vadd.f32 %v2046, %v2051
        %v2056 = vadd.f32 %v2047, %v2052
        %v2057 = vadd.f32 %v2048, %v2053
        %v2058 = vadd.f32 %v2049, %v2054
        %v2063 = vsel %vm380, %v2057, %v2055
        %v2064 = vsel %vm380, %v2058, %v2056
        %2067 = vrot.lane.b32.xlu0 %v2063, 109
        %v2068 = vpop.permute.xlu0 %2067
        %2069 = vrot.lane.b32.xlu0 %v2064, 109
        %v2070 = vpop.permute.xlu0 %2069
        %vm2071 = vcmp.lt.s32.totalorder %v359, 109
        %v2072 = vsel %vm2071, %v2068, %v2070
        %v2073 = vsel %vm2071, %v2070, %v2068
        %s2074 = scalar_lea.vmem [#allocation6], 66
        %v2075 = vld [vmem:[%s2074] ss:$8 sm:$0x3]
        %v2077 = vperm.slane %v2075, 0
        %v2078 = vperm.slane %v2075, 1
        %v2081 = vmul.f32 %v2072, %v2077
        %v2082 = vmul.f32 %v2073, %v2078
        %v2083 = vadd.f32 %v1999, %v2081
        %v2084 = vadd.f32 %v2000, %v2082
        %s2085 = sld [smem:[#allocation8 + $0x23]]
        %s2086 = sld [smem:[#allocation8 + $0xa3]]
        %v2087 = vstv %s2085
        %v2088 = vmul.f32 %v592, %v2087
        %v2089 = vmul.f32 %v593, %v2087
        %v2090 = vmul.f32 %v594, %v2087
        %v2091 = vmul.f32 %v595, %v2087
        %v2092 = vstv %s2086
        %v2093 = vmul.f32 %v604, %v2092
        %v2094 = vmul.f32 %v613, %v2092
        %v2095 = vmul.f32 %v622, %v2092
        %v2096 = vmul.f32 %v631, %v2092
        %v2097 = vadd.f32 %v2088, %v2093
        %v2098 = vadd.f32 %v2089, %v2094
        %v2099 = vadd.f32 %v2090, %v2095
        %v2100 = vadd.f32 %v2091, %v2096
        %v2105 = vsel %vm380, %v2099, %v2097
        %v2106 = vsel %vm380, %v2100, %v2098
        %2109 = vrot.lane.b32.xlu0 %v2105, 99
        %v2110 = vpop.permute.xlu0 %2109
        %2111 = vrot.lane.b32.xlu0 %v2106, 99
        %v2112 = vpop.permute.xlu0 %2111
        %vm2113 = vcmp.lt.s32.totalorder %v359, 99
        %v2114 = vsel %vm2113, %v2110, %v2112
        %v2115 = vsel %vm2113, %v2112, %v2110
        %s2116 = scalar_lea.vmem [#allocation6], 67
        %v2117 = vld [vmem:[%s2116] ss:$8 sm:$0x3]
        %v2119 = vperm.slane %v2117, 0
        %v2120 = vperm.slane %v2117, 1
        %v2123 = vmul.f32 %v2114, %v2119
        %v2124 = vmul.f32 %v2115, %v2120
        %v2125 = vadd.f32 %v2041, %v2123
        %v2126 = vadd.f32 %v2042, %v2124
        %s2127 = sld [smem:[#allocation8 + $0x24]]
        %s2128 = sld [smem:[#allocation8 + $0xa4]]
        %v2129 = vstv %s2127
        %v2130 = vmul.f32 %v592, %v2129
        %v2131 = vmul.f32 %v593, %v2129
        %v2132 = vmul.f32 %v594, %v2129
        %v2133 = vmul.f32 %v595, %v2129
        %v2134 = vstv %s2128
        %v2135 = vmul.f32 %v604, %v2134
        %v2136 = vmul.f32 %v613, %v2134
        %v2137 = vmul.f32 %v622, %v2134
        %v2138 = vmul.f32 %v631, %v2134
        %v2139 = vadd.f32 %v2130, %v2135
        %v2140 = vadd.f32 %v2131, %v2136
        %v2141 = vadd.f32 %v2132, %v2137
        %v2142 = vadd.f32 %v2133, %v2138
        %v2147 = vsel %vm380, %v2141, %v2139
        %v2148 = vsel %vm380, %v2142, %v2140
        %2151 = vrot.lane.b32.xlu0 %v2147, 98
        %v2152 = vpop.permute.xlu0 %2151
        %2153 = vrot.lane.b32.xlu0 %v2148, 98
        %v2154 = vpop.permute.xlu0 %2153
        %vm2155 = vcmp.lt.s32.totalorder %v359, 98
        %v2156 = vsel %vm2155, %v2152, %v2154
        %v2157 = vsel %vm2155, %v2154, %v2152
        %s2158 = scalar_lea.vmem [#allocation6], 68
        %v2159 = vld [vmem:[%s2158] ss:$8 sm:$0x3]
        %v2161 = vperm.slane %v2159, 0
        %v2162 = vperm.slane %v2159, 1
        %v2165 = vmul.f32 %v2156, %v2161
        %v2166 = vmul.f32 %v2157, %v2162
        %v2167 = vadd.f32 %v2083, %v2165
        %v2168 = vadd.f32 %v2084, %v2166
        %s2169 = sld [smem:[#allocation8 + $0x25]]
        %s2170 = sld [smem:[#allocation8 + $0xa5]]
        %v2171 = vstv %s2169
        %v2172 = vmul.f32 %v592, %v2171
        %v2173 = vmul.f32 %v593, %v2171
        %v2174 = vmul.f32 %v594, %v2171
        %v2175 = vmul.f32 %v595, %v2171
        %v2176 = vstv %s2170
        %v2177 = vmul.f32 %v604, %v2176
        %v2178 = vmul.f32 %v613, %v2176
        %v2179 = vmul.f32 %v622, %v2176
        %v2180 = vmul.f32 %v631, %v2176
        %v2181 = vadd.f32 %v2172, %v2177
        %v2182 = vadd.f32 %v2173, %v2178
        %v2183 = vadd.f32 %v2174, %v2179
        %v2184 = vadd.f32 %v2175, %v2180
        %v2189 = vsel %vm380, %v2183, %v2181
        %v2190 = vsel %vm380, %v2184, %v2182
        %2193 = vrot.lane.b32.xlu0 %v2189, 97
        %v2194 = vpop.permute.xlu0 %2193
        %2195 = vrot.lane.b32.xlu0 %v2190, 97
        %v2196 = vpop.permute.xlu0 %2195
        %vm2197 = vcmp.lt.s32.totalorder %v359, 97
        %v2198 = vsel %vm2197, %v2194, %v2196
        %v2199 = vsel %vm2197, %v2196, %v2194
        %s2200 = scalar_lea.vmem [#allocation6], 69
        %v2201 = vld [vmem:[%s2200] ss:$8 sm:$0x3]
        %v2203 = vperm.slane %v2201, 0
        %v2204 = vperm.slane %v2201, 1
        %v2207 = vmul.f32 %v2198, %v2203
        %v2208 = vmul.f32 %v2199, %v2204
        %v2209 = vadd.f32 %v2125, %v2207
        %v2210 = vadd.f32 %v2126, %v2208
        %s2211 = sld [smem:[#allocation8 + $0x26]]
        %s2212 = sld [smem:[#allocation8 + $0xa6]]
        %v2213 = vstv %s2211
        %v2214 = vmul.f32 %v592, %v2213
        %v2215 = vmul.f32 %v593, %v2213
        %v2216 = vmul.f32 %v594, %v2213
        %v2217 = vmul.f32 %v595, %v2213
        %v2218 = vstv %s2212
        %v2219 = vmul.f32 %v604, %v2218
        %v2220 = vmul.f32 %v613, %v2218
        %v2221 = vmul.f32 %v622, %v2218
        %v2222 = vmul.f32 %v631, %v2218
        %v2223 = vadd.f32 %v2214, %v2219
        %v2224 = vadd.f32 %v2215, %v2220
        %v2225 = vadd.f32 %v2216, %v2221
        %v2226 = vadd.f32 %v2217, %v2222
        %v2231 = vsel %vm380, %v2225, %v2223
        %v2232 = vsel %vm380, %v2226, %v2224
        %2235 = vrot.lane.b32.xlu0 %v2231, 96
        %v2236 = vpop.permute.xlu0 %2235
        %2237 = vrot.lane.b32.xlu0 %v2232, 96
        %v2238 = vpop.permute.xlu0 %2237
        %vm2239 = vcmp.lt.s32.totalorder %v359, 96
        %v2240 = vsel %vm2239, %v2236, %v2238
        %v2241 = vsel %vm2239, %v2238, %v2236
        %s2242 = scalar_lea.vmem [#allocation6], 70
        %v2243 = vld [vmem:[%s2242] ss:$8 sm:$0x3]
        %v2245 = vperm.slane %v2243, 0
        %v2246 = vperm.slane %v2243, 1
        %v2249 = vmul.f32 %v2240, %v2245
        %v2250 = vmul.f32 %v2241, %v2246
        %v2251 = vadd.f32 %v2167, %v2249
        %v2252 = vadd.f32 %v2168, %v2250
        %s2253 = sld [smem:[#allocation8 + $0x27]]
        %s2254 = sld [smem:[#allocation8 + $0xa7]]
        %v2255 = vstv %s2253
        %v2256 = vmul.f32 %v592, %v2255
        %v2257 = vmul.f32 %v593, %v2255
        %v2258 = vmul.f32 %v594, %v2255
        %v2259 = vmul.f32 %v595, %v2255
        %v2260 = vstv %s2254
        %v2261 = vmul.f32 %v604, %v2260
        %v2262 = vmul.f32 %v613, %v2260
        %v2263 = vmul.f32 %v622, %v2260
        %v2264 = vmul.f32 %v631, %v2260
        %v2265 = vadd.f32 %v2256, %v2261
        %v2266 = vadd.f32 %v2257, %v2262
        %v2267 = vadd.f32 %v2258, %v2263
        %v2268 = vadd.f32 %v2259, %v2264
        %v2273 = vsel %vm380, %v2267, %v2265
        %v2274 = vsel %vm380, %v2268, %v2266
        %2277 = vrot.lane.b32.xlu0 %v2273, 95
        %v2278 = vpop.permute.xlu0 %2277
        %2279 = vrot.lane.b32.xlu0 %v2274, 95
        %v2280 = vpop.permute.xlu0 %2279
        %vm2281 = vcmp.lt.s32.totalorder %v359, 95
        %v2282 = vsel %vm2281, %v2278, %v2280
        %v2283 = vsel %vm2281, %v2280, %v2278
        %s2284 = scalar_lea.vmem [#allocation6], 71
        %v2285 = vld [vmem:[%s2284] ss:$8 sm:$0x3]
        %v2287 = vperm.slane %v2285, 0
        %v2288 = vperm.slane %v2285, 1
        %v2291 = vmul.f32 %v2282, %v2287
        %v2292 = vmul.f32 %v2283, %v2288
        %v2293 = vadd.f32 %v2209, %v2291
        %v2294 = vadd.f32 %v2210, %v2292
        %s2295 = sld [smem:[#allocation8 + $0x28]]
        %s2296 = sld [smem:[#allocation8 + $0xa8]]
        %v2297 = vstv %s2295
        %v2298 = vmul.f32 %v592, %v2297
        %v2299 = vmul.f32 %v593, %v2297
        %v2300 = vmul.f32 %v594, %v2297
        %v2301 = vmul.f32 %v595, %v2297
        %v2302 = vstv %s2296
        %v2303 = vmul.f32 %v604, %v2302
        %v2304 = vmul.f32 %v613, %v2302
        %v2305 = vmul.f32 %v622, %v2302
        %v2306 = vmul.f32 %v631, %v2302
        %v2307 = vadd.f32 %v2298, %v2303
        %v2308 = vadd.f32 %v2299, %v2304
        %v2309 = vadd.f32 %v2300, %v2305
        %v2310 = vadd.f32 %v2301, %v2306
        %v2315 = vsel %vm380, %v2309, %v2307
        %v2316 = vsel %vm380, %v2310, %v2308
        %2319 = vrot.lane.b32.xlu0 %v2315, 94
        %v2320 = vpop.permute.xlu0 %2319
        %2321 = vrot.lane.b32.xlu0 %v2316, 94
        %v2322 = vpop.permute.xlu0 %2321
        %vm2323 = vcmp.lt.s32.totalorder %v359, 94
        %v2324 = vsel %vm2323, %v2320, %v2322
        %v2325 = vsel %vm2323, %v2322, %v2320
        %s2326 = scalar_lea.vmem [#allocation6], 80
        %v2327 = vld [vmem:[%s2326] ss:$8 sm:$0x3]
        %v2329 = vperm.slane %v2327, 0
        %v2330 = vperm.slane %v2327, 1
        %v2333 = vmul.f32 %v2324, %v2329
        %v2334 = vmul.f32 %v2325, %v2330
        %v2335 = vadd.f32 %v2251, %v2333
        %v2336 = vadd.f32 %v2252, %v2334
        %s2337 = sld [smem:[#allocation8 + $0x29]]
        %s2338 = sld [smem:[#allocation8 + $0xa9]]
        %v2339 = vstv %s2337
        %v2340 = vmul.f32 %v592, %v2339
        %v2341 = vmul.f32 %v593, %v2339
        %v2342 = vmul.f32 %v594, %v2339
        %v2343 = vmul.f32 %v595, %v2339
        %v2344 = vstv %s2338
        %v2345 = vmul.f32 %v604, %v2344
        %v2346 = vmul.f32 %v613, %v2344
        %v2347 = vmul.f32 %v622, %v2344
        %v2348 = vmul.f32 %v631, %v2344
        %v2349 = vadd.f32 %v2340, %v2345
        %v2350 = vadd.f32 %v2341, %v2346
        %v2351 = vadd.f32 %v2342, %v2347
        %v2352 = vadd.f32 %v2343, %v2348
        %v2357 = vsel %vm380, %v2351, %v2349
        %v2358 = vsel %vm380, %v2352, %v2350
        %2361 = vrot.lane.b32.xlu0 %v2357, 93
        %v2362 = vpop.permute.xlu0 %2361
        %2363 = vrot.lane.b32.xlu0 %v2358, 93
        %v2364 = vpop.permute.xlu0 %2363
        %vm2365 = vcmp.lt.s32.totalorder %v359, 93
        %v2366 = vsel %vm2365, %v2362, %v2364
        %v2367 = vsel %vm2365, %v2364, %v2362
        %s2368 = scalar_lea.vmem [#allocation6], 81
        %v2369 = vld [vmem:[%s2368] ss:$8 sm:$0x3]
        %v2371 = vperm.slane %v2369, 0
        %v2372 = vperm.slane %v2369, 1
        %v2375 = vmul.f32 %v2366, %v2371
        %v2376 = vmul.f32 %v2367, %v2372
        %v2377 = vadd.f32 %v2293, %v2375
        %v2378 = vadd.f32 %v2294, %v2376
        %s2379 = sld [smem:[#allocation8 + $0x2a]]
        %s2380 = sld [smem:[#allocation8 + $0xaa]]
        %v2381 = vstv %s2379
        %v2382 = vmul.f32 %v592, %v2381
        %v2383 = vmul.f32 %v593, %v2381
        %v2384 = vmul.f32 %v594, %v2381
        %v2385 = vmul.f32 %v595, %v2381
        %v2386 = vstv %s2380
        %v2387 = vmul.f32 %v604, %v2386
        %v2388 = vmul.f32 %v613, %v2386
        %v2389 = vmul.f32 %v622, %v2386
        %v2390 = vmul.f32 %v631, %v2386
        %v2391 = vadd.f32 %v2382, %v2387
        %v2392 = vadd.f32 %v2383, %v2388
        %v2393 = vadd.f32 %v2384, %v2389
        %v2394 = vadd.f32 %v2385, %v2390
        %v2399 = vsel %vm380, %v2393, %v2391
        %v2400 = vsel %vm380, %v2394, %v2392
        %2403 = vrot.lane.b32.xlu0 %v2399, 83
        %v2404 = vpop.permute.xlu0 %2403
        %2405 = vrot.lane.b32.xlu0 %v2400, 83
        %v2406 = vpop.permute.xlu0 %2405
        %vm2407 = vcmp.lt.s32.totalorder %v359, 83
        %v2408 = vsel %vm2407, %v2404, %v2406
        %v2409 = vsel %vm2407, %v2406, %v2404
        %s2410 = scalar_lea.vmem [#allocation6], 82
        %v2411 = vld [vmem:[%s2410] ss:$8 sm:$0x3]
        %v2413 = vperm.slane %v2411, 0
        %v2414 = vperm.slane %v2411, 1
        %v2417 = vmul.f32 %v2408, %v2413
        %v2418 = vmul.f32 %v2409, %v2414
        %v2419 = vadd.f32 %v2335, %v2417
        %v2420 = vadd.f32 %v2336, %v2418
        %s2421 = sld [smem:[#allocation8 + $0x2b]]
        %s2422 = sld [smem:[#allocation8 + $0xab]]
        %v2423 = vstv %s2421
        %v2424 = vmul.f32 %v592, %v2423
        %v2425 = vmul.f32 %v593, %v2423
        %v2426 = vmul.f32 %v594, %v2423
        %v2427 = vmul.f32 %v595, %v2423
        %v2428 = vstv %s2422
        %v2429 = vmul.f32 %v604, %v2428
        %v2430 = vmul.f32 %v613, %v2428
        %v2431 = vmul.f32 %v622, %v2428
        %v2432 = vmul.f32 %v631, %v2428
        %v2433 = vadd.f32 %v2424, %v2429
        %v2434 = vadd.f32 %v2425, %v2430
        %v2435 = vadd.f32 %v2426, %v2431
        %v2436 = vadd.f32 %v2427, %v2432
        %v2441 = vsel %vm380, %v2435, %v2433
        %v2442 = vsel %vm380, %v2436, %v2434
        %2445 = vrot.lane.b32.xlu0 %v2441, 82
        %v2446 = vpop.permute.xlu0 %2445
        %2447 = vrot.lane.b32.xlu0 %v2442, 82
        %v2448 = vpop.permute.xlu0 %2447
        %vm2449 = vcmp.lt.s32.totalorder %v359, 82
        %v2450 = vsel %vm2449, %v2446, %v2448
        %v2451 = vsel %vm2449, %v2448, %v2446
        %s2452 = scalar_lea.vmem [#allocation6], 83
        %v2453 = vld [vmem:[%s2452] ss:$8 sm:$0x3]
        %v2455 = vperm.slane %v2453, 0
        %v2456 = vperm.slane %v2453, 1
        %v2459 = vmul.f32 %v2450, %v2455
        %v2460 = vmul.f32 %v2451, %v2456
        %v2461 = vadd.f32 %v2377, %v2459
        %v2462 = vadd.f32 %v2378, %v2460
        %s2463 = sld [smem:[#allocation8 + $0x2c]]
        %s2464 = sld [smem:[#allocation8 + $0xac]]
        %v2465 = vstv %s2463
        %v2466 = vmul.f32 %v592, %v2465
        %v2467 = vmul.f32 %v593, %v2465
        %v2468 = vmul.f32 %v594, %v2465
        %v2469 = vmul.f32 %v595, %v2465
        %v2470 = vstv %s2464
        %v2471 = vmul.f32 %v604, %v2470
        %v2472 = vmul.f32 %v613, %v2470
        %v2473 = vmul.f32 %v622, %v2470
        %v2474 = vmul.f32 %v631, %v2470
        %v2475 = vadd.f32 %v2466, %v2471
        %v2476 = vadd.f32 %v2467, %v2472
        %v2477 = vadd.f32 %v2468, %v2473
        %v2478 = vadd.f32 %v2469, %v2474
        %v2483 = vsel %vm380, %v2477, %v2475
        %v2484 = vsel %vm380, %v2478, %v2476
        %2487 = vrot.lane.b32.xlu0 %v2483, 81
        %v2488 = vpop.permute.xlu0 %2487
        %2489 = vrot.lane.b32.xlu0 %v2484, 81
        %v2490 = vpop.permute.xlu0 %2489
        %vm2491 = vcmp.lt.s32.totalorder %v359, 81
        %v2492 = vsel %vm2491, %v2488, %v2490
        %v2493 = vsel %vm2491, %v2490, %v2488
        %s2494 = scalar_lea.vmem [#allocation6], 84
        %v2495 = vld [vmem:[%s2494] ss:$8 sm:$0x3]
        %v2497 = vperm.slane %v2495, 0
        %v2498 = vperm.slane %v2495, 1
        %v2501 = vmul.f32 %v2492, %v2497
        %v2502 = vmul.f32 %v2493, %v2498
        %v2503 = vadd.f32 %v2419, %v2501
        %v2504 = vadd.f32 %v2420, %v2502
        %s2505 = sld [smem:[#allocation8 + $0x2d]]
        %s2506 = sld [smem:[#allocation8 + $0xad]]
        %v2507 = vstv %s2505
        %v2508 = vmul.f32 %v592, %v2507
        %v2509 = vmul.f32 %v593, %v2507
        %v2510 = vmul.f32 %v594, %v2507
        %v2511 = vmul.f32 %v595, %v2507
        %v2512 = vstv %s2506
        %v2513 = vmul.f32 %v604, %v2512
        %v2514 = vmul.f32 %v613, %v2512
        %v2515 = vmul.f32 %v622, %v2512
        %v2516 = vmul.f32 %v631, %v2512
        %v2517 = vadd.f32 %v2508, %v2513
        %v2518 = vadd.f32 %v2509, %v2514
        %v2519 = vadd.f32 %v2510, %v2515
        %v2520 = vadd.f32 %v2511, %v2516
        %v2525 = vsel %vm380, %v2519, %v2517
        %v2526 = vsel %vm380, %v2520, %v2518
        %2529 = vrot.lane.b32.xlu0 %v2525, 80
        %v2530 = vpop.permute.xlu0 %2529
        %2531 = vrot.lane.b32.xlu0 %v2526, 80
        %v2532 = vpop.permute.xlu0 %2531
        %vm2533 = vcmp.lt.s32.totalorder %v359, 80
        %v2534 = vsel %vm2533, %v2530, %v2532
        %v2535 = vsel %vm2533, %v2532, %v2530
        %s2536 = scalar_lea.vmem [#allocation6], 85
        %v2537 = vld [vmem:[%s2536] ss:$8 sm:$0x3]
        %v2539 = vperm.slane %v2537, 0
        %v2540 = vperm.slane %v2537, 1
        %v2543 = vmul.f32 %v2534, %v2539
        %v2544 = vmul.f32 %v2535, %v2540
        %v2545 = vadd.f32 %v2461, %v2543
        %v2546 = vadd.f32 %v2462, %v2544
        %s2547 = sld [smem:[#allocation8 + $0x2e]]
        %s2548 = sld [smem:[#allocation8 + $0xae]]
        %v2549 = vstv %s2547
        %v2550 = vmul.f32 %v592, %v2549
        %v2551 = vmul.f32 %v593, %v2549
        %v2552 = vmul.f32 %v594, %v2549
        %v2553 = vmul.f32 %v595, %v2549
        %v2554 = vstv %s2548
        %v2555 = vmul.f32 %v604, %v2554
        %v2556 = vmul.f32 %v613, %v2554
        %v2557 = vmul.f32 %v622, %v2554
        %v2558 = vmul.f32 %v631, %v2554
        %v2559 = vadd.f32 %v2550, %v2555
        %v2560 = vadd.f32 %v2551, %v2556
        %v2561 = vadd.f32 %v2552, %v2557
        %v2562 = vadd.f32 %v2553, %v2558
        %v2567 = vsel %vm380, %v2561, %v2559
        %v2568 = vsel %vm380, %v2562, %v2560
        %2571 = vrot.lane.b32.xlu0 %v2567, 79
        %v2572 = vpop.permute.xlu0 %2571
        %2573 = vrot.lane.b32.xlu0 %v2568, 79
        %v2574 = vpop.permute.xlu0 %2573
        %vm2575 = vcmp.lt.s32.totalorder %v359, 79
        %v2576 = vsel %vm2575, %v2572, %v2574
        %v2577 = vsel %vm2575, %v2574, %v2572
        %s2578 = scalar_lea.vmem [#allocation6], 86
        %v2579 = vld [vmem:[%s2578] ss:$8 sm:$0x3]
        %v2581 = vperm.slane %v2579, 0
        %v2582 = vperm.slane %v2579, 1
        %v2585 = vmul.f32 %v2576, %v2581
        %v2586 = vmul.f32 %v2577, %v2582
        %v2587 = vadd.f32 %v2503, %v2585
        %v2588 = vadd.f32 %v2504, %v2586
        %s2589 = sld [smem:[#allocation8 + $0x2f]]
        %s2590 = sld [smem:[#allocation8 + $0xaf]]
        %v2591 = vstv %s2589
        %v2592 = vmul.f32 %v592, %v2591
        %v2593 = vmul.f32 %v593, %v2591
        %v2594 = vmul.f32 %v594, %v2591
        %v2595 = vmul.f32 %v595, %v2591
        %v2596 = vstv %s2590
        %v2597 = vmul.f32 %v604, %v2596
        %v2598 = vmul.f32 %v613, %v2596
        %v2599 = vmul.f32 %v622, %v2596
        %v2600 = vmul.f32 %v631, %v2596
        %v2601 = vadd.f32 %v2592, %v2597
        %v2602 = vadd.f32 %v2593, %v2598
        %v2603 = vadd.f32 %v2594, %v2599
        %v2604 = vadd.f32 %v2595, %v2600
        %v2609 = vsel %vm380, %v2603, %v2601
        %v2610 = vsel %vm380, %v2604, %v2602
        %2613 = vrot.lane.b32.xlu0 %v2609, 78
        %v2614 = vpop.permute.xlu0 %2613
        %2615 = vrot.lane.b32.xlu0 %v2610, 78
        %v2616 = vpop.permute.xlu0 %2615
        %vm2617 = vcmp.lt.s32.totalorder %v359, 78
        %v2618 = vsel %vm2617, %v2614, %v2616
        %v2619 = vsel %vm2617, %v2616, %v2614
        %s2620 = scalar_lea.vmem [#allocation6], 87
        %v2621 = vld [vmem:[%s2620] ss:$8 sm:$0x3]
        %v2623 = vperm.slane %v2621, 0
        %v2624 = vperm.slane %v2621, 1
        %v2627 = vmul.f32 %v2618, %v2623
        %v2628 = vmul.f32 %v2619, %v2624
        %v2629 = vadd.f32 %v2545, %v2627
        %v2630 = vadd.f32 %v2546, %v2628
        %s2631 = sld [smem:[#allocation8 + $0x30]]
        %s2632 = sld [smem:[#allocation8 + $0xb0]]
        %v2633 = vstv %s2631
        %v2634 = vmul.f32 %v592, %v2633
        %v2635 = vmul.f32 %v593, %v2633
        %v2636 = vmul.f32 %v594, %v2633
        %v2637 = vmul.f32 %v595, %v2633
        %v2638 = vstv %s2632
        %v2639 = vmul.f32 %v604, %v2638
        %v2640 = vmul.f32 %v613, %v2638
        %v2641 = vmul.f32 %v622, %v2638
        %v2642 = vmul.f32 %v631, %v2638
        %v2643 = vadd.f32 %v2634, %v2639
        %v2644 = vadd.f32 %v2635, %v2640
        %v2645 = vadd.f32 %v2636, %v2641
        %v2646 = vadd.f32 %v2637, %v2642
        %v2651 = vsel %vm380, %v2645, %v2643
        %v2652 = vsel %vm380, %v2646, %v2644
        %2655 = vrot.lane.b32.xlu0 %v2651, 77
        %v2656 = vpop.permute.xlu0 %2655
        %2657 = vrot.lane.b32.xlu0 %v2652, 77
        %v2658 = vpop.permute.xlu0 %2657
        %vm2659 = vcmp.lt.s32.totalorder %v359, 77
        %v2660 = vsel %vm2659, %v2656, %v2658
        %v2661 = vsel %vm2659, %v2658, %v2656
        %s2662 = scalar_lea.vmem [#allocation6], 96
        %v2663 = vld [vmem:[%s2662] ss:$8 sm:$0x3]
        %v2665 = vperm.slane %v2663, 0
        %v2666 = vperm.slane %v2663, 1
        %v2669 = vmul.f32 %v2660, %v2665
        %v2670 = vmul.f32 %v2661, %v2666
        %v2671 = vadd.f32 %v2587, %v2669
        %v2672 = vadd.f32 %v2588, %v2670
        %v2673 = vadd.f32 %v2671, %v2629
        %v2674 = vadd.f32 %v2672, %v2630
        %v2675 = vxor.u32 %v2673, 2147483648
        %v2676 = vxor.u32 %v2674, 2147483648
        %v2677 = vmul.f32 %v2675, 1.442695
        %v2678 = vpow.pop %v2677
        %v2679 = vmul.f32 %v2676, 1.442695
        %v2680 = vpow.pop %v2679
        %v2681 = vadd.f32 %v2678, 1.0
        %v2682 = vadd.f32 %v2680, 1.0
        %v2683 = vrcp.pop %v2681
        %v2684 = vmul.f32 %v2681, %v2683
        %v2685 = vsub.f32 1.0, %v2684
        %v2686 = vmul.f32 %v2683, %v2685
        %v2687 = vadd.f32 %v2683, %v2686
        %vm2688 = vweird.f32 %v2681
        %vm2689 = vweird.f32 %v2683
        %vm2690 = vmor %vm2688, %vm2689
        %v2691 = vsel %vm2690, %v2683, %v2687
        %v2692 = vand.u32 2147483647, %v2681
        %vm2693 = vcmp.eq.f32.partialorder %v2692, 8.507059e+37
        %v2694 = vand.u32 %v2681, 2147483648
        %v2695 = vor.u32 1.1754944e-38, %v2694
        %v2696 = vsel %vm2693, %v2695, %v2691
        %v2697 = vmul.f32 1.0, %v2696
        %v2698 = vrcp.pop %v2682
        %v2699 = vmul.f32 %v2682, %v2698
        %v2700 = vsub.f32 1.0, %v2699
        %v2701 = vmul.f32 %v2698, %v2700
        %v2702 = vadd.f32 %v2698, %v2701
        %vm2703 = vweird.f32 %v2682
        %vm2704 = vweird.f32 %v2698
        %vm2705 = vmor %vm2703, %vm2704
        %v2706 = vsel %vm2705, %v2698, %v2702
        %v2707 = vand.u32 2147483647, %v2682
        %vm2708 = vcmp.eq.f32.partialorder %v2707, 8.507059e+37
        %v2709 = vand.u32 %v2682, 2147483648
        %v2710 = vor.u32 1.1754944e-38, %v2709
        %v2711 = vsel %vm2708, %v2710, %v2706
        %v2712 = vmul.f32 1.0, %v2711
        %v2715 = vrot.slane %v2697, 1
        %v2716 = vrot.slane %v2712, 1
        %v2721 = vmul.f32 %v592, %v2697
        %v2722 = vmul.f32 %v593, %v2712
        %v2723 = vmul.f32 %v594, %v2715
        %v2724 = vmul.f32 %v595, %v2716
        %v2725 = vmul.f32 %v604, %v2697
        %v2726 = vmul.f32 %v613, %v2712
        %v2727 = vmul.f32 %v622, %v2715
        %v2728 = vmul.f32 %v631, %v2716
        %v2733 = vrot.slane %v2723, 7
        %v2734 = vsel %vm380, %v2733, %v2721
        %v2735 = vrot.slane %v2724, 7
        %v2736 = vsel %vm380, %v2735, %v2722
        %v2741 = vrot.slane %v2727, 7
        %v2742 = vsel %vm380, %v2741, %v2725
        %v2743 = vrot.slane %v2728, 7
        %v2744 = vsel %vm380, %v2743, %v2726
        %v2745 = vrot.slane %v2736, 6
        %v2746 = vrot.slane %v2742, 4
        %v2747 = vrot.slane %v2744, 2
        %v2748 = vsel %vm408, %v2734, %v2745
        %vm2749 = vcmask 1045508
        %v2750 = vsel %vm2749, %v2746, %v2747
        %vm2751 = vcmask 1043456
        %v2752 = vsel %vm2751, %v2748, %v2750
        %2754 = vst [vmem:[%s276] sm:$0xff] %v2752
        %s2755 = sand.u32 %s142, 1
        %s2756 = scalar_lea.sflag [#allocation4], %s2755
        %s2757 = sand.u32 %s142, 1
        %s2758 = smul.addr %s2757, 8
        %s2759 = scalar_lea.vmem [#allocation9], %s2758
        // Predicated region
        $region53: #{tpu_custom_call.1} parent=39 // pred_check
          %p2760 = pneg %p152
        $region54: #{tpu_custom_call.1} parent=39 // pred_check_branch
          %2762 = sbr.rel (%p2760) target = $region56
        $region55: #{tpu_custom_call.1} parent=39 // pred_region
          %2764 = vsyncadd %s2756, 0
          %s2765 = smul.addr %s24, 4
          %s2766 = smul.addr %s2765, 2
          %s2767 = scalar_lea.hbm %s5, %s2766
          %s2769 = sshll.u32 %s2759, 4
          %s2770 = int_to_ptr.vmem [resolvable:$true] %s2769
          %s2771 = sshll.u32 %s2767, 4
          %s2772 = int_to_ptr.hbm [resolvable:$true] %s2771
          %2774 = dma.vmem_to_hbm [thread:$0]  %s2770, 128, %s2772, %s2756
        $region56: #{tpu_custom_call.1} parent=39 // pred_fallthru
          _
      $region40: #{tpu_custom_call.1} parent=5 // pred_fallthru
        _
      %p2775 = scmp.le.s32.totalorder 2, %s19
      // Predicated region
      $region57: #{tpu_custom_call.1} parent=5 // pred_check
        %p2776 = pneg %p2775
      $region58: #{tpu_custom_call.1} parent=5 // pred_check_branch
        %2778 = sbr.rel (%p2776) target = $region60
      $region59: #{tpu_custom_call.1} parent=5 // pred_region
        %s2779 = ssub.s32 %s19, 2
        // Predicated region
        $region61: #{tpu_custom_call.1} parent=59 // pred_check
          %p2780 = pneg %p158
        $region62: #{tpu_custom_call.1} parent=59 // pred_check_branch
          %2782 = sbr.rel (%p2780) target = $region64
        $region63: #{tpu_custom_call.1} parent=59 // pred_region
          %s2783 = sand.u32 %s143, 1
          %s2784 = scalar_lea.sflag [#allocation4], %s2783
          %s2785 = sand.u32 %s143, 1
          %s2786 = smul.addr %s2785, 8
          %s2787 = scalar_lea.vmem [#allocation9], %s2786
          %2789 = dma.done %s2784, 128
        $region64: #{tpu_custom_call.1} parent=59 // pred_fallthru
          _
      $region60: #{tpu_custom_call.1} parent=5 // pred_fallthru
        _
    $region6: #{tpu_custom_call.1} parent=1 // loop_footer
      %s23 = sadd.s32 1, %s19
    $region7: #{tpu_custom_call.1} parent=1 // loop_footer_branch
      %18 = sbr.rel target = $region3
    $region8: #{tpu_custom_call.1} parent=1 // loop_exit
      _
    %2790 = vsyncpa [#allocation3], 1
    %s2791 = scalar_lea.sflag [#allocation3], 1
    %2792 = vsyncpa %s2791, 1
    %2793 = vsyncpa [#allocation7], 1
    %2794 = vsyncpa [#allocation4], 1
    %s2795 = scalar_lea.sflag [#allocation4], 1
    %2796 = vsyncpa %s2795, 1
    %2797 = vsyncpa [#allocation5], 1
    %s2798 = scalar_lea.sflag [#allocation5], 1
    %2799 = vsyncpa %s2798, 1

</llo_original>
